<compile_context>
chip_gen: v7x
topology: tpu7x:2x2x1
jax: 0.10.0
libtpu: 0.0.40
codegen_flags: <defaults>
</compile_context>

<pallas_src>
import functools

import jax
import jax.numpy as jnp
from jax.experimental import pallas as pl
from jax.experimental.pallas import tpu as pltpu

CHUNK_SIZE = 6
NUM_HEADS = 4
FF_HIDDEN = 2048
LN_EPS = 1e-5
NEG_INF = -1e30


def _layernorm(x, gamma, beta):
    mu = jnp.mean(x, axis=-1, keepdims=True)
    var = jnp.mean((x - mu) ** 2, axis=-1, keepdims=True)
    return (x - mu) * jax.lax.rsqrt(var + LN_EPS) * gamma + beta


def encoder_layer_kernel(
    x_ref, h_ref, mask_ref,
    g1_ref, be1_ref,
    wq_ref, bq_ref, wk_ref, bk_ref, wv_ref, bv_ref, wo_ref, bo_ref,
    g2_ref, be2_ref,
    wf1_ref, bf1_ref, wf2_ref, bf2_ref,
    out_ref,
):
    """LayerNorm -> MHA -> residual -> LayerNorm -> FFN -> residual, all batches at once."""
    x = x_ref[...]                        # (B*C, F) f32
    h = h_ref[...]                        # (B*H, F) f32
    add_mask = mask_ref[...]              # (B*C, B*H) f32: 0 in-batch, -1e30 cross-batch
    feat = x.shape[-1]
    head_dim = feat // NUM_HEADS
    cdt = wq_ref.dtype                    # MXU input dtype (f32 here; bf16 for v6e/v7x)

    # --- self-attention block (pre-LN applies to queries only, as in the module) ---
    xn = _layernorm(x, g1_ref[...], be1_ref[...])
    q = jnp.dot(xn.astype(cdt), wq_ref[...], preferred_element_type=jnp.float32) + bq_ref[...]
    k = jnp.dot(h.astype(cdt), wk_ref[...], preferred_element_type=jnp.float32) + bk_ref[...]
    v = jnp.dot(h.astype(cdt), wv_ref[...], preferred_element_type=jnp.float32) + bv_ref[...]

    scale = 1.0 / jnp.sqrt(jnp.float32(head_dim))
    attn = None
    for hh in range(NUM_HEADS):           # static unroll; head-concat folded into Wo below
        lo = hh * head_dim
        qs = q[:, lo:lo + head_dim]       # (B*C, hd)
        ks = k[:, lo:lo + head_dim]       # (B*H, hd)
        vs = v[:, lo:lo + head_dim]       # (B*H, hd)
        # scores over every (query-row, key-row) pair; cross-batch pairs are
        # killed by the additive mask (also covers the all-True dummy_mask).
        s = jax.lax.dot_general(qs, ks, (((1,), (1,)), ((), ())),
                                preferred_element_type=jnp.float32) * scale
        s = s + add_mask
        s = s - jnp.max(s, axis=-1, keepdims=True)
        p = jnp.exp(s)
        p = p * pl.reciprocal(jnp.sum(p, axis=-1, keepdims=True), approx=True)
        o_h = jnp.dot(p, vs, preferred_element_type=jnp.float32)            # (B*C, hd)
        contrib = jnp.dot(o_h.astype(cdt), wo_ref[lo:lo + head_dim, :],
                          preferred_element_type=jnp.float32)               # (B*C, F)
        attn = contrib if attn is None else attn + contrib

    x2 = x + attn + bo_ref[...]

    # --- feed-forward block ---
    xn2 = _layernorm(x2, g2_ref[...], be2_ref[...])
    hid = jnp.dot(xn2.astype(cdt), wf1_ref[...], preferred_element_type=jnp.float32) + bf1_ref[...]
    hid = jnp.maximum(hid, 0.0)
    # TODO(synk): nn.Dropout(0.1) treated as identity (inference/eval semantics).
    ff = jnp.dot(hid.astype(cdt), wf2_ref[...], preferred_element_type=jnp.float32) + bf2_ref[...]

    out_ref[...] = (x2 + ff).astype(out_ref.dtype)


def init_params(key, feature_size):
    """Deterministic synthetic parameter init (shapes per EncoderLayer.__init__)."""
    ks = jax.random.split(key, 8)
    scale = 0.05
    p = {
        # LayerNorm 1
        "g1": jnp.ones((1, feature_size), jnp.float32),
        "be1": jnp.zeros((1, feature_size), jnp.float32),
        # MultiHeadAttention(4, F, F, F, F): q/k/v/out projections
        "wq": scale * jax.random.normal(ks[0], (feature_size, feature_size), jnp.float32),
        "bq": jnp.zeros((1, feature_size), jnp.float32),
        "wk": scale * jax.random.normal(ks[1], (feature_size, feature_size), jnp.float32),
        "bk": jnp.zeros((1, feature_size), jnp.float32),
        "wv": scale * jax.random.normal(ks[2], (feature_size, feature_size), jnp.float32),
        "bv": jnp.zeros((1, feature_size), jnp.float32),
        "wo": scale * jax.random.normal(ks[3], (feature_size, feature_size), jnp.float32),
        "bo": jnp.zeros((1, feature_size), jnp.float32),
        # LayerNorm 2
        "g2": jnp.ones((1, feature_size), jnp.float32),
        "be2": jnp.zeros((1, feature_size), jnp.float32),
        # FeedForward: Linear(F, 2048) -> ReLU -> Dropout -> Linear(2048, F)
        "wf1": scale * jax.random.normal(ks[4], (feature_size, FF_HIDDEN), jnp.float32),
        "bf1": 0.01 * jax.random.normal(ks[5], (1, FF_HIDDEN), jnp.float32),
        "wf2": scale * jax.random.normal(ks[6], (FF_HIDDEN, feature_size), jnp.float32),
        "bf2": 0.01 * jax.random.normal(ks[7], (1, feature_size), jnp.float32),
    }
    return p


_PARAM_ORDER = ("g1", "be1", "wq", "bq", "wk", "bk", "wv", "bv", "wo", "bo",
                "g2", "be2", "wf1", "bf1", "wf2", "bf2")
_MATRIX_PARAMS = ("wq", "wk", "wv", "wo", "wf1", "wf2")


@functools.partial(jax.jit, static_argnames=("history_length", "weight_dtype"))
def encoder_layer_forward(chunk, history, params, history_length,
                          weight_dtype=jnp.float32):
    """Returns (new_chunk, new_history), matching EncoderLayer.forward (eval mode).

    Set weight_dtype=jnp.bfloat16 on v6e/v7x to halve weight HBM traffic/VMEM and
    use the native bf16 MXU path (f32 accumulation is kept inside the kernel).
    """
    # Glue (concat + slice) in plain JAX; the hot path runs in one Pallas call.
    new_history = jnp.concatenate([history, chunk], axis=1)[:, -history_length:, :]

    B, C, F = chunk.shape
    H = new_history.shape[1]

    chunk2d = chunk.reshape(B * C, F).astype(jnp.float32)
    hist2d = new_history.reshape(B * H, F).astype(jnp.float32)

    # Additive block-diagonal mask: 0 for same-batch (query-row, key-row) pairs,
    # -1e30 otherwise. Separates batches after flattening and subsumes the
    # module's all-ones dummy_mask.
    q_batch = jnp.repeat(jnp.arange(B, dtype=jnp.int32), C)
    k_batch = jnp.repeat(jnp.arange(B, dtype=jnp.int32), H)
    add_mask = jnp.where(q_batch[:, None] == k_batch[None, :],
                         jnp.float32(0.0), jnp.float32(NEG_INF))

    weights = [params[n].astype(weight_dtype) if n in _MATRIX_PARAMS else params[n]
               for n in _PARAM_ORDER]

    # Full-array, single-buffered VMEM residents (no grid -> no double buffering,
    # no per-step pipeline overhead, one lane-dense output store).
    n_in = 3 + len(weights)
    in_specs = [pl.BlockSpec(memory_space=pltpu.MemorySpace.VMEM) for _ in range(n_in)]
    out_specs = pl.BlockSpec(memory_space=pltpu.MemorySpace.VMEM)

    # TODO(synk): on v7x (2 TensorCores) shard the B*C rows across cores with a
    #             2-way "parallel" grid / core_map; single invocation targets the
    #             single-TC v5e/v6e.
    # TODO(synk): a streaming deployment should cache K/V for the retained
    #             history rows across calls instead of re-projecting new_history;
    #             that changes the module interface so it is not done here.
    chunk_out = pl.pallas_call(
        encoder_layer_kernel,
        out_shape=jax.ShapeDtypeStruct((B * C, F), jnp.float32),
        in_specs=in_specs,
        out_specs=out_specs,
        compiler_params=pltpu.CompilerParams(
            # Explicit scoped-VMEM budget so large feature sizes (e.g. F=512,
            # ~12 MB of f32 weights) clear v5e's 16 MiB default while staying
            # below v7x's 64 MiB physical VMEM.
            vmem_limit_bytes=48 * 1024 * 1024),
    )(chunk2d, hist2d, add_mask, *weights)

    return chunk_out.reshape(B, C, F), new_history


def reference_forward(chunk, history, params, history_length):
    """Pure-JAX reference for correctness checking."""
    new_history = jnp.concatenate([history, chunk], axis=1)[:, -history_length:, :]
    F = chunk.shape[-1]
    hd = F // NUM_HEADS

    def ln(x, g, b):
        mu = jnp.mean(x, axis=-1, keepdims=True)
        var = jnp.mean((x - mu) ** 2, axis=-1, keepdims=True)
        return (x - mu) * jax.lax.rsqrt(var + LN_EPS) * g + b

    residual = chunk
    xn = ln(chunk, params["g1"][0], params["be1"][0])
    q = xn @ params["wq"] + params["bq"][0]
    k = new_history @ params["wk"] + params["bk"][0]
    v = new_history @ params["wv"] + params["bv"][0]
    B, C, _ = q.shape
    H = k.shape[1]
    qh = q.reshape(B, C, NUM_HEADS, hd).transpose(0, 2, 1, 3)
    kh = k.reshape(B, H, NUM_HEADS, hd).transpose(0, 2, 1, 3)
    vh = v.reshape(B, H, NUM_HEADS, hd).transpose(0, 2, 1, 3)
    s = jnp.einsum("bhqd,bhkd->bhqk", qh, kh) / jnp.sqrt(jnp.float32(hd))
    p = jax.nn.softmax(s, axis=-1)
    o = jnp.einsum("bhqk,bhkd->bhqd", p, vh).transpose(0, 2, 1, 3).reshape(B, C, F)
    attn = o @ params["wo"] + params["bo"][0]
    x2 = residual + attn
    xn2 = ln(x2, params["g2"][0], params["be2"][0])
    hid = jax.nn.relu(xn2 @ params["wf1"] + params["bf1"][0])
    ff = hid @ params["wf2"] + params["bf2"][0]
    return x2 + ff, new_history


if __name__ == "__main__":
    batch = 2
    feature_size = 32           # divisible by NUM_HEADS=4
    history_seq = 10
    history_length = 16

    key = jax.random.PRNGKey(0)
    k_chunk, k_hist, k_params = jax.random.split(key, 3)

    chunk = jax.random.normal(k_chunk, (batch, CHUNK_SIZE, feature_size), jnp.float32)
    history = jax.random.normal(k_hist, (batch, history_seq, feature_size), jnp.float32)
    params = init_params(k_params, feature_size)

    out_chunk, out_history = encoder_layer_forward(chunk, history, params, history_length)
    out_chunk = jax.block_until_ready(out_chunk)
    out_history = jax.block_until_ready(out_history)

    ref_chunk, ref_history = reference_forward(chunk, history, params, history_length)
    assert out_chunk.shape == (batch, CHUNK_SIZE, feature_size)
    assert out_history.shape == (batch, history_length, feature_size)
    # 5e-3 tolerance: covers the EUP approximate-reciprocal softmax normalization.
    assert jnp.allclose(out_chunk, ref_chunk, atol=5e-3, rtol=5e-3)
    assert jnp.allclose(out_history, ref_history)

    print("KERNEL_OK")
</pallas_src>

<mosaic_0001>
module attributes {stable_mosaic.version = 11 : i64} {
  func.func @encoder_layer_kernel(%arg0: memref<12x32xf32, #tpu.memory_space<vmem>>, %arg1: memref<32x32xf32, #tpu.memory_space<vmem>>, %arg2: memref<12x32xf32, #tpu.memory_space<vmem>>, %arg3: memref<1x32xf32, #tpu.memory_space<vmem>>, %arg4: memref<1x32xf32, #tpu.memory_space<vmem>>, %arg5: memref<32x32xf32, #tpu.memory_space<vmem>>, %arg6: memref<1x32xf32, #tpu.memory_space<vmem>>, %arg7: memref<32x32xf32, #tpu.memory_space<vmem>>, %arg8: memref<1x32xf32, #tpu.memory_space<vmem>>, %arg9: memref<32x32xf32, #tpu.memory_space<vmem>>, %arg10: memref<1x32xf32, #tpu.memory_space<vmem>>, %arg11: memref<32x32xf32, #tpu.memory_space<vmem>>, %arg12: memref<1x32xf32, #tpu.memory_space<vmem>>, %arg13: memref<1x32xf32, #tpu.memory_space<vmem>>, %arg14: memref<1x32xf32, #tpu.memory_space<vmem>>, %arg15: memref<32x2048xf32, #tpu.memory_space<vmem>>, %arg16: memref<1x2048xf32, #tpu.memory_space<vmem>>, %arg17: memref<2048x32xf32, #tpu.memory_space<vmem>>, %arg18: memref<1x32xf32, #tpu.memory_space<vmem>>, %arg19: memref<12x32xf32, #tpu.memory_space<vmem>>) attributes {dimension_semantics = [], scalar_prefetch = 0 : i64, scratch_operands = 0 : i64, tpu.core_type = #tpu.core_type<tc>} {
    %c0 = arith.constant 0 : index
    %c0_0 = arith.constant 0 : index
    %0 = vector.load %arg0[%c0, %c0_0] : memref<12x32xf32, #tpu.memory_space<vmem>>, vector<12x32xf32>
    %c0_1 = arith.constant 0 : index
    %c0_2 = arith.constant 0 : index
    %1 = vector.load %arg1[%c0_1, %c0_2] : memref<32x32xf32, #tpu.memory_space<vmem>>, vector<32x32xf32>
    %c0_3 = arith.constant 0 : index
    %c0_4 = arith.constant 0 : index
    %2 = vector.load %arg2[%c0_3, %c0_4] : memref<12x32xf32, #tpu.memory_space<vmem>>, vector<12x32xf32>
    %c0_5 = arith.constant 0 : index
    %c0_6 = arith.constant 0 : index
    %3 = vector.load %arg3[%c0_5, %c0_6] : memref<1x32xf32, #tpu.memory_space<vmem>>, vector<1x32xf32>
    %c0_7 = arith.constant 0 : index
    %c0_8 = arith.constant 0 : index
    %4 = vector.load %arg4[%c0_7, %c0_8] : memref<1x32xf32, #tpu.memory_space<vmem>>, vector<1x32xf32>
    %cst = arith.constant dense<0.000000e+00> : vector<12xf32>
    %5 = vector.multi_reduction <add>, %0, %cst [1] : vector<12x32xf32> to vector<12xf32>
    %6 = vector.shape_cast %5 : vector<12xf32> to vector<12x1xf32>
    %cst_9 = arith.constant 3.200000e+01 : f32
    %7 = vector.broadcast %cst_9 : f32 to vector<12x1xf32>
    %8 = arith.divf %6, %7 : vector<12x1xf32>
    %9 = vector.broadcast %8 : vector<12x1xf32> to vector<12x32xf32>
    %10 = arith.subf %0, %9 : vector<12x32xf32>
    %11 = arith.mulf %10, %10 : vector<12x32xf32>
    %cst_10 = arith.constant dense<0.000000e+00> : vector<12xf32>
    %12 = vector.multi_reduction <add>, %11, %cst_10 [1] : vector<12x32xf32> to vector<12xf32>
    %13 = vector.shape_cast %12 : vector<12xf32> to vector<12x1xf32>
    %cst_11 = arith.constant 3.200000e+01 : f32
    %14 = vector.broadcast %cst_11 : f32 to vector<12x1xf32>
    %15 = arith.divf %13, %14 : vector<12x1xf32>
    %16 = vector.broadcast %8 : vector<12x1xf32> to vector<12x32xf32>
    %17 = arith.subf %0, %16 : vector<12x32xf32>
    %cst_12 = arith.constant 9.99999974E-6 : f32
    %18 = vector.broadcast %cst_12 : f32 to vector<12x1xf32>
    %19 = arith.addf %15, %18 : vector<12x1xf32>
    %20 = math.rsqrt %19 : vector<12x1xf32>
    %21 = vector.broadcast %20 : vector<12x1xf32> to vector<12x32xf32>
    %22 = arith.mulf %17, %21 : vector<12x32xf32>
    %23 = vector.broadcast %3 : vector<1x32xf32> to vector<12x32xf32>
    %24 = arith.mulf %22, %23 : vector<12x32xf32>
    %25 = vector.broadcast %4 : vector<1x32xf32> to vector<12x32xf32>
    %26 = arith.addf %24, %25 : vector<12x32xf32>
    %c0_13 = arith.constant 0 : index
    %c0_14 = arith.constant 0 : index
    %27 = vector.load %arg5[%c0_13, %c0_14] : memref<32x32xf32, #tpu.memory_space<vmem>>, vector<32x32xf32>
    %cst_15 = arith.constant dense<0.000000e+00> : vector<12x32xf32>
    %28 = tpu.matmul %26, %27, %cst_15 {dimension_numbers = #tpu.dot_dimension_numbers<[1], [0], [0], [1], [0, 0, 1, 1], [], []>} : vector<12x32xf32>, vector<32x32xf32>, vector<12x32xf32> -> vector<12x32xf32>
    %c0_16 = arith.constant 0 : index
    %c0_17 = arith.constant 0 : index
    %29 = vector.load %arg6[%c0_16, %c0_17] : memref<1x32xf32, #tpu.memory_space<vmem>>, vector<1x32xf32>
    %30 = vector.broadcast %29 : vector<1x32xf32> to vector<12x32xf32>
    %31 = arith.addf %28, %30 : vector<12x32xf32>
    %c0_18 = arith.constant 0 : index
    %c0_19 = arith.constant 0 : index
    %32 = vector.load %arg7[%c0_18, %c0_19] : memref<32x32xf32, #tpu.memory_space<vmem>>, vector<32x32xf32>
    %cst_20 = arith.constant dense<0.000000e+00> : vector<32x32xf32>
    %33 = tpu.matmul %1, %32, %cst_20 {dimension_numbers = #tpu.dot_dimension_numbers<[1], [0], [0], [1], [0, 0, 1, 1], [], []>} : vector<32x32xf32>, vector<32x32xf32>, vector<32x32xf32> -> vector<32x32xf32>
    %c0_21 = arith.constant 0 : index
    %c0_22 = arith.constant 0 : index
    %34 = vector.load %arg8[%c0_21, %c0_22] : memref<1x32xf32, #tpu.memory_space<vmem>>, vector<1x32xf32>
    %35 = vector.broadcast %34 : vector<1x32xf32> to vector<32x32xf32>
    %36 = arith.addf %33, %35 : vector<32x32xf32>
    %c0_23 = arith.constant 0 : index
    %c0_24 = arith.constant 0 : index
    %37 = vector.load %arg9[%c0_23, %c0_24] : memref<32x32xf32, #tpu.memory_space<vmem>>, vector<32x32xf32>
    %cst_25 = arith.constant dense<0.000000e+00> : vector<32x32xf32>
    %38 = tpu.matmul %1, %37, %cst_25 {dimension_numbers = #tpu.dot_dimension_numbers<[1], [0], [0], [1], [0, 0, 1, 1], [], []>} : vector<32x32xf32>, vector<32x32xf32>, vector<32x32xf32> -> vector<32x32xf32>
    %c0_26 = arith.constant 0 : index
    %c0_27 = arith.constant 0 : index
    %39 = vector.load %arg10[%c0_26, %c0_27] : memref<1x32xf32, #tpu.memory_space<vmem>>, vector<1x32xf32>
    %40 = vector.broadcast %39 : vector<1x32xf32> to vector<32x32xf32>
    %41 = arith.addf %38, %40 : vector<32x32xf32>
    %cst_28 = arith.constant 8.000000e+00 : f32
    %42 = math.sqrt %cst_28 : f32
    %cst_29 = arith.constant 1.000000e+00 : f32
    %43 = arith.divf %cst_29, %42 : f32
    %44 = vector.extract_strided_slice %31 {offsets = [0, 0], sizes = [12, 8], strides = [1, 1]} : vector<12x32xf32> to vector<12x8xf32>
    %45 = vector.extract_strided_slice %36 {offsets = [0, 0], sizes = [32, 8], strides = [1, 1]} : vector<32x32xf32> to vector<32x8xf32>
    %46 = vector.extract_strided_slice %41 {offsets = [0, 0], sizes = [32, 8], strides = [1, 1]} : vector<32x32xf32> to vector<32x8xf32>
    %cst_30 = arith.constant dense<0.000000e+00> : vector<12x32xf32>
    %47 = tpu.matmul %44, %45, %cst_30 {dimension_numbers = #tpu.dot_dimension_numbers<[1], [1], [0], [0], [0, 0, 1, 0], [], []>} : vector<12x8xf32>, vector<32x8xf32>, vector<12x32xf32> -> vector<12x32xf32>
    %48 = vector.broadcast %43 : f32 to vector<12x32xf32>
    %49 = arith.mulf %47, %48 : vector<12x32xf32>
    %50 = arith.addf %49, %2 : vector<12x32xf32>
    %cst_31 = arith.constant dense<0xFF800000> : vector<12xf32>
    %51 = vector.multi_reduction <maximumf>, %50, %cst_31 [1] : vector<12x32xf32> to vector<12xf32>
    %52 = vector.shape_cast %51 : vector<12xf32> to vector<12x1xf32>
    %53 = vector.broadcast %52 : vector<12x1xf32> to vector<12x32xf32>
    %54 = arith.subf %50, %53 : vector<12x32xf32>
    %55 = math.exp %54 : vector<12x32xf32>
    %cst_32 = arith.constant dense<0.000000e+00> : vector<12xf32>
    %56 = vector.multi_reduction <add>, %55, %cst_32 [1] : vector<12x32xf32> to vector<12xf32>
    %57 = vector.shape_cast %56 : vector<12xf32> to vector<12x1xf32>
    %58 = tpu.reciprocal %57 {approx = true} : vector<12x1xf32> -> vector<12x1xf32>
    %59 = vector.broadcast %58 : vector<12x1xf32> to vector<12x32xf32>
    %60 = arith.mulf %55, %59 : vector<12x32xf32>
    %cst_33 = arith.constant dense<0.000000e+00> : vector<12x8xf32>
    %61 = tpu.matmul %60, %46, %cst_33 {dimension_numbers = #tpu.dot_dimension_numbers<[1], [0], [0], [1], [0, 0, 1, 1], [], []>} : vector<12x32xf32>, vector<32x8xf32>, vector<12x8xf32> -> vector<12x8xf32>
    %c0_34 = arith.constant 0 : index
    %c0_35 = arith.constant 0 : index
    %62 = vector.load %arg11[%c0_34, %c0_35] : memref<32x32xf32, #tpu.memory_space<vmem>>, vector<8x32xf32>
    %cst_36 = arith.constant dense<0.000000e+00> : vector<12x32xf32>
    %63 = tpu.matmul %61, %62, %cst_36 {dimension_numbers = #tpu.dot_dimension_numbers<[1], [0], [0], [1], [0, 0, 1, 1], [], []>} : vector<12x8xf32>, vector<8x32xf32>, vector<12x32xf32> -> vector<12x32xf32>
    %64 = vector.extract_strided_slice %31 {offsets = [0, 8], sizes = [12, 8], strides = [1, 1]} : vector<12x32xf32> to vector<12x8xf32>
    %65 = vector.extract_strided_slice %36 {offsets = [0, 8], sizes = [32, 8], strides = [1, 1]} : vector<32x32xf32> to vector<32x8xf32>
    %66 = vector.extract_strided_slice %41 {offsets = [0, 8], sizes = [32, 8], strides = [1, 1]} : vector<32x32xf32> to vector<32x8xf32>
    %cst_37 = arith.constant dense<0.000000e+00> : vector<12x32xf32>
    %67 = tpu.matmul %64, %65, %cst_37 {dimension_numbers = #tpu.dot_dimension_numbers<[1], [1], [0], [0], [0, 0, 1, 0], [], []>} : vector<12x8xf32>, vector<32x8xf32>, vector<12x32xf32> -> vector<12x32xf32>
    %68 = vector.broadcast %43 : f32 to vector<12x32xf32>
    %69 = arith.mulf %67, %68 : vector<12x32xf32>
    %70 = arith.addf %69, %2 : vector<12x32xf32>
    %cst_38 = arith.constant dense<0xFF800000> : vector<12xf32>
    %71 = vector.multi_reduction <maximumf>, %70, %cst_38 [1] : vector<12x32xf32> to vector<12xf32>
    %72 = vector.shape_cast %71 : vector<12xf32> to vector<12x1xf32>
    %73 = vector.broadcast %72 : vector<12x1xf32> to vector<12x32xf32>
    %74 = arith.subf %70, %73 : vector<12x32xf32>
    %75 = math.exp %74 : vector<12x32xf32>
    %cst_39 = arith.constant dense<0.000000e+00> : vector<12xf32>
    %76 = vector.multi_reduction <add>, %75, %cst_39 [1] : vector<12x32xf32> to vector<12xf32>
    %77 = vector.shape_cast %76 : vector<12xf32> to vector<12x1xf32>
    %78 = tpu.reciprocal %77 {approx = true} : vector<12x1xf32> -> vector<12x1xf32>
    %79 = vector.broadcast %78 : vector<12x1xf32> to vector<12x32xf32>
    %80 = arith.mulf %75, %79 : vector<12x32xf32>
    %cst_40 = arith.constant dense<0.000000e+00> : vector<12x8xf32>
    %81 = tpu.matmul %80, %66, %cst_40 {dimension_numbers = #tpu.dot_dimension_numbers<[1], [0], [0], [1], [0, 0, 1, 1], [], []>} : vector<12x32xf32>, vector<32x8xf32>, vector<12x8xf32> -> vector<12x8xf32>
    %c8 = arith.constant 8 : index
    %c0_41 = arith.constant 0 : index
    %82 = vector.load %arg11[%c8, %c0_41] : memref<32x32xf32, #tpu.memory_space<vmem>>, vector<8x32xf32>
    %cst_42 = arith.constant dense<0.000000e+00> : vector<12x32xf32>
    %83 = tpu.matmul %81, %82, %cst_42 {dimension_numbers = #tpu.dot_dimension_numbers<[1], [0], [0], [1], [0, 0, 1, 1], [], []>} : vector<12x8xf32>, vector<8x32xf32>, vector<12x32xf32> -> vector<12x32xf32>
    %84 = arith.addf %63, %83 : vector<12x32xf32>
    %85 = vector.extract_strided_slice %31 {offsets = [0, 16], sizes = [12, 8], strides = [1, 1]} : vector<12x32xf32> to vector<12x8xf32>
    %86 = vector.extract_strided_slice %36 {offsets = [0, 16], sizes = [32, 8], strides = [1, 1]} : vector<32x32xf32> to vector<32x8xf32>
    %87 = vector.extract_strided_slice %41 {offsets = [0, 16], sizes = [32, 8], strides = [1, 1]} : vector<32x32xf32> to vector<32x8xf32>
    %cst_43 = arith.constant dense<0.000000e+00> : vector<12x32xf32>
    %88 = tpu.matmul %85, %86, %cst_43 {dimension_numbers = #tpu.dot_dimension_numbers<[1], [1], [0], [0], [0, 0, 1, 0], [], []>} : vector<12x8xf32>, vector<32x8xf32>, vector<12x32xf32> -> vector<12x32xf32>
    %89 = vector.broadcast %43 : f32 to vector<12x32xf32>
    %90 = arith.mulf %88, %89 : vector<12x32xf32>
    %91 = arith.addf %90, %2 : vector<12x32xf32>
    %cst_44 = arith.constant dense<0xFF800000> : vector<12xf32>
    %92 = vector.multi_reduction <maximumf>, %91, %cst_44 [1] : vector<12x32xf32> to vector<12xf32>
    %93 = vector.shape_cast %92 : vector<12xf32> to vector<12x1xf32>
    %94 = vector.broadcast %93 : vector<12x1xf32> to vector<12x32xf32>
    %95 = arith.subf %91, %94 : vector<12x32xf32>
    %96 = math.exp %95 : vector<12x32xf32>
    %cst_45 = arith.constant dense<0.000000e+00> : vector<12xf32>
    %97 = vector.multi_reduction <add>, %96, %cst_45 [1] : vector<12x32xf32> to vector<12xf32>
    %98 = vector.shape_cast %97 : vector<12xf32> to vector<12x1xf32>
    %99 = tpu.reciprocal %98 {approx = true} : vector<12x1xf32> -> vector<12x1xf32>
    %100 = vector.broadcast %99 : vector<12x1xf32> to vector<12x32xf32>
    %101 = arith.mulf %96, %100 : vector<12x32xf32>
    %cst_46 = arith.constant dense<0.000000e+00> : vector<12x8xf32>
    %102 = tpu.matmul %101, %87, %cst_46 {dimension_numbers = #tpu.dot_dimension_numbers<[1], [0], [0], [1], [0, 0, 1, 1], [], []>} : vector<12x32xf32>, vector<32x8xf32>, vector<12x8xf32> -> vector<12x8xf32>
    %c16 = arith.constant 16 : index
    %c0_47 = arith.constant 0 : index
    %103 = vector.load %arg11[%c16, %c0_47] : memref<32x32xf32, #tpu.memory_space<vmem>>, vector<8x32xf32>
    %cst_48 = arith.constant dense<0.000000e+00> : vector<12x32xf32>
    %104 = tpu.matmul %102, %103, %cst_48 {dimension_numbers = #tpu.dot_dimension_numbers<[1], [0], [0], [1], [0, 0, 1, 1], [], []>} : vector<12x8xf32>, vector<8x32xf32>, vector<12x32xf32> -> vector<12x32xf32>
    %105 = arith.addf %84, %104 : vector<12x32xf32>
    %106 = vector.extract_strided_slice %31 {offsets = [0, 24], sizes = [12, 8], strides = [1, 1]} : vector<12x32xf32> to vector<12x8xf32>
    %107 = vector.extract_strided_slice %36 {offsets = [0, 24], sizes = [32, 8], strides = [1, 1]} : vector<32x32xf32> to vector<32x8xf32>
    %108 = vector.extract_strided_slice %41 {offsets = [0, 24], sizes = [32, 8], strides = [1, 1]} : vector<32x32xf32> to vector<32x8xf32>
    %cst_49 = arith.constant dense<0.000000e+00> : vector<12x32xf32>
    %109 = tpu.matmul %106, %107, %cst_49 {dimension_numbers = #tpu.dot_dimension_numbers<[1], [1], [0], [0], [0, 0, 1, 0], [], []>} : vector<12x8xf32>, vector<32x8xf32>, vector<12x32xf32> -> vector<12x32xf32>
    %110 = vector.broadcast %43 : f32 to vector<12x32xf32>
    %111 = arith.mulf %109, %110 : vector<12x32xf32>
    %112 = arith.addf %111, %2 : vector<12x32xf32>
    %cst_50 = arith.constant dense<0xFF800000> : vector<12xf32>
    %113 = vector.multi_reduction <maximumf>, %112, %cst_50 [1] : vector<12x32xf32> to vector<12xf32>
    %114 = vector.shape_cast %113 : vector<12xf32> to vector<12x1xf32>
    %115 = vector.broadcast %114 : vector<12x1xf32> to vector<12x32xf32>
    %116 = arith.subf %112, %115 : vector<12x32xf32>
    %117 = math.exp %116 : vector<12x32xf32>
    %cst_51 = arith.constant dense<0.000000e+00> : vector<12xf32>
    %118 = vector.multi_reduction <add>, %117, %cst_51 [1] : vector<12x32xf32> to vector<12xf32>
    %119 = vector.shape_cast %118 : vector<12xf32> to vector<12x1xf32>
    %120 = tpu.reciprocal %119 {approx = true} : vector<12x1xf32> -> vector<12x1xf32>
    %121 = vector.broadcast %120 : vector<12x1xf32> to vector<12x32xf32>
    %122 = arith.mulf %117, %121 : vector<12x32xf32>
    %cst_52 = arith.constant dense<0.000000e+00> : vector<12x8xf32>
    %123 = tpu.matmul %122, %108, %cst_52 {dimension_numbers = #tpu.dot_dimension_numbers<[1], [0], [0], [1], [0, 0, 1, 1], [], []>} : vector<12x32xf32>, vector<32x8xf32>, vector<12x8xf32> -> vector<12x8xf32>
    %c24 = arith.constant 24 : index
    %c0_53 = arith.constant 0 : index
    %124 = vector.load %arg11[%c24, %c0_53] : memref<32x32xf32, #tpu.memory_space<vmem>>, vector<8x32xf32>
    %cst_54 = arith.constant dense<0.000000e+00> : vector<12x32xf32>
    %125 = tpu.matmul %123, %124, %cst_54 {dimension_numbers = #tpu.dot_dimension_numbers<[1], [0], [0], [1], [0, 0, 1, 1], [], []>} : vector<12x8xf32>, vector<8x32xf32>, vector<12x32xf32> -> vector<12x32xf32>
    %126 = arith.addf %105, %125 : vector<12x32xf32>
    %127 = arith.addf %0, %126 : vector<12x32xf32>
    %c0_55 = arith.constant 0 : index
    %c0_56 = arith.constant 0 : index
    %128 = vector.load %arg12[%c0_55, %c0_56] : memref<1x32xf32, #tpu.memory_space<vmem>>, vector<1x32xf32>
    %129 = vector.broadcast %128 : vector<1x32xf32> to vector<12x32xf32>
    %130 = arith.addf %127, %129 : vector<12x32xf32>
    %c0_57 = arith.constant 0 : index
    %c0_58 = arith.constant 0 : index
    %131 = vector.load %arg13[%c0_57, %c0_58] : memref<1x32xf32, #tpu.memory_space<vmem>>, vector<1x32xf32>
    %c0_59 = arith.constant 0 : index
    %c0_60 = arith.constant 0 : index
    %132 = vector.load %arg14[%c0_59, %c0_60] : memref<1x32xf32, #tpu.memory_space<vmem>>, vector<1x32xf32>
    %cst_61 = arith.constant dense<0.000000e+00> : vector<12xf32>
    %133 = vector.multi_reduction <add>, %130, %cst_61 [1] : vector<12x32xf32> to vector<12xf32>
    %134 = vector.shape_cast %133 : vector<12xf32> to vector<12x1xf32>
    %cst_62 = arith.constant 3.200000e+01 : f32
    %135 = vector.broadcast %cst_62 : f32 to vector<12x1xf32>
    %136 = arith.divf %134, %135 : vector<12x1xf32>
    %137 = vector.broadcast %136 : vector<12x1xf32> to vector<12x32xf32>
    %138 = arith.subf %130, %137 : vector<12x32xf32>
    %139 = arith.mulf %138, %138 : vector<12x32xf32>
    %cst_63 = arith.constant dense<0.000000e+00> : vector<12xf32>
    %140 = vector.multi_reduction <add>, %139, %cst_63 [1] : vector<12x32xf32> to vector<12xf32>
    %141 = vector.shape_cast %140 : vector<12xf32> to vector<12x1xf32>
    %cst_64 = arith.constant 3.200000e+01 : f32
    %142 = vector.broadcast %cst_64 : f32 to vector<12x1xf32>
    %143 = arith.divf %141, %142 : vector<12x1xf32>
    %144 = vector.broadcast %136 : vector<12x1xf32> to vector<12x32xf32>
    %145 = arith.subf %130, %144 : vector<12x32xf32>
    %cst_65 = arith.constant 9.99999974E-6 : f32
    %146 = vector.broadcast %cst_65 : f32 to vector<12x1xf32>
    %147 = arith.addf %143, %146 : vector<12x1xf32>
    %148 = math.rsqrt %147 : vector<12x1xf32>
    %149 = vector.broadcast %148 : vector<12x1xf32> to vector<12x32xf32>
    %150 = arith.mulf %145, %149 : vector<12x32xf32>
    %151 = vector.broadcast %131 : vector<1x32xf32> to vector<12x32xf32>
    %152 = arith.mulf %150, %151 : vector<12x32xf32>
    %153 = vector.broadcast %132 : vector<1x32xf32> to vector<12x32xf32>
    %154 = arith.addf %152, %153 : vector<12x32xf32>
    %c0_66 = arith.constant 0 : index
    %c0_67 = arith.constant 0 : index
    %155 = vector.load %arg15[%c0_66, %c0_67] : memref<32x2048xf32, #tpu.memory_space<vmem>>, vector<32x2048xf32>
    %cst_68 = arith.constant dense<0.000000e+00> : vector<12x2048xf32>
    %156 = tpu.matmul %154, %155, %cst_68 {dimension_numbers = #tpu.dot_dimension_numbers<[1], [0], [0], [1], [0, 0, 1, 1], [], []>} : vector<12x32xf32>, vector<32x2048xf32>, vector<12x2048xf32> -> vector<12x2048xf32>
    %c0_69 = arith.constant 0 : index
    %c0_70 = arith.constant 0 : index
    %157 = vector.load %arg16[%c0_69, %c0_70] : memref<1x2048xf32, #tpu.memory_space<vmem>>, vector<1x2048xf32>
    %158 = vector.broadcast %157 : vector<1x2048xf32> to vector<12x2048xf32>
    %159 = arith.addf %156, %158 : vector<12x2048xf32>
    %cst_71 = arith.constant 0.000000e+00 : f32
    %160 = vector.broadcast %cst_71 : f32 to vector<12x2048xf32>
    %161 = arith.maximumf %159, %160 : vector<12x2048xf32>
    %c0_72 = arith.constant 0 : index
    %c0_73 = arith.constant 0 : index
    %162 = vector.load %arg17[%c0_72, %c0_73] : memref<2048x32xf32, #tpu.memory_space<vmem>>, vector<2048x32xf32>
    %cst_74 = arith.constant dense<0.000000e+00> : vector<12x32xf32>
    %163 = tpu.matmul %161, %162, %cst_74 {dimension_numbers = #tpu.dot_dimension_numbers<[1], [0], [0], [1], [0, 0, 1, 1], [], []>} : vector<12x2048xf32>, vector<2048x32xf32>, vector<12x32xf32> -> vector<12x32xf32>
    %c0_75 = arith.constant 0 : index
    %c0_76 = arith.constant 0 : index
    %164 = vector.load %arg18[%c0_75, %c0_76] : memref<1x32xf32, #tpu.memory_space<vmem>>, vector<1x32xf32>
    %165 = vector.broadcast %164 : vector<1x32xf32> to vector<12x32xf32>
    %166 = arith.addf %163, %165 : vector<12x32xf32>
    %167 = arith.addf %130, %166 : vector<12x32xf32>
    %c0_77 = arith.constant 0 : index
    %c0_78 = arith.constant 0 : index
    %168 = vector.load %arg19[%c0_77, %c0_78] : memref<12x32xf32, #tpu.memory_space<vmem>>, vector<12x32xf32>
    tpu.vector_store %arg19[%c0_77, %c0_78], %167 {strides = array<i32>} : memref<12x32xf32, #tpu.memory_space<vmem>>, vector<12x32xf32>,
    return
  }
}

</mosaic_0001>

<llo_original>
// kernel: eq.8
$region0: #{eq.8}
  %s0 = inlined_call_operand.vmem [shape: s32[2,6], index: 0, kind: input, shape index: {}]
  %s1 = inlined_call_operand.vmem [shape: s32[12], index: 1, kind: output, shape index: {}]
  $region1: #{eq.8} parent=0
    #allocation0 [shape = 'u8[4096]{0}', space=vmem, size = 0x1000, scoped, tag = 'scoped mem for output reshape']
    #allocation1 [shape = 'u8[4096]{0}', space=vmem, size = 0x1000, scoped, tag = 'scoped mem for input reshape']
    %s3 = sshllo.u32 0, 2
    %v4 = vld [vmem:[%s0] sm:%s3]
    %5 = vst [vmem:[#allocation1] sm:%s3] %v4
    %v6 = vld [vmem:[#allocation1] sm:$0x1]
    %vm7 = vcmask 48128
    %8 = vst.msk [vmem:[#allocation0] sm:$0x1] %vm7, %v6
    %s9 = scalar_lea.vmem [#allocation1], 1
    %v10 = vld [vmem:[%s9] sm:$0x1]
    %11 = vrot.lane.b32.xlu0 %v10, 6
    %v12 = vpop.permute.xlu0 %11
    %vm13 = vcmask 97328
    %14 = vst.msk [vmem:[#allocation0] sm:$0x1] %vm13, %v12
    %s16 = sshllo.u32 0, 1
    %v18 = vld [vmem:[#allocation0] sm:%s16]
    %s19 = sshllo.u32 0, 1
    %20 = vst [vmem:[%s1] sm:%s19] %v18

// kernel: eq.11
$region0: #{eq.11}
  %s0 = inlined_call_operand.vmem [shape: s32[2,16], index: 0, kind: input, shape index: {}]
  %s1 = inlined_call_operand.vmem [shape: s32[32], index: 1, kind: output, shape index: {}]
  $region1: #{eq.11} parent=0
    #allocation0 [shape = 'u8[4096]{0}', space=vmem, size = 0x1000, scoped, tag = 'scoped mem for output reshape']
    #allocation1 [shape = 'u8[4096]{0}', space=vmem, size = 0x1000, scoped, tag = 'scoped mem for input reshape']
    %s3 = sshllo.u32 0, 2
    %v4 = vld [vmem:[%s0] sm:%s3]
    %5 = vst [vmem:[#allocation1] sm:%s3] %v4
    %v6 = vld [vmem:[#allocation1] sm:$0x1]
    %vm7 = vcmask 130048
    %8 = vst.msk [vmem:[#allocation0] sm:$0x1] %vm7, %v6
    %s9 = scalar_lea.vmem [#allocation1], 1
    %v10 = vld [vmem:[%s9] sm:$0x1]
    %11 = vrot.lane.b32.xlu0 %v10, 16
    %v12 = vpop.permute.xlu0 %11
    %vm13 = vcmask 261248
    %14 = vst.msk [vmem:[#allocation0] sm:$0x1] %vm13, %v12
    %s16 = sshllo.u32 0, 1
    %v18 = vld [vmem:[#allocation0] sm:%s16]
    %s19 = sshllo.u32 0, 1
    %20 = vst [vmem:[%s1] sm:%s19] %v18

// kernel: encoder_layer_forward.1
$region0: #{encoder_layer_forward.1}
  #allocation0 [shape = 'u32[]', space=smem, size = 0x4, offset = 0x4, fixed_abs, tag = 'smem constant byte address 0x4 - core index']
  #allocation1 [shape = 'u32[144,128]{1,0:T(1,128)}', space=vmem, size = 0x12000, scoped, tag = 'internal scratch']
  %s0 = inlined_call_operand.vmem [shape: f32[12,32], index: 0, kind: input, shape index: {}]
  %s1 = inlined_call_operand.vmem [shape: f32[32,32], index: 1, kind: input, shape index: {}]
  %s2 = inlined_call_operand.vmem [shape: f32[12,32], index: 2, kind: input, shape index: {}]
  %s3 = inlined_call_operand.vmem [shape: f32[1,32], index: 3, kind: input, shape index: {}]
  %s4 = inlined_call_operand.vmem [shape: f32[1,32], index: 4, kind: input, shape index: {}]
  %s5 = inlined_call_operand.vmem [shape: f32[32,32], index: 5, kind: input, shape index: {}]
  %s6 = inlined_call_operand.vmem [shape: f32[1,32], index: 6, kind: input, shape index: {}]
  %s7 = inlined_call_operand.vmem [shape: f32[32,32], index: 7, kind: input, shape index: {}]
  %s8 = inlined_call_operand.vmem [shape: f32[1,32], index: 8, kind: input, shape index: {}]
  %s9 = inlined_call_operand.vmem [shape: f32[32,32], index: 9, kind: input, shape index: {}]
  %s10 = inlined_call_operand.vmem [shape: f32[1,32], index: 10, kind: input, shape index: {}]
  %s11 = inlined_call_operand.vmem [shape: f32[32,32], index: 11, kind: input, shape index: {}]
  %s12 = inlined_call_operand.vmem [shape: f32[1,32], index: 12, kind: input, shape index: {}]
  %s13 = inlined_call_operand.vmem [shape: f32[1,32], index: 13, kind: input, shape index: {}]
  %s14 = inlined_call_operand.vmem [shape: f32[1,32], index: 14, kind: input, shape index: {}]
  %s15 = inlined_call_operand.vmem [shape: f32[32,2048], index: 15, kind: input, shape index: {}]
  %s16 = inlined_call_operand.vmem [shape: f32[1,2048], index: 16, kind: input, shape index: {}]
  %s17 = inlined_call_operand.vmem [shape: f32[2048,32], index: 17, kind: input, shape index: {}]
  %s18 = inlined_call_operand.vmem [shape: f32[1,32], index: 18, kind: input, shape index: {}]
  %s19 = inlined_call_operand.vmem [shape: f32[12,32], index: 19, kind: output, shape index: {}]
  %s20 = sld [smem:[#allocation0]]
  $region86: #{encoder_layer_forward.1} parent=0
    _
  %s22 = ssub.s32 1, %s20
  %s23 = scalar_select 0, %s22, %s20
  // Predicated region
  $region2: #{encoder_layer_forward.1} parent=0 // pred_check
    _
  $region3: #{encoder_layer_forward.1} parent=0 // pred_check_branch
    %25 = sbr.rel (0) target = $region5
  $region4: #{encoder_layer_forward.1} parent=0 // pred_region
    _
  $region5: #{encoder_layer_forward.1} parent=0 // pred_fallthru
    _
  // Predicated region
  $region6: #{encoder_layer_forward.1} parent=0 // pred_check
    _
  $region7: #{encoder_layer_forward.1} parent=0 // pred_check_branch
    %27 = sbr.rel (0) target = $region9
  $region8: #{encoder_layer_forward.1} parent=0 // pred_region
    _
  $region9: #{encoder_layer_forward.1} parent=0 // pred_fallthru
    _
  // Predicated region
  $region10: #{encoder_layer_forward.1} parent=0 // pred_check
    _
  $region11: #{encoder_layer_forward.1} parent=0 // pred_check_branch
    %29 = sbr.rel (0) target = $region13
  $region12: #{encoder_layer_forward.1} parent=0 // pred_region
    _
  $region13: #{encoder_layer_forward.1} parent=0 // pred_fallthru
    _
  // Predicated region
  $region14: #{encoder_layer_forward.1} parent=0 // pred_check
    _
  $region15: #{encoder_layer_forward.1} parent=0 // pred_check_branch
    %31 = sbr.rel (0) target = $region17
  $region16: #{encoder_layer_forward.1} parent=0 // pred_region
    _
  $region17: #{encoder_layer_forward.1} parent=0 // pred_fallthru
    _
  // Predicated region
  $region18: #{encoder_layer_forward.1} parent=0 // pred_check
    _
  $region19: #{encoder_layer_forward.1} parent=0 // pred_check_branch
    %33 = sbr.rel (0) target = $region21
  $region20: #{encoder_layer_forward.1} parent=0 // pred_region
    _
  $region21: #{encoder_layer_forward.1} parent=0 // pred_fallthru
    _
  // Predicated region
  $region22: #{encoder_layer_forward.1} parent=0 // pred_check
    _
  $region23: #{encoder_layer_forward.1} parent=0 // pred_check_branch
    %35 = sbr.rel (0) target = $region25
  $region24: #{encoder_layer_forward.1} parent=0 // pred_region
    _
  $region25: #{encoder_layer_forward.1} parent=0 // pred_fallthru
    _
  // Predicated region
  $region26: #{encoder_layer_forward.1} parent=0 // pred_check
    _
  $region27: #{encoder_layer_forward.1} parent=0 // pred_check_branch
    %37 = sbr.rel (0) target = $region29
  $region28: #{encoder_layer_forward.1} parent=0 // pred_region
    _
  $region29: #{encoder_layer_forward.1} parent=0 // pred_fallthru
    _
  // Predicated region
  $region30: #{encoder_layer_forward.1} parent=0 // pred_check
    _
  $region31: #{encoder_layer_forward.1} parent=0 // pred_check_branch
    %39 = sbr.rel (0) target = $region33
  $region32: #{encoder_layer_forward.1} parent=0 // pred_region
    _
  $region33: #{encoder_layer_forward.1} parent=0 // pred_fallthru
    _
  // Predicated region
  $region34: #{encoder_layer_forward.1} parent=0 // pred_check
    _
  $region35: #{encoder_layer_forward.1} parent=0 // pred_check_branch
    %41 = sbr.rel (0) target = $region37
  $region36: #{encoder_layer_forward.1} parent=0 // pred_region
    _
  $region37: #{encoder_layer_forward.1} parent=0 // pred_fallthru
    _
  // Predicated region
  $region38: #{encoder_layer_forward.1} parent=0 // pred_check
    _
  $region39: #{encoder_layer_forward.1} parent=0 // pred_check_branch
    %43 = sbr.rel (0) target = $region41
  $region40: #{encoder_layer_forward.1} parent=0 // pred_region
    _
  $region41: #{encoder_layer_forward.1} parent=0 // pred_fallthru
    _
  // Predicated region
  $region42: #{encoder_layer_forward.1} parent=0 // pred_check
    _
  $region43: #{encoder_layer_forward.1} parent=0 // pred_check_branch
    %45 = sbr.rel (0) target = $region45
  $region44: #{encoder_layer_forward.1} parent=0 // pred_region
    _
  $region45: #{encoder_layer_forward.1} parent=0 // pred_fallthru
    _
  // Predicated region
  $region46: #{encoder_layer_forward.1} parent=0 // pred_check
    _
  $region47: #{encoder_layer_forward.1} parent=0 // pred_check_branch
    %47 = sbr.rel (0) target = $region49
  $region48: #{encoder_layer_forward.1} parent=0 // pred_region
    _
  $region49: #{encoder_layer_forward.1} parent=0 // pred_fallthru
    _
  // Predicated region
  $region50: #{encoder_layer_forward.1} parent=0 // pred_check
    _
  $region51: #{encoder_layer_forward.1} parent=0 // pred_check_branch
    %49 = sbr.rel (0) target = $region53
  $region52: #{encoder_layer_forward.1} parent=0 // pred_region
    _
  $region53: #{encoder_layer_forward.1} parent=0 // pred_fallthru
    _
  // Predicated region
  $region54: #{encoder_layer_forward.1} parent=0 // pred_check
    _
  $region55: #{encoder_layer_forward.1} parent=0 // pred_check_branch
    %51 = sbr.rel (0) target = $region57
  $region56: #{encoder_layer_forward.1} parent=0 // pred_region
    _
  $region57: #{encoder_layer_forward.1} parent=0 // pred_fallthru
    _
  // Predicated region
  $region58: #{encoder_layer_forward.1} parent=0 // pred_check
    _
  $region59: #{encoder_layer_forward.1} parent=0 // pred_check_branch
    %53 = sbr.rel (0) target = $region61
  $region60: #{encoder_layer_forward.1} parent=0 // pred_region
    _
  $region61: #{encoder_layer_forward.1} parent=0 // pred_fallthru
    _
  // Predicated region
  $region62: #{encoder_layer_forward.1} parent=0 // pred_check
    _
  $region63: #{encoder_layer_forward.1} parent=0 // pred_check_branch
    %55 = sbr.rel (0) target = $region65
  $region64: #{encoder_layer_forward.1} parent=0 // pred_region
    _
  $region65: #{encoder_layer_forward.1} parent=0 // pred_fallthru
    _
  // Predicated region
  $region66: #{encoder_layer_forward.1} parent=0 // pred_check
    _
  $region67: #{encoder_layer_forward.1} parent=0 // pred_check_branch
    %57 = sbr.rel (0) target = $region69
  $region68: #{encoder_layer_forward.1} parent=0 // pred_region
    _
  $region69: #{encoder_layer_forward.1} parent=0 // pred_fallthru
    _
  // Predicated region
  $region70: #{encoder_layer_forward.1} parent=0 // pred_check
    _
  $region71: #{encoder_layer_forward.1} parent=0 // pred_check_branch
    %59 = sbr.rel (0) target = $region73
  $region72: #{encoder_layer_forward.1} parent=0 // pred_region
    _
  $region73: #{encoder_layer_forward.1} parent=0 // pred_fallthru
    _
  // Predicated region
  $region74: #{encoder_layer_forward.1} parent=0 // pred_check
    _
  $region75: #{encoder_layer_forward.1} parent=0 // pred_check_branch
    %61 = sbr.rel (0) target = $region77
  $region76: #{encoder_layer_forward.1} parent=0 // pred_region
    _
  $region77: #{encoder_layer_forward.1} parent=0 // pred_fallthru
    _
  %v62 = vld [vmem:[%s0] sm:$0xff]
  %v63 = vld [vmem:[%s0 + $0x8] sm:$0xf]
  %v64 = vld [vmem:[%s1] sm:$0xff]
  %v65 = vld [vmem:[%s1 + $0x8] sm:$0xff]
  %v66 = vld [vmem:[%s1 + $0x10] sm:$0xff]
  %v67 = vld [vmem:[%s1 + $0x18] sm:$0xff]
  %v68 = vld [vmem:[%s2] sm:$0xff]
  %v69 = vld [vmem:[%s2 + $0x8] sm:$0xf]
  %v70 = vld [vmem:[%s3] sm:$0x1]
  %v71 = vld [vmem:[%s4] sm:$0x1]
  %vm72 = vcmask 261120
  %v73 = vsel %vm72, %v62, 0.0
  %74 = vadd.xlane.f32.xlu0 %v73
  %v75 = vpop.xlane.xlu0 %74
  %vm76 = vcmask 257024
  %v77 = vsel %vm76, %v63, 0.0
  %78 = vadd.xlane.f32.xlu0 %v77
  %v79 = vpop.xlane.xlu0 %78
  %v80 = vrcp.pop 32.0
  %v81 = vmul.f32 %v75, %v80
  %v82 = vmul.f32 %v79, %v80
  %v83 = vsub.f32 %v62, %v81
  %v84 = vsub.f32 %v63, %v82
  %v85 = vmul.f32 %v83, %v83
  %v86 = vmul.f32 %v84, %v84
  %v87 = vsel %vm72, %v85, 0.0
  %88 = vadd.xlane.f32.xlu0 %v87
  %v89 = vpop.xlane.xlu0 %88
  %v90 = vsel %vm76, %v86, 0.0
  %91 = vadd.xlane.f32.xlu0 %v90
  %v92 = vpop.xlane.xlu0 %91
  %v93 = vmul.f32 %v89, %v80
  %v94 = vmul.f32 %v92, %v80
  %v95 = vadd.f32 %v93, 1e-05
  %v96 = vadd.f32 %v94, 1e-05
  %v97 = vrsqrt.pop %v95
  %v98 = vrsqrt.pop %v96
  %v99 = vmul.f32 %v83, %v97
  %v100 = vmul.f32 %v84, %v98
  %v102 = vlaneseq
  %v103 = vshrl.u32 %v102, 7
  %v104 = vsub.s32 0, %v103
  %v105 = vrot.slane %v70, %v104
  %v107 = vmul.f32 %v99, %v105
  %v108 = vmul.f32 %v100, %v105
  %v110 = vlaneseq
  %v111 = vshrl.u32 %v110, 7
  %v112 = vsub.s32 0, %v111
  %v113 = vrot.slane %v71, %v112
  %v115 = vadd.f32 %v107, %v113
  %v116 = vadd.f32 %v108, %v113
  %v117 = vld [vmem:[%s5] sm:$0xff]
  %v118 = vld [vmem:[%s5 + $0x8] sm:$0xff]
  %v119 = vld [vmem:[%s5 + $0x10] sm:$0xff]
  %v120 = vld [vmem:[%s5 + $0x18] sm:$0xff]
  %v121 = vld [vmem:[%s6] sm:$0x1]
  %v123 = vlaneseq
  %v124 = vshrl.u32 %v123, 7
  %v125 = vsub.s32 0, %v124
  %v126 = vrot.slane %v121, %v125
  %v129 = vsel %vm72, %v115, 0
  %v132 = vsel %vm72, %v116, 0
  %134 = vmatprep.subr.mxu0 0.0
  %135 = vmatpush1.msra.mxu0 %v117
  %136 = vmatprep.subr.mxu0 0.0
  %137 = vmatpush1.msra.mxu0 %v118
  %138 = vmatprep.subr.mxu0 0.0
  %139 = vmatpush1.msra.mxu0 %v119
  %140 = vmatprep.subr.mxu0 0.0
  %141 = vmatpush1.msra.mxu0 %v120
  %142 = vmatprep.subr.mxu0 0.0
  %143 = vmatpush1.msra.mxu0 0.0
  %144 = vmatprep.subr.mxu0 0.0
  %145 = vmatpush1.msra.mxu0 0.0
  %146 = vmatprep.subr.mxu0 0.0
  %147 = vmatpush1.msra.mxu0 0.0
  %148 = vmatprep.subr.mxu0 0.0
  %149 = vmatpush1.msra.mxu0 0.0
  %150 = vmatprep.subr.mxu0 0.0
  %151 = vmatpush1.msra.mxu0 0.0
  %152 = vmatprep.subr.mxu0 0.0
  %153 = vmatpush1.msra.mxu0 0.0
  %154 = vmatprep.subr.mxu0 0.0
  %155 = vmatpush1.msra.mxu0 0.0
  %156 = vmatprep.subr.mxu0 0.0
  %157 = vmatpush1.msra.mxu0 0.0
  %158 = vmatprep.subr.mxu0 0.0
  %159 = vmatpush1.msra.mxu0 0.0
  %160 = vmatprep.subr.mxu0 0.0
  %161 = vmatpush1.msra.mxu0 0.0
  %162 = vmatprep.subr.mxu0 0.0
  %163 = vmatpush1.msra.mxu0 0.0
  %164 = vmatprep.subr.mxu0 0.0
  %165 = vmatpush1.msra.mxu0 0.0
  %166 = vmatprep.subr.mxu0 0.0
  %167 = vmatpush1.msra.mxu0 0.0
  %168 = vmatprep.subr.mxu0 0.0
  %169 = vmatpush1.msra.mxu0 0.0
  %170 = vmatprep.subr.mxu0 0.0
  %171 = vmatpush1.msra.mxu0 0.0
  %172 = vmatprep.subr.mxu0 0.0
  %173 = vmatpush1.msra.mxu0 0.0
  %174 = vmatprep.subr.mxu0 0.0
  %175 = vmatpush1.msra.mxu0 0.0
  %176 = vmatprep.subr.mxu0 0.0
  %177 = vmatpush1.msra.mxu0 0.0
  %178 = vmatprep.subr.mxu0 0.0
  %179 = vmatpush1.msra.mxu0 0.0
  %180 = vmatprep.subr.mxu0 0.0
  %181 = vmatpush1.msra.mxu0 0.0
  %182 = vmatprep.subr.mxu0 0.0
  %183 = vmatpush1.msra.mxu0 0.0
  %184 = vmatprep.subr.mxu0 0.0
  %185 = vmatpush1.msra.mxu0 0.0
  %186 = vmatprep.subr.mxu0 0.0
  %187 = vmatpush1.msra.mxu0 0.0
  %188 = vmatprep.subr.mxu0 0.0
  %189 = vmatpush1.msra.mxu0 0.0
  %190 = vmatprep.subr.mxu0 0.0
  %191 = vmatpush1.msra.mxu0 0.0
  %192 = vmatprep.subr.mxu0 0.0
  %193 = vmatpush1.msra.mxu0 0.0
  %194 = vmatprep.subr.mxu0 0.0
  %195 = vmatpush1.msra.mxu0 0.0
  %196 = vmatprep.subr.mxu0 0.0
  %197 = vmatpush1.msra.mxu0 0.0
  %198 = vmatprep.mubr.f32.mxu0 0.0
  %199 = vmatmul.mubr.f32.gmra.mrb[0].mxu0 %v129
  %v200 = vpop.f32.mrb[0].mxu0
  %v201 = vadd.f32 %v126, %v200
  %v202 = vpop.f32.mrb[0].mxu0
  %203 = vmatprep.mubr.f32.mxu0 0.0
  %204 = vmatmul.mubr.f32.gmra.mrb[0].mxu0 %v132
  %v205 = vpop.f32.mrb[0].mxu0
  %v206 = vadd.f32 %v126, %v205
  %v207 = vpop.f32.mrb[0].mxu0
  %208 = vdwg.mxu0
  %v209 = vld [vmem:[%s7] sm:$0xff]
  %v210 = vld [vmem:[%s7 + $0x8] sm:$0xff]
  %v211 = vld [vmem:[%s7 + $0x10] sm:$0xff]
  %v212 = vld [vmem:[%s7 + $0x18] sm:$0xff]
  %v213 = vld [vmem:[%s8] sm:$0x1]
  %v215 = vlaneseq
  %v216 = vshrl.u32 %v215, 7
  %v217 = vsub.s32 0, %v216
  %v218 = vrot.slane %v213, %v217
  %v221 = vsel %vm72, %v64, 0
  %v224 = vsel %vm72, %v65, 0
  %v227 = vsel %vm72, %v66, 0
  %v230 = vsel %vm72, %v67, 0
  %232 = vmatprep.subr.mxu0 0.0
  %233 = vmatpush1.msra.mxu0 %v209
  %234 = vmatprep.subr.mxu0 0.0
  %235 = vmatpush1.msra.mxu0 %v210
  %236 = vmatprep.subr.mxu0 0.0
  %237 = vmatpush1.msra.mxu0 %v211
  %238 = vmatprep.subr.mxu0 0.0
  %239 = vmatpush1.msra.mxu0 %v212
  %240 = vmatprep.subr.mxu0 0.0
  %241 = vmatpush1.msra.mxu0 0.0
  %242 = vmatprep.subr.mxu0 0.0
  %243 = vmatpush1.msra.mxu0 0.0
  %244 = vmatprep.subr.mxu0 0.0
  %245 = vmatpush1.msra.mxu0 0.0
  %246 = vmatprep.subr.mxu0 0.0
  %247 = vmatpush1.msra.mxu0 0.0
  %248 = vmatprep.subr.mxu0 0.0
  %249 = vmatpush1.msra.mxu0 0.0
  %250 = vmatprep.subr.mxu0 0.0
  %251 = vmatpush1.msra.mxu0 0.0
  %252 = vmatprep.subr.mxu0 0.0
  %253 = vmatpush1.msra.mxu0 0.0
  %254 = vmatprep.subr.mxu0 0.0
  %255 = vmatpush1.msra.mxu0 0.0
  %256 = vmatprep.subr.mxu0 0.0
  %257 = vmatpush1.msra.mxu0 0.0
  %258 = vmatprep.subr.mxu0 0.0
  %259 = vmatpush1.msra.mxu0 0.0
  %260 = vmatprep.subr.mxu0 0.0
  %261 = vmatpush1.msra.mxu0 0.0
  %262 = vmatprep.subr.mxu0 0.0
  %263 = vmatpush1.msra.mxu0 0.0
  %264 = vmatprep.subr.mxu0 0.0
  %265 = vmatpush1.msra.mxu0 0.0
  %266 = vmatprep.subr.mxu0 0.0
  %267 = vmatpush1.msra.mxu0 0.0
  %268 = vmatprep.subr.mxu0 0.0
  %269 = vmatpush1.msra.mxu0 0.0
  %270 = vmatprep.subr.mxu0 0.0
  %271 = vmatpush1.msra.mxu0 0.0
  %272 = vmatprep.subr.mxu0 0.0
  %273 = vmatpush1.msra.mxu0 0.0
  %274 = vmatprep.subr.mxu0 0.0
  %275 = vmatpush1.msra.mxu0 0.0
  %276 = vmatprep.subr.mxu0 0.0
  %277 = vmatpush1.msra.mxu0 0.0
  %278 = vmatprep.subr.mxu0 0.0
  %279 = vmatpush1.msra.mxu0 0.0
  %280 = vmatprep.subr.mxu0 0.0
  %281 = vmatpush1.msra.mxu0 0.0
  %282 = vmatprep.subr.mxu0 0.0
  %283 = vmatpush1.msra.mxu0 0.0
  %284 = vmatprep.subr.mxu0 0.0
  %285 = vmatpush1.msra.mxu0 0.0
  %286 = vmatprep.subr.mxu0 0.0
  %287 = vmatpush1.msra.mxu0 0.0
  %288 = vmatprep.subr.mxu0 0.0
  %289 = vmatpush1.msra.mxu0 0.0
  %290 = vmatprep.subr.mxu0 0.0
  %291 = vmatpush1.msra.mxu0 0.0
  %292 = vmatprep.subr.mxu0 0.0
  %293 = vmatpush1.msra.mxu0 0.0
  %294 = vmatprep.subr.mxu0 0.0
  %295 = vmatpush1.msra.mxu0 0.0
  %296 = vmatprep.mubr.f32.mxu0 0.0
  %297 = vmatmul.mubr.f32.gmra.mrb[0].mxu0 %v221
  %v298 = vpop.f32.mrb[0].mxu0
  %v299 = vadd.f32 %v218, %v298
  %v300 = vpop.f32.mrb[0].mxu0
  %301 = vmatprep.mubr.f32.mxu0 0.0
  %302 = vmatmul.mubr.f32.gmra.mrb[0].mxu0 %v224
  %v303 = vpop.f32.mrb[0].mxu0
  %v304 = vadd.f32 %v218, %v303
  %v305 = vpop.f32.mrb[0].mxu0
  %306 = vmatprep.mubr.f32.mxu0 0.0
  %307 = vmatmul.mubr.f32.gmra.mrb[0].mxu0 %v227
  %v308 = vpop.f32.mrb[0].mxu0
  %v309 = vadd.f32 %v218, %v308
  %v310 = vpop.f32.mrb[0].mxu0
  %311 = vmatprep.mubr.f32.mxu0 0.0
  %312 = vmatmul.mubr.f32.gmra.mrb[0].mxu0 %v230
  %v313 = vpop.f32.mrb[0].mxu0
  %v314 = vadd.f32 %v218, %v313
  %v315 = vpop.f32.mrb[0].mxu0
  %316 = vdwg.mxu0
  %v317 = vld [vmem:[%s9] sm:$0xff]
  %v318 = vld [vmem:[%s9 + $0x8] sm:$0xff]
  %v319 = vld [vmem:[%s9 + $0x10] sm:$0xff]
  %v320 = vld [vmem:[%s9 + $0x18] sm:$0xff]
  %v321 = vld [vmem:[%s10] sm:$0x1]
  %v323 = vlaneseq
  %v324 = vshrl.u32 %v323, 7
  %v325 = vsub.s32 0, %v324
  %v326 = vrot.slane %v321, %v325
  %328 = vmatprep.subr.mxu0 0.0
  %329 = vmatpush1.msra.mxu0 %v317
  %330 = vmatprep.subr.mxu0 0.0
  %331 = vmatpush1.msra.mxu0 %v318
  %332 = vmatprep.subr.mxu0 0.0
  %333 = vmatpush1.msra.mxu0 %v319
  %334 = vmatprep.subr.mxu0 0.0
  %335 = vmatpush1.msra.mxu0 %v320
  %336 = vmatprep.subr.mxu0 0.0
  %337 = vmatpush1.msra.mxu0 0.0
  %338 = vmatprep.subr.mxu0 0.0
  %339 = vmatpush1.msra.mxu0 0.0
  %340 = vmatprep.subr.mxu0 0.0
  %341 = vmatpush1.msra.mxu0 0.0
  %342 = vmatprep.subr.mxu0 0.0
  %343 = vmatpush1.msra.mxu0 0.0
  %344 = vmatprep.subr.mxu0 0.0
  %345 = vmatpush1.msra.mxu0 0.0
  %346 = vmatprep.subr.mxu0 0.0
  %347 = vmatpush1.msra.mxu0 0.0
  %348 = vmatprep.subr.mxu0 0.0
  %349 = vmatpush1.msra.mxu0 0.0
  %350 = vmatprep.subr.mxu0 0.0
  %351 = vmatpush1.msra.mxu0 0.0
  %352 = vmatprep.subr.mxu0 0.0
  %353 = vmatpush1.msra.mxu0 0.0
  %354 = vmatprep.subr.mxu0 0.0
  %355 = vmatpush1.msra.mxu0 0.0
  %356 = vmatprep.subr.mxu0 0.0
  %357 = vmatpush1.msra.mxu0 0.0
  %358 = vmatprep.subr.mxu0 0.0
  %359 = vmatpush1.msra.mxu0 0.0
  %360 = vmatprep.subr.mxu0 0.0
  %361 = vmatpush1.msra.mxu0 0.0
  %362 = vmatprep.subr.mxu0 0.0
  %363 = vmatpush1.msra.mxu0 0.0
  %364 = vmatprep.subr.mxu0 0.0
  %365 = vmatpush1.msra.mxu0 0.0
  %366 = vmatprep.subr.mxu0 0.0
  %367 = vmatpush1.msra.mxu0 0.0
  %368 = vmatprep.subr.mxu0 0.0
  %369 = vmatpush1.msra.mxu0 0.0
  %370 = vmatprep.subr.mxu0 0.0
  %371 = vmatpush1.msra.mxu0 0.0
  %372 = vmatprep.subr.mxu0 0.0
  %373 = vmatpush1.msra.mxu0 0.0
  %374 = vmatprep.subr.mxu0 0.0
  %375 = vmatpush1.msra.mxu0 0.0
  %376 = vmatprep.subr.mxu0 0.0
  %377 = vmatpush1.msra.mxu0 0.0
  %378 = vmatprep.subr.mxu0 0.0
  %379 = vmatpush1.msra.mxu0 0.0
  %380 = vmatprep.subr.mxu0 0.0
  %381 = vmatpush1.msra.mxu0 0.0
  %382 = vmatprep.subr.mxu0 0.0
  %383 = vmatpush1.msra.mxu0 0.0
  %384 = vmatprep.subr.mxu0 0.0
  %385 = vmatpush1.msra.mxu0 0.0
  %386 = vmatprep.subr.mxu0 0.0
  %387 = vmatpush1.msra.mxu0 0.0
  %388 = vmatprep.subr.mxu0 0.0
  %389 = vmatpush1.msra.mxu0 0.0
  %390 = vmatprep.subr.mxu0 0.0
  %391 = vmatpush1.msra.mxu0 0.0
  %392 = vmatprep.mubr.f32.mxu0 0.0
  %393 = vmatmul.mubr.f32.gmra.mrb[0].mxu0 %v221
  %v394 = vpop.f32.mrb[0].mxu0
  %v395 = vadd.f32 %v326, %v394
  %v396 = vpop.f32.mrb[0].mxu0
  %397 = vmatprep.mubr.f32.mxu0 0.0
  %398 = vmatmul.mubr.f32.gmra.mrb[0].mxu0 %v224
  %v399 = vpop.f32.mrb[0].mxu0
  %v400 = vadd.f32 %v326, %v399
  %v401 = vpop.f32.mrb[0].mxu0
  %402 = vmatprep.mubr.f32.mxu0 0.0
  %403 = vmatmul.mubr.f32.gmra.mrb[0].mxu0 %v227
  %v404 = vpop.f32.mrb[0].mxu0
  %v405 = vadd.f32 %v326, %v404
  %v406 = vpop.f32.mrb[0].mxu0
  %407 = vmatprep.mubr.f32.mxu0 0.0
  %408 = vmatmul.mubr.f32.gmra.mrb[0].mxu0 %v230
  %v409 = vpop.f32.mrb[0].mxu0
  %v410 = vadd.f32 %v326, %v409
  %v411 = vpop.f32.mrb[0].mxu0
  %412 = vdwg.mxu0
  %vm413 = vcmask 64512
  %v415 = vsel %vm413, %v201, 0
  %v418 = vsel %vm413, %v206, 0
  %v421 = vsel %vm413, %v299, 0
  %v424 = vsel %vm413, %v304, 0
  %v427 = vsel %vm413, %v309, 0
  %v430 = vsel %vm413, %v314, 0
  %432 = vmatprep.subr.mxu0 0.0
  %433 = vmatpush1.xpose.msra.mxu0 %v421
  %434 = vmatprep.subr.mxu0 0.0
  %435 = vmatpush1.xpose.msra.mxu0 %v424
  %436 = vmatprep.subr.mxu0 0.0
  %437 = vmatpush1.xpose.msra.mxu0 %v427
  %438 = vmatprep.subr.mxu0 0.0
  %439 = vmatpush1.xpose.msra.mxu0 %v430
  %440 = vmatprep.subr.mxu0 0.0
  %441 = vmatpush1.xpose.msra.mxu0 0.0
  %442 = vmatprep.subr.mxu0 0.0
  %443 = vmatpush1.xpose.msra.mxu0 0.0
  %444 = vmatprep.subr.mxu0 0.0
  %445 = vmatpush1.xpose.msra.mxu0 0.0
  %446 = vmatprep.subr.mxu0 0.0
  %447 = vmatpush1.xpose.msra.mxu0 0.0
  %448 = vmatprep.subr.mxu0 0.0
  %449 = vmatpush1.xpose.msra.mxu0 0.0
  %450 = vmatprep.subr.mxu0 0.0
  %451 = vmatpush1.xpose.msra.mxu0 0.0
  %452 = vmatprep.subr.mxu0 0.0
  %453 = vmatpush1.xpose.msra.mxu0 0.0
  %454 = vmatprep.subr.mxu0 0.0
  %455 = vmatpush1.xpose.msra.mxu0 0.0
  %456 = vmatprep.subr.mxu0 0.0
  %457 = vmatpush1.xpose.msra.mxu0 0.0
  %458 = vmatprep.subr.mxu0 0.0
  %459 = vmatpush1.xpose.msra.mxu0 0.0
  %460 = vmatprep.subr.mxu0 0.0
  %461 = vmatpush1.xpose.msra.mxu0 0.0
  %462 = vmatprep.subr.mxu0 0.0
  %463 = vmatpush1.xpose.msra.mxu0 0.0
  %464 = vmatprep.subr.mxu0 0.0
  %465 = vmatpush1.xpose.msra.mxu0 0.0
  %466 = vmatprep.subr.mxu0 0.0
  %467 = vmatpush1.xpose.msra.mxu0 0.0
  %468 = vmatprep.subr.mxu0 0.0
  %469 = vmatpush1.xpose.msra.mxu0 0.0
  %470 = vmatprep.subr.mxu0 0.0
  %471 = vmatpush1.xpose.msra.mxu0 0.0
  %472 = vmatprep.subr.mxu0 0.0
  %473 = vmatpush1.xpose.msra.mxu0 0.0
  %474 = vmatprep.subr.mxu0 0.0
  %475 = vmatpush1.xpose.msra.mxu0 0.0
  %476 = vmatprep.subr.mxu0 0.0
  %477 = vmatpush1.xpose.msra.mxu0 0.0
  %478 = vmatprep.subr.mxu0 0.0
  %479 = vmatpush1.xpose.msra.mxu0 0.0
  %480 = vmatprep.subr.mxu0 0.0
  %481 = vmatpush1.xpose.msra.mxu0 0.0
  %482 = vmatprep.subr.mxu0 0.0
  %483 = vmatpush1.xpose.msra.mxu0 0.0
  %484 = vmatprep.subr.mxu0 0.0
  %485 = vmatpush1.xpose.msra.mxu0 0.0
  %486 = vmatprep.subr.mxu0 0.0
  %487 = vmatpush1.xpose.msra.mxu0 0.0
  %488 = vmatprep.subr.mxu0 0.0
  %489 = vmatpush1.xpose.msra.mxu0 0.0
  %490 = vmatprep.subr.mxu0 0.0
  %491 = vmatpush1.xpose.msra.mxu0 0.0
  %492 = vmatprep.subr.mxu0 0.0
  %493 = vmatpush1.xpose.msra.mxu0 0.0
  %494 = vmatprep.subr.mxu0 0.0
  %495 = vmatpush1.xpose.msra.mxu0 0.0
  %496 = vmatprep.mubr.f32.mxu0 0.0
  %497 = vmatmul.mubr.f32.gmra.mrb[0].mxu0 %v415
  %v498 = vpop.f32.mrb[0].mxu0
  %v499 = vadd.f32 0.0, %v498
  %v500 = vpop.f32.mrb[0].mxu0
  %501 = vmatprep.mubr.f32.mxu0 0.0
  %502 = vmatmul.mubr.f32.gmra.mrb[0].mxu0 %v418
  %v503 = vpop.f32.mrb[0].mxu0
  %v504 = vadd.f32 0.0, %v503
  %v505 = vpop.f32.mrb[0].mxu0
  %506 = vdwg.mxu0
  %v507 = vmul.f32 %v499, 0.35355338
  %v508 = vmul.f32 %v504, 0.35355338
  %v509 = vadd.f32 %v507, %v68
  %v510 = vadd.f32 %v508, %v69
  %v511 = vsel %vm72, %v509, -inf
  %512 = vmax.xlane.f32.xlu0 %v511
  %v513 = vpop.xlane.xlu0 %512
  %v514 = vsel %vm76, %v510, -inf
  %515 = vmax.xlane.f32.xlu0 %v514
  %v516 = vpop.xlane.xlu0 %515
  %v517 = vsub.f32 %v509, %v513
  %v518 = vsub.f32 %v510, %v516
  %v519 = vmul.f32 %v517, 1.442695
  %v520 = vpow.pop %v519
  %v521 = vmul.f32 %v518, 1.442695
  %v522 = vpow.pop %v521
  %v523 = vsel %vm72, %v520, 0.0
  %524 = vadd.xlane.f32.xlu0 %v523
  %v525 = vpop.xlane.xlu0 %524
  %v526 = vsel %vm76, %v522, 0.0
  %527 = vadd.xlane.f32.xlu0 %v526
  %v528 = vpop.xlane.xlu0 %527
  %v529 = vrcp.pop %v525
  %v530 = vrcp.pop %v528
  %v531 = vmul.f32 %v520, %v529
  %v532 = vmul.f32 %v522, %v530
  %v534 = vsel %vm72, %v531, 0
  %v537 = vsel %vm72, %v532, 0
  %539 = vmatprep.subr.mxu0 0.0
  %540 = vmatpush1.msra.mxu0 %v395
  %541 = vmatprep.subr.mxu0 0.0
  %542 = vmatpush1.msra.mxu0 %v400
  %543 = vmatprep.subr.mxu0 0.0
  %544 = vmatpush1.msra.mxu0 %v405
  %545 = vmatprep.subr.mxu0 0.0
  %546 = vmatpush1.msra.mxu0 %v410
  %547 = vmatprep.subr.mxu0 0.0
  %548 = vmatpush1.msra.mxu0 0.0
  %549 = vmatprep.subr.mxu0 0.0
  %550 = vmatpush1.msra.mxu0 0.0
  %551 = vmatprep.subr.mxu0 0.0
  %552 = vmatpush1.msra.mxu0 0.0
  %553 = vmatprep.subr.mxu0 0.0
  %554 = vmatpush1.msra.mxu0 0.0
  %555 = vmatprep.subr.mxu0 0.0
  %556 = vmatpush1.msra.mxu0 0.0
  %557 = vmatprep.subr.mxu0 0.0
  %558 = vmatpush1.msra.mxu0 0.0
  %559 = vmatprep.subr.mxu0 0.0
  %560 = vmatpush1.msra.mxu0 0.0
  %561 = vmatprep.subr.mxu0 0.0
  %562 = vmatpush1.msra.mxu0 0.0
  %563 = vmatprep.subr.mxu0 0.0
  %564 = vmatpush1.msra.mxu0 0.0
  %565 = vmatprep.subr.mxu0 0.0
  %566 = vmatpush1.msra.mxu0 0.0
  %567 = vmatprep.subr.mxu0 0.0
  %568 = vmatpush1.msra.mxu0 0.0
  %569 = vmatprep.subr.mxu0 0.0
  %570 = vmatpush1.msra.mxu0 0.0
  %571 = vmatprep.subr.mxu0 0.0
  %572 = vmatpush1.msra.mxu0 0.0
  %573 = vmatprep.subr.mxu0 0.0
  %574 = vmatpush1.msra.mxu0 0.0
  %575 = vmatprep.subr.mxu0 0.0
  %576 = vmatpush1.msra.mxu0 0.0
  %577 = vmatprep.subr.mxu0 0.0
  %578 = vmatpush1.msra.mxu0 0.0
  %579 = vmatprep.subr.mxu0 0.0
  %580 = vmatpush1.msra.mxu0 0.0
  %581 = vmatprep.subr.mxu0 0.0
  %582 = vmatpush1.msra.mxu0 0.0
  %583 = vmatprep.subr.mxu0 0.0
  %584 = vmatpush1.msra.mxu0 0.0
  %585 = vmatprep.subr.mxu0 0.0
  %586 = vmatpush1.msra.mxu0 0.0
  %587 = vmatprep.subr.mxu0 0.0
  %588 = vmatpush1.msra.mxu0 0.0
  %589 = vmatprep.subr.mxu0 0.0
  %590 = vmatpush1.msra.mxu0 0.0
  %591 = vmatprep.subr.mxu0 0.0
  %592 = vmatpush1.msra.mxu0 0.0
  %593 = vmatprep.subr.mxu0 0.0
  %594 = vmatpush1.msra.mxu0 0.0
  %595 = vmatprep.subr.mxu0 0.0
  %596 = vmatpush1.msra.mxu0 0.0
  %597 = vmatprep.subr.mxu0 0.0
  %598 = vmatpush1.msra.mxu0 0.0
  %599 = vmatprep.subr.mxu0 0.0
  %600 = vmatpush1.msra.mxu0 0.0
  %601 = vmatprep.subr.mxu0 0.0
  %602 = vmatpush1.msra.mxu0 0.0
  %603 = vmatprep.mubr.f32.mxu0 0.0
  %604 = vmatmul.mubr.f32.gmra.mrb[0].mxu0 %v534
  %v605 = vpop.f32.mrb[0].mxu0
  %v606 = vadd.f32 0.0, %v605
  %v607 = vpop.f32.mrb[0].mxu0
  %608 = vmatprep.mubr.f32.mxu0 0.0
  %609 = vmatmul.mubr.f32.gmra.mrb[0].mxu0 %v537
  %v610 = vpop.f32.mrb[0].mxu0
  %v611 = vadd.f32 0.0, %v610
  %v612 = vpop.f32.mrb[0].mxu0
  %613 = vdwg.mxu0
  %v614 = vld [vmem:[%s11] sm:$0xff]
  %615 = vrot.lane.b32.xlu0 %v201, 120
  %v616 = vpop.permute.xlu0 %615
  %617 = vrot.lane.b32.xlu0 %v206, 120
  %v618 = vpop.permute.xlu0 %617
  %619 = vrot.lane.b32.xlu0 %v299, 120
  %v620 = vpop.permute.xlu0 %619
  %621 = vrot.lane.b32.xlu0 %v304, 120
  %v622 = vpop.permute.xlu0 %621
  %623 = vrot.lane.b32.xlu0 %v309, 120
  %v624 = vpop.permute.xlu0 %623
  %625 = vrot.lane.b32.xlu0 %v314, 120
  %v626 = vpop.permute.xlu0 %625
  %v627 = vsel %vm413, %v616, 0
  %v629 = vsel %vm413, %v618, 0
  %v631 = vsel %vm413, %v620, 0
  %v633 = vsel %vm413, %v622, 0
  %v635 = vsel %vm413, %v624, 0
  %v637 = vsel %vm413, %v626, 0
  %639 = vmatprep.subr.mxu0 0.0
  %640 = vmatpush1.xpose.msra.mxu0 %v631
  %641 = vmatprep.subr.mxu0 0.0
  %642 = vmatpush1.xpose.msra.mxu0 %v633
  %643 = vmatprep.subr.mxu0 0.0
  %644 = vmatpush1.xpose.msra.mxu0 %v635
  %645 = vmatprep.subr.mxu0 0.0
  %646 = vmatpush1.xpose.msra.mxu0 %v637
  %647 = vmatprep.subr.mxu0 0.0
  %648 = vmatpush1.xpose.msra.mxu0 0.0
  %649 = vmatprep.subr.mxu0 0.0
  %650 = vmatpush1.xpose.msra.mxu0 0.0
  %651 = vmatprep.subr.mxu0 0.0
  %652 = vmatpush1.xpose.msra.mxu0 0.0
  %653 = vmatprep.subr.mxu0 0.0
  %654 = vmatpush1.xpose.msra.mxu0 0.0
  %655 = vmatprep.subr.mxu0 0.0
  %656 = vmatpush1.xpose.msra.mxu0 0.0
  %657 = vmatprep.subr.mxu0 0.0
  %658 = vmatpush1.xpose.msra.mxu0 0.0
  %659 = vmatprep.subr.mxu0 0.0
  %660 = vmatpush1.xpose.msra.mxu0 0.0
  %661 = vmatprep.subr.mxu0 0.0
  %662 = vmatpush1.xpose.msra.mxu0 0.0
  %663 = vmatprep.subr.mxu0 0.0
  %664 = vmatpush1.xpose.msra.mxu0 0.0
  %665 = vmatprep.subr.mxu0 0.0
  %666 = vmatpush1.xpose.msra.mxu0 0.0
  %667 = vmatprep.subr.mxu0 0.0
  %668 = vmatpush1.xpose.msra.mxu0 0.0
  %669 = vmatprep.subr.mxu0 0.0
  %670 = vmatpush1.xpose.msra.mxu0 0.0
  %671 = vmatprep.subr.mxu0 0.0
  %672 = vmatpush1.xpose.msra.mxu0 0.0
  %673 = vmatprep.subr.mxu0 0.0
  %674 = vmatpush1.xpose.msra.mxu0 0.0
  %675 = vmatprep.subr.mxu0 0.0
  %676 = vmatpush1.xpose.msra.mxu0 0.0
  %677 = vmatprep.subr.mxu0 0.0
  %678 = vmatpush1.xpose.msra.mxu0 0.0
  %679 = vmatprep.subr.mxu0 0.0
  %680 = vmatpush1.xpose.msra.mxu0 0.0
  %681 = vmatprep.subr.mxu0 0.0
  %682 = vmatpush1.xpose.msra.mxu0 0.0
  %683 = vmatprep.subr.mxu0 0.0
  %684 = vmatpush1.xpose.msra.mxu0 0.0
  %685 = vmatprep.subr.mxu0 0.0
  %686 = vmatpush1.xpose.msra.mxu0 0.0
  %687 = vmatprep.subr.mxu0 0.0
  %688 = vmatpush1.xpose.msra.mxu0 0.0
  %689 = vmatprep.subr.mxu0 0.0
  %690 = vmatpush1.xpose.msra.mxu0 0.0
  %691 = vmatprep.subr.mxu0 0.0
  %692 = vmatpush1.xpose.msra.mxu0 0.0
  %693 = vmatprep.subr.mxu0 0.0
  %694 = vmatpush1.xpose.msra.mxu0 0.0
  %695 = vmatprep.subr.mxu0 0.0
  %696 = vmatpush1.xpose.msra.mxu0 0.0
  %697 = vmatprep.subr.mxu0 0.0
  %698 = vmatpush1.xpose.msra.mxu0 0.0
  %699 = vmatprep.subr.mxu0 0.0
  %700 = vmatpush1.xpose.msra.mxu0 0.0
  %701 = vmatprep.subr.mxu0 0.0
  %702 = vmatpush1.xpose.msra.mxu0 0.0
  %703 = vmatprep.mubr.f32.mxu0 0.0
  %704 = vmatmul.mubr.f32.gmra.mrb[0].mxu0 %v627
  %v705 = vpop.f32.mrb[0].mxu0
  %v706 = vadd.f32 0.0, %v705
  %v707 = vpop.f32.mrb[0].mxu0
  %708 = vmatprep.mubr.f32.mxu0 0.0
  %709 = vmatmul.mubr.f32.gmra.mrb[0].mxu0 %v629
  %v710 = vpop.f32.mrb[0].mxu0
  %v711 = vadd.f32 0.0, %v710
  %v712 = vpop.f32.mrb[0].mxu0
  %713 = vdwg.mxu0
  %v714 = vmul.f32 %v706, 0.35355338
  %v715 = vmul.f32 %v711, 0.35355338
  %v716 = vadd.f32 %v714, %v68
  %v717 = vadd.f32 %v715, %v69
  %v718 = vsel %vm72, %v716, -inf
  %719 = vmax.xlane.f32.xlu0 %v718
  %v720 = vpop.xlane.xlu0 %719
  %v721 = vsel %vm76, %v717, -inf
  %722 = vmax.xlane.f32.xlu0 %v721
  %v723 = vpop.xlane.xlu0 %722
  %v724 = vsub.f32 %v716, %v720
  %v725 = vsub.f32 %v717, %v723
  %v726 = vmul.f32 %v724, 1.442695
  %v727 = vpow.pop %v726
  %v728 = vmul.f32 %v725, 1.442695
  %v729 = vpow.pop %v728
  %v730 = vsel %vm72, %v727, 0.0
  %731 = vadd.xlane.f32.xlu0 %v730
  %v732 = vpop.xlane.xlu0 %731
  %v733 = vsel %vm76, %v729, 0.0
  %734 = vadd.xlane.f32.xlu0 %v733
  %v735 = vpop.xlane.xlu0 %734
  %v736 = vrcp.pop %v732
  %v737 = vrcp.pop %v735
  %v738 = vmul.f32 %v727, %v736
  %v739 = vmul.f32 %v729, %v737
  %744 = vrot.lane.b32.xlu0 %v395, 120
  %v745 = vpop.permute.xlu0 %744
  %746 = vrot.lane.b32.xlu0 %v400, 120
  %v747 = vpop.permute.xlu0 %746
  %748 = vrot.lane.b32.xlu0 %v405, 120
  %v749 = vpop.permute.xlu0 %748
  %750 = vrot.lane.b32.xlu0 %v410, 120
  %v751 = vpop.permute.xlu0 %750
  %v757 = vsel %vm72, %v738, 0
  %v760 = vsel %vm72, %v739, 0
  %762 = vmatprep.subr.mxu0 0.0
  %763 = vmatpush1.msra.mxu0 %v745
  %764 = vmatprep.subr.mxu0 0.0
  %765 = vmatpush1.msra.mxu0 %v747
  %766 = vmatprep.subr.mxu0 0.0
  %767 = vmatpush1.msra.mxu0 %v749
  %768 = vmatprep.subr.mxu0 0.0
  %769 = vmatpush1.msra.mxu0 %v751
  %770 = vmatprep.subr.mxu0 0.0
  %771 = vmatpush1.msra.mxu0 0.0
  %772 = vmatprep.subr.mxu0 0.0
  %773 = vmatpush1.msra.mxu0 0.0
  %774 = vmatprep.subr.mxu0 0.0
  %775 = vmatpush1.msra.mxu0 0.0
  %776 = vmatprep.subr.mxu0 0.0
  %777 = vmatpush1.msra.mxu0 0.0
  %778 = vmatprep.subr.mxu0 0.0
  %779 = vmatpush1.msra.mxu0 0.0
  %780 = vmatprep.subr.mxu0 0.0
  %781 = vmatpush1.msra.mxu0 0.0
  %782 = vmatprep.subr.mxu0 0.0
  %783 = vmatpush1.msra.mxu0 0.0
  %784 = vmatprep.subr.mxu0 0.0
  %785 = vmatpush1.msra.mxu0 0.0
  %786 = vmatprep.subr.mxu0 0.0
  %787 = vmatpush1.msra.mxu0 0.0
  %788 = vmatprep.subr.mxu0 0.0
  %789 = vmatpush1.msra.mxu0 0.0
  %790 = vmatprep.subr.mxu0 0.0
  %791 = vmatpush1.msra.mxu0 0.0
  %792 = vmatprep.subr.mxu0 0.0
  %793 = vmatpush1.msra.mxu0 0.0
  %794 = vmatprep.subr.mxu0 0.0
  %795 = vmatpush1.msra.mxu0 0.0
  %796 = vmatprep.subr.mxu0 0.0
  %797 = vmatpush1.msra.mxu0 0.0
  %798 = vmatprep.subr.mxu0 0.0
  %799 = vmatpush1.msra.mxu0 0.0
  %800 = vmatprep.subr.mxu0 0.0
  %801 = vmatpush1.msra.mxu0 0.0
  %802 = vmatprep.subr.mxu0 0.0
  %803 = vmatpush1.msra.mxu0 0.0
  %804 = vmatprep.subr.mxu0 0.0
  %805 = vmatpush1.msra.mxu0 0.0
  %806 = vmatprep.subr.mxu0 0.0
  %807 = vmatpush1.msra.mxu0 0.0
  %808 = vmatprep.subr.mxu0 0.0
  %809 = vmatpush1.msra.mxu0 0.0
  %810 = vmatprep.subr.mxu0 0.0
  %811 = vmatpush1.msra.mxu0 0.0
  %812 = vmatprep.subr.mxu0 0.0
  %813 = vmatpush1.msra.mxu0 0.0
  %814 = vmatprep.subr.mxu0 0.0
  %815 = vmatpush1.msra.mxu0 0.0
  %816 = vmatprep.subr.mxu0 0.0
  %817 = vmatpush1.msra.mxu0 0.0
  %818 = vmatprep.subr.mxu0 0.0
  %819 = vmatpush1.msra.mxu0 0.0
  %820 = vmatprep.subr.mxu0 0.0
  %821 = vmatpush1.msra.mxu0 0.0
  %822 = vmatprep.subr.mxu0 0.0
  %823 = vmatpush1.msra.mxu0 0.0
  %824 = vmatprep.subr.mxu0 0.0
  %825 = vmatpush1.msra.mxu0 0.0
  %826 = vmatprep.mubr.f32.mxu0 0.0
  %827 = vmatmul.mubr.f32.gmra.mrb[0].mxu0 %v757
  %v828 = vpop.f32.mrb[0].mxu0
  %v829 = vadd.f32 0.0, %v828
  %v830 = vpop.f32.mrb[0].mxu0
  %831 = vmatprep.mubr.f32.mxu0 0.0
  %832 = vmatmul.mubr.f32.gmra.mrb[0].mxu0 %v760
  %v833 = vpop.f32.mrb[0].mxu0
  %v834 = vadd.f32 0.0, %v833
  %v835 = vpop.f32.mrb[0].mxu0
  %836 = vdwg.mxu0
  %v837 = vld [vmem:[%s11 + $0x8] sm:$0xff]
  %v839 = vsel %vm413, %v829, 0
  %v842 = vsel %vm413, %v834, 0
  %844 = vmatprep.subr.mxu0 0.0
  %845 = vmatpush1.msra.mxu0 %v837
  %846 = vmatprep.subr.mxu0 0.0
  %847 = vmatpush1.msra.mxu0 0.0
  %848 = vmatprep.subr.mxu0 0.0
  %849 = vmatpush1.msra.mxu0 0.0
  %850 = vmatprep.subr.mxu0 0.0
  %851 = vmatpush1.msra.mxu0 0.0
  %852 = vmatprep.subr.mxu0 0.0
  %853 = vmatpush1.msra.mxu0 0.0
  %854 = vmatprep.subr.mxu0 0.0
  %855 = vmatpush1.msra.mxu0 0.0
  %856 = vmatprep.subr.mxu0 0.0
  %857 = vmatpush1.msra.mxu0 0.0
  %858 = vmatprep.subr.mxu0 0.0
  %859 = vmatpush1.msra.mxu0 0.0
  %860 = vmatprep.subr.mxu0 0.0
  %861 = vmatpush1.msra.mxu0 0.0
  %862 = vmatprep.subr.mxu0 0.0
  %863 = vmatpush1.msra.mxu0 0.0
  %864 = vmatprep.subr.mxu0 0.0
  %865 = vmatpush1.msra.mxu0 0.0
  %866 = vmatprep.subr.mxu0 0.0
  %867 = vmatpush1.msra.mxu0 0.0
  %868 = vmatprep.subr.mxu0 0.0
  %869 = vmatpush1.msra.mxu0 0.0
  %870 = vmatprep.subr.mxu0 0.0
  %871 = vmatpush1.msra.mxu0 0.0
  %872 = vmatprep.subr.mxu0 0.0
  %873 = vmatpush1.msra.mxu0 0.0
  %874 = vmatprep.subr.mxu0 0.0
  %875 = vmatpush1.msra.mxu0 0.0
  %876 = vmatprep.subr.mxu0 0.0
  %877 = vmatpush1.msra.mxu0 0.0
  %878 = vmatprep.subr.mxu0 0.0
  %879 = vmatpush1.msra.mxu0 0.0
  %880 = vmatprep.subr.mxu0 0.0
  %881 = vmatpush1.msra.mxu0 0.0
  %882 = vmatprep.subr.mxu0 0.0
  %883 = vmatpush1.msra.mxu0 0.0
  %884 = vmatprep.subr.mxu0 0.0
  %885 = vmatpush1.msra.mxu0 0.0
  %886 = vmatprep.subr.mxu0 0.0
  %887 = vmatpush1.msra.mxu0 0.0
  %888 = vmatprep.subr.mxu0 0.0
  %889 = vmatpush1.msra.mxu0 0.0
  %890 = vmatprep.subr.mxu0 0.0
  %891 = vmatpush1.msra.mxu0 0.0
  %892 = vmatprep.subr.mxu0 0.0
  %893 = vmatpush1.msra.mxu0 0.0
  %894 = vmatprep.subr.mxu0 0.0
  %895 = vmatpush1.msra.mxu0 0.0
  %896 = vmatprep.subr.mxu0 0.0
  %897 = vmatpush1.msra.mxu0 0.0
  %898 = vmatprep.subr.mxu0 0.0
  %899 = vmatpush1.msra.mxu0 0.0
  %900 = vmatprep.subr.mxu0 0.0
  %901 = vmatpush1.msra.mxu0 0.0
  %902 = vmatprep.subr.mxu0 0.0
  %903 = vmatpush1.msra.mxu0 0.0
  %904 = vmatprep.subr.mxu0 0.0
  %905 = vmatpush1.msra.mxu0 0.0
  %906 = vmatprep.subr.mxu0 0.0
  %907 = vmatpush1.msra.mxu0 0.0
  %908 = vmatprep.mubr.f32.mxu0 0.0
  %909 = vmatmul.mubr.f32.gmra.mrb[0].mxu0 %v839
  %v910 = vpop.f32.mrb[0].mxu0
  %v911 = vadd.f32 0.0, %v910
  %v912 = vpop.f32.mrb[0].mxu0
  %913 = vmatprep.mubr.f32.mxu0 0.0
  %914 = vmatmul.mubr.f32.gmra.mrb[0].mxu0 %v842
  %v915 = vpop.f32.mrb[0].mxu0
  %v916 = vadd.f32 0.0, %v915
  %v917 = vpop.f32.mrb[0].mxu0
  %918 = vdwg.mxu0
  %v920 = vsel %vm413, %v606, 0
  %v923 = vsel %vm413, %v611, 0
  %925 = vmatprep.subr.mxu0 0.0
  %926 = vmatpush1.msra.mxu0 %v614
  %927 = vmatprep.subr.mxu0 0.0
  %928 = vmatpush1.msra.mxu0 0.0
  %929 = vmatprep.subr.mxu0 0.0
  %930 = vmatpush1.msra.mxu0 0.0
  %931 = vmatprep.subr.mxu0 0.0
  %932 = vmatpush1.msra.mxu0 0.0
  %933 = vmatprep.subr.mxu0 0.0
  %934 = vmatpush1.msra.mxu0 0.0
  %935 = vmatprep.subr.mxu0 0.0
  %936 = vmatpush1.msra.mxu0 0.0
  %937 = vmatprep.subr.mxu0 0.0
  %938 = vmatpush1.msra.mxu0 0.0
  %939 = vmatprep.subr.mxu0 0.0
  %940 = vmatpush1.msra.mxu0 0.0
  %941 = vmatprep.subr.mxu0 0.0
  %942 = vmatpush1.msra.mxu0 0.0
  %943 = vmatprep.subr.mxu0 0.0
  %944 = vmatpush1.msra.mxu0 0.0
  %945 = vmatprep.subr.mxu0 0.0
  %946 = vmatpush1.msra.mxu0 0.0
  %947 = vmatprep.subr.mxu0 0.0
  %948 = vmatpush1.msra.mxu0 0.0
  %949 = vmatprep.subr.mxu0 0.0
  %950 = vmatpush1.msra.mxu0 0.0
  %951 = vmatprep.subr.mxu0 0.0
  %952 = vmatpush1.msra.mxu0 0.0
  %953 = vmatprep.subr.mxu0 0.0
  %954 = vmatpush1.msra.mxu0 0.0
  %955 = vmatprep.subr.mxu0 0.0
  %956 = vmatpush1.msra.mxu0 0.0
  %957 = vmatprep.subr.mxu0 0.0
  %958 = vmatpush1.msra.mxu0 0.0
  %959 = vmatprep.subr.mxu0 0.0
  %960 = vmatpush1.msra.mxu0 0.0
  %961 = vmatprep.subr.mxu0 0.0
  %962 = vmatpush1.msra.mxu0 0.0
  %963 = vmatprep.subr.mxu0 0.0
  %964 = vmatpush1.msra.mxu0 0.0
  %965 = vmatprep.subr.mxu0 0.0
  %966 = vmatpush1.msra.mxu0 0.0
  %967 = vmatprep.subr.mxu0 0.0
  %968 = vmatpush1.msra.mxu0 0.0
  %969 = vmatprep.subr.mxu0 0.0
  %970 = vmatpush1.msra.mxu0 0.0
  %971 = vmatprep.subr.mxu0 0.0
  %972 = vmatpush1.msra.mxu0 0.0
  %973 = vmatprep.subr.mxu0 0.0
  %974 = vmatpush1.msra.mxu0 0.0
  %975 = vmatprep.subr.mxu0 0.0
  %976 = vmatpush1.msra.mxu0 0.0
  %977 = vmatprep.subr.mxu0 0.0
  %978 = vmatpush1.msra.mxu0 0.0
  %979 = vmatprep.subr.mxu0 0.0
  %980 = vmatpush1.msra.mxu0 0.0
  %981 = vmatprep.subr.mxu0 0.0
  %982 = vmatpush1.msra.mxu0 0.0
  %983 = vmatprep.subr.mxu0 0.0
  %984 = vmatpush1.msra.mxu0 0.0
  %985 = vmatprep.subr.mxu0 0.0
  %986 = vmatpush1.msra.mxu0 0.0
  %987 = vmatprep.subr.mxu0 0.0
  %988 = vmatpush1.msra.mxu0 0.0
  %989 = vmatprep.mubr.f32.mxu0 0.0
  %990 = vmatmul.mubr.f32.gmra.mrb[0].mxu0 %v920
  %v991 = vpop.f32.mrb[0].mxu0
  %v992 = vadd.f32 %v911, %v991
  %v993 = vpop.f32.mrb[0].mxu0
  %994 = vmatprep.mubr.f32.mxu0 0.0
  %995 = vmatmul.mubr.f32.gmra.mrb[0].mxu0 %v923
  %v996 = vpop.f32.mrb[0].mxu0
  %v997 = vadd.f32 %v916, %v996
  %v998 = vpop.f32.mrb[0].mxu0
  %999 = vdwg.mxu0
  %1000 = vrot.lane.b32.xlu0 %v201, 112
  %v1001 = vpop.permute.xlu0 %1000
  %1002 = vrot.lane.b32.xlu0 %v206, 112
  %v1003 = vpop.permute.xlu0 %1002
  %1004 = vrot.lane.b32.xlu0 %v299, 112
  %v1005 = vpop.permute.xlu0 %1004
  %1006 = vrot.lane.b32.xlu0 %v304, 112
  %v1007 = vpop.permute.xlu0 %1006
  %1008 = vrot.lane.b32.xlu0 %v309, 112
  %v1009 = vpop.permute.xlu0 %1008
  %1010 = vrot.lane.b32.xlu0 %v314, 112
  %v1011 = vpop.permute.xlu0 %1010
  %v1012 = vsel %vm413, %v1001, 0
  %v1014 = vsel %vm413, %v1003, 0
  %v1016 = vsel %vm413, %v1005, 0
  %v1018 = vsel %vm413, %v1007, 0
  %v1020 = vsel %vm413, %v1009, 0
  %v1022 = vsel %vm413, %v1011, 0
  %1024 = vmatprep.subr.mxu0 0.0
  %1025 = vmatpush1.xpose.msra.mxu0 %v1016
  %1026 = vmatprep.subr.mxu0 0.0
  %1027 = vmatpush1.xpose.msra.mxu0 %v1018
  %1028 = vmatprep.subr.mxu0 0.0
  %1029 = vmatpush1.xpose.msra.mxu0 %v1020
  %1030 = vmatprep.subr.mxu0 0.0
  %1031 = vmatpush1.xpose.msra.mxu0 %v1022
  %1032 = vmatprep.subr.mxu0 0.0
  %1033 = vmatpush1.xpose.msra.mxu0 0.0
  %1034 = vmatprep.subr.mxu0 0.0
  %1035 = vmatpush1.xpose.msra.mxu0 0.0
  %1036 = vmatprep.subr.mxu0 0.0
  %1037 = vmatpush1.xpose.msra.mxu0 0.0
  %1038 = vmatprep.subr.mxu0 0.0
  %1039 = vmatpush1.xpose.msra.mxu0 0.0
  %1040 = vmatprep.subr.mxu0 0.0
  %1041 = vmatpush1.xpose.msra.mxu0 0.0
  %1042 = vmatprep.subr.mxu0 0.0
  %1043 = vmatpush1.xpose.msra.mxu0 0.0
  %1044 = vmatprep.subr.mxu0 0.0
  %1045 = vmatpush1.xpose.msra.mxu0 0.0
  %1046 = vmatprep.subr.mxu0 0.0
  %1047 = vmatpush1.xpose.msra.mxu0 0.0
  %1048 = vmatprep.subr.mxu0 0.0
  %1049 = vmatpush1.xpose.msra.mxu0 0.0
  %1050 = vmatprep.subr.mxu0 0.0
  %1051 = vmatpush1.xpose.msra.mxu0 0.0
  %1052 = vmatprep.subr.mxu0 0.0
  %1053 = vmatpush1.xpose.msra.mxu0 0.0
  %1054 = vmatprep.subr.mxu0 0.0
  %1055 = vmatpush1.xpose.msra.mxu0 0.0
  %1056 = vmatprep.subr.mxu0 0.0
  %1057 = vmatpush1.xpose.msra.mxu0 0.0
  %1058 = vmatprep.subr.mxu0 0.0
  %1059 = vmatpush1.xpose.msra.mxu0 0.0
  %1060 = vmatprep.subr.mxu0 0.0
  %1061 = vmatpush1.xpose.msra.mxu0 0.0
  %1062 = vmatprep.subr.mxu0 0.0
  %1063 = vmatpush1.xpose.msra.mxu0 0.0
  %1064 = vmatprep.subr.mxu0 0.0
  %1065 = vmatpush1.xpose.msra.mxu0 0.0
  %1066 = vmatprep.subr.mxu0 0.0
  %1067 = vmatpush1.xpose.msra.mxu0 0.0
  %1068 = vmatprep.subr.mxu0 0.0
  %1069 = vmatpush1.xpose.msra.mxu0 0.0
  %1070 = vmatprep.subr.mxu0 0.0
  %1071 = vmatpush1.xpose.msra.mxu0 0.0
  %1072 = vmatprep.subr.mxu0 0.0
  %1073 = vmatpush1.xpose.msra.mxu0 0.0
  %1074 = vmatprep.subr.mxu0 0.0
  %1075 = vmatpush1.xpose.msra.mxu0 0.0
  %1076 = vmatprep.subr.mxu0 0.0
  %1077 = vmatpush1.xpose.msra.mxu0 0.0
  %1078 = vmatprep.subr.mxu0 0.0
  %1079 = vmatpush1.xpose.msra.mxu0 0.0
  %1080 = vmatprep.subr.mxu0 0.0
  %1081 = vmatpush1.xpose.msra.mxu0 0.0
  %1082 = vmatprep.subr.mxu0 0.0
  %1083 = vmatpush1.xpose.msra.mxu0 0.0
  %1084 = vmatprep.subr.mxu0 0.0
  %1085 = vmatpush1.xpose.msra.mxu0 0.0
  %1086 = vmatprep.subr.mxu0 0.0
  %1087 = vmatpush1.xpose.msra.mxu0 0.0
  %1088 = vmatprep.mubr.f32.mxu0 0.0
  %1089 = vmatmul.mubr.f32.gmra.mrb[0].mxu0 %v1012
  %v1090 = vpop.f32.mrb[0].mxu0
  %v1091 = vadd.f32 0.0, %v1090
  %v1092 = vpop.f32.mrb[0].mxu0
  %1093 = vmatprep.mubr.f32.mxu0 0.0
  %1094 = vmatmul.mubr.f32.gmra.mrb[0].mxu0 %v1014
  %v1095 = vpop.f32.mrb[0].mxu0
  %v1096 = vadd.f32 0.0, %v1095
  %v1097 = vpop.f32.mrb[0].mxu0
  %1098 = vdwg.mxu0
  %v1099 = vmul.f32 %v1091, 0.35355338
  %v1100 = vmul.f32 %v1096, 0.35355338
  %v1101 = vadd.f32 %v1099, %v68
  %v1102 = vadd.f32 %v1100, %v69
  %v1103 = vsel %vm72, %v1101, -inf
  %1104 = vmax.xlane.f32.xlu0 %v1103
  %v1105 = vpop.xlane.xlu0 %1104
  %v1106 = vsel %vm76, %v1102, -inf
  %1107 = vmax.xlane.f32.xlu0 %v1106
  %v1108 = vpop.xlane.xlu0 %1107
  %v1109 = vsub.f32 %v1101, %v1105
  %v1110 = vsub.f32 %v1102, %v1108
  %v1111 = vmul.f32 %v1109, 1.442695
  %v1112 = vpow.pop %v1111
  %v1113 = vmul.f32 %v1110, 1.442695
  %v1114 = vpow.pop %v1113
  %v1115 = vsel %vm72, %v1112, 0.0
  %1116 = vadd.xlane.f32.xlu0 %v1115
  %v1117 = vpop.xlane.xlu0 %1116
  %v1118 = vsel %vm76, %v1114, 0.0
  %1119 = vadd.xlane.f32.xlu0 %v1118
  %v1120 = vpop.xlane.xlu0 %1119
  %v1121 = vrcp.pop %v1117
  %v1122 = vrcp.pop %v1120
  %v1123 = vmul.f32 %v1112, %v1121
  %v1124 = vmul.f32 %v1114, %v1122
  %1125 = vrot.lane.b32.xlu0 %v395, 112
  %v1126 = vpop.permute.xlu0 %1125
  %1127 = vrot.lane.b32.xlu0 %v400, 112
  %v1128 = vpop.permute.xlu0 %1127
  %1129 = vrot.lane.b32.xlu0 %v405, 112
  %v1130 = vpop.permute.xlu0 %1129
  %1131 = vrot.lane.b32.xlu0 %v410, 112
  %v1132 = vpop.permute.xlu0 %1131
  %v1138 = vsel %vm72, %v1123, 0
  %v1141 = vsel %vm72, %v1124, 0
  %1143 = vmatprep.subr.mxu0 0.0
  %1144 = vmatpush1.msra.mxu0 %v1126
  %1145 = vmatprep.subr.mxu0 0.0
  %1146 = vmatpush1.msra.mxu0 %v1128
  %1147 = vmatprep.subr.mxu0 0.0
  %1148 = vmatpush1.msra.mxu0 %v1130
  %1149 = vmatprep.subr.mxu0 0.0
  %1150 = vmatpush1.msra.mxu0 %v1132
  %1151 = vmatprep.subr.mxu0 0.0
  %1152 = vmatpush1.msra.mxu0 0.0
  %1153 = vmatprep.subr.mxu0 0.0
  %1154 = vmatpush1.msra.mxu0 0.0
  %1155 = vmatprep.subr.mxu0 0.0
  %1156 = vmatpush1.msra.mxu0 0.0
  %1157 = vmatprep.subr.mxu0 0.0
  %1158 = vmatpush1.msra.mxu0 0.0
  %1159 = vmatprep.subr.mxu0 0.0
  %1160 = vmatpush1.msra.mxu0 0.0
  %1161 = vmatprep.subr.mxu0 0.0
  %1162 = vmatpush1.msra.mxu0 0.0
  %1163 = vmatprep.subr.mxu0 0.0
  %1164 = vmatpush1.msra.mxu0 0.0
  %1165 = vmatprep.subr.mxu0 0.0
  %1166 = vmatpush1.msra.mxu0 0.0
  %1167 = vmatprep.subr.mxu0 0.0
  %1168 = vmatpush1.msra.mxu0 0.0
  %1169 = vmatprep.subr.mxu0 0.0
  %1170 = vmatpush1.msra.mxu0 0.0
  %1171 = vmatprep.subr.mxu0 0.0
  %1172 = vmatpush1.msra.mxu0 0.0
  %1173 = vmatprep.subr.mxu0 0.0
  %1174 = vmatpush1.msra.mxu0 0.0
  %1175 = vmatprep.subr.mxu0 0.0
  %1176 = vmatpush1.msra.mxu0 0.0
  %1177 = vmatprep.subr.mxu0 0.0
  %1178 = vmatpush1.msra.mxu0 0.0
  %1179 = vmatprep.subr.mxu0 0.0
  %1180 = vmatpush1.msra.mxu0 0.0
  %1181 = vmatprep.subr.mxu0 0.0
  %1182 = vmatpush1.msra.mxu0 0.0
  %1183 = vmatprep.subr.mxu0 0.0
  %1184 = vmatpush1.msra.mxu0 0.0
  %1185 = vmatprep.subr.mxu0 0.0
  %1186 = vmatpush1.msra.mxu0 0.0
  %1187 = vmatprep.subr.mxu0 0.0
  %1188 = vmatpush1.msra.mxu0 0.0
  %1189 = vmatprep.subr.mxu0 0.0
  %1190 = vmatpush1.msra.mxu0 0.0
  %1191 = vmatprep.subr.mxu0 0.0
  %1192 = vmatpush1.msra.mxu0 0.0
  %1193 = vmatprep.subr.mxu0 0.0
  %1194 = vmatpush1.msra.mxu0 0.0
  %1195 = vmatprep.subr.mxu0 0.0
  %1196 = vmatpush1.msra.mxu0 0.0
  %1197 = vmatprep.subr.mxu0 0.0
  %1198 = vmatpush1.msra.mxu0 0.0
  %1199 = vmatprep.subr.mxu0 0.0
  %1200 = vmatpush1.msra.mxu0 0.0
  %1201 = vmatprep.subr.mxu0 0.0
  %1202 = vmatpush1.msra.mxu0 0.0
  %1203 = vmatprep.subr.mxu0 0.0
  %1204 = vmatpush1.msra.mxu0 0.0
  %1205 = vmatprep.subr.mxu0 0.0
  %1206 = vmatpush1.msra.mxu0 0.0
  %1207 = vmatprep.mubr.f32.mxu0 0.0
  %1208 = vmatmul.mubr.f32.gmra.mrb[0].mxu0 %v1138
  %v1209 = vpop.f32.mrb[0].mxu0
  %v1210 = vadd.f32 0.0, %v1209
  %v1211 = vpop.f32.mrb[0].mxu0
  %1212 = vmatprep.mubr.f32.mxu0 0.0
  %1213 = vmatmul.mubr.f32.gmra.mrb[0].mxu0 %v1141
  %v1214 = vpop.f32.mrb[0].mxu0
  %v1215 = vadd.f32 0.0, %v1214
  %v1216 = vpop.f32.mrb[0].mxu0
  %1217 = vdwg.mxu0
  %v1218 = vld [vmem:[%s11 + $0x10] sm:$0xff]
  %v1220 = vsel %vm413, %v1210, 0
  %v1223 = vsel %vm413, %v1215, 0
  %1225 = vmatprep.subr.mxu0 0.0
  %1226 = vmatpush1.msra.mxu0 %v1218
  %1227 = vmatprep.subr.mxu0 0.0
  %1228 = vmatpush1.msra.mxu0 0.0
  %1229 = vmatprep.subr.mxu0 0.0
  %1230 = vmatpush1.msra.mxu0 0.0
  %1231 = vmatprep.subr.mxu0 0.0
  %1232 = vmatpush1.msra.mxu0 0.0
  %1233 = vmatprep.subr.mxu0 0.0
  %1234 = vmatpush1.msra.mxu0 0.0
  %1235 = vmatprep.subr.mxu0 0.0
  %1236 = vmatpush1.msra.mxu0 0.0
  %1237 = vmatprep.subr.mxu0 0.0
  %1238 = vmatpush1.msra.mxu0 0.0
  %1239 = vmatprep.subr.mxu0 0.0
  %1240 = vmatpush1.msra.mxu0 0.0
  %1241 = vmatprep.subr.mxu0 0.0
  %1242 = vmatpush1.msra.mxu0 0.0
  %1243 = vmatprep.subr.mxu0 0.0
  %1244 = vmatpush1.msra.mxu0 0.0
  %1245 = vmatprep.subr.mxu0 0.0
  %1246 = vmatpush1.msra.mxu0 0.0
  %1247 = vmatprep.subr.mxu0 0.0
  %1248 = vmatpush1.msra.mxu0 0.0
  %1249 = vmatprep.subr.mxu0 0.0
  %1250 = vmatpush1.msra.mxu0 0.0
  %1251 = vmatprep.subr.mxu0 0.0
  %1252 = vmatpush1.msra.mxu0 0.0
  %1253 = vmatprep.subr.mxu0 0.0
  %1254 = vmatpush1.msra.mxu0 0.0
  %1255 = vmatprep.subr.mxu0 0.0
  %1256 = vmatpush1.msra.mxu0 0.0
  %1257 = vmatprep.subr.mxu0 0.0
  %1258 = vmatpush1.msra.mxu0 0.0
  %1259 = vmatprep.subr.mxu0 0.0
  %1260 = vmatpush1.msra.mxu0 0.0
  %1261 = vmatprep.subr.mxu0 0.0
  %1262 = vmatpush1.msra.mxu0 0.0
  %1263 = vmatprep.subr.mxu0 0.0
  %1264 = vmatpush1.msra.mxu0 0.0
  %1265 = vmatprep.subr.mxu0 0.0
  %1266 = vmatpush1.msra.mxu0 0.0
  %1267 = vmatprep.subr.mxu0 0.0
  %1268 = vmatpush1.msra.mxu0 0.0
  %1269 = vmatprep.subr.mxu0 0.0
  %1270 = vmatpush1.msra.mxu0 0.0
  %1271 = vmatprep.subr.mxu0 0.0
  %1272 = vmatpush1.msra.mxu0 0.0
  %1273 = vmatprep.subr.mxu0 0.0
  %1274 = vmatpush1.msra.mxu0 0.0
  %1275 = vmatprep.subr.mxu0 0.0
  %1276 = vmatpush1.msra.mxu0 0.0
  %1277 = vmatprep.subr.mxu0 0.0
  %1278 = vmatpush1.msra.mxu0 0.0
  %1279 = vmatprep.subr.mxu0 0.0
  %1280 = vmatpush1.msra.mxu0 0.0
  %1281 = vmatprep.subr.mxu0 0.0
  %1282 = vmatpush1.msra.mxu0 0.0
  %1283 = vmatprep.subr.mxu0 0.0
  %1284 = vmatpush1.msra.mxu0 0.0
  %1285 = vmatprep.subr.mxu0 0.0
  %1286 = vmatpush1.msra.mxu0 0.0
  %1287 = vmatprep.subr.mxu0 0.0
  %1288 = vmatpush1.msra.mxu0 0.0
  %1289 = vmatprep.mubr.f32.mxu0 0.0
  %1290 = vmatmul.mubr.f32.gmra.mrb[0].mxu0 %v1220
  %v1291 = vpop.f32.mrb[0].mxu0
  %v1292 = vadd.f32 0.0, %v1291
  %v1293 = vpop.f32.mrb[0].mxu0
  %1294 = vmatprep.mubr.f32.mxu0 0.0
  %1295 = vmatmul.mubr.f32.gmra.mrb[0].mxu0 %v1223
  %v1296 = vpop.f32.mrb[0].mxu0
  %v1297 = vadd.f32 0.0, %v1296
  %v1298 = vpop.f32.mrb[0].mxu0
  %1299 = vdwg.mxu0
  %v1300 = vadd.f32 %v992, %v1292
  %v1301 = vadd.f32 %v997, %v1297
  %1302 = vrot.lane.b32.xlu0 %v201, 104
  %v1303 = vpop.permute.xlu0 %1302
  %1304 = vrot.lane.b32.xlu0 %v206, 104
  %v1305 = vpop.permute.xlu0 %1304
  %1306 = vrot.lane.b32.xlu0 %v299, 104
  %v1307 = vpop.permute.xlu0 %1306
  %1308 = vrot.lane.b32.xlu0 %v304, 104
  %v1309 = vpop.permute.xlu0 %1308
  %1310 = vrot.lane.b32.xlu0 %v309, 104
  %v1311 = vpop.permute.xlu0 %1310
  %1312 = vrot.lane.b32.xlu0 %v314, 104
  %v1313 = vpop.permute.xlu0 %1312
  %v1314 = vsel %vm413, %v1303, 0
  %v1316 = vsel %vm413, %v1305, 0
  %v1318 = vsel %vm413, %v1307, 0
  %v1320 = vsel %vm413, %v1309, 0
  %v1322 = vsel %vm413, %v1311, 0
  %v1324 = vsel %vm413, %v1313, 0
  %1326 = vmatprep.subr.mxu0 0.0
  %1327 = vmatpush1.xpose.msra.mxu0 %v1318
  %1328 = vmatprep.subr.mxu0 0.0
  %1329 = vmatpush1.xpose.msra.mxu0 %v1320
  %1330 = vmatprep.subr.mxu0 0.0
  %1331 = vmatpush1.xpose.msra.mxu0 %v1322
  %1332 = vmatprep.subr.mxu0 0.0
  %1333 = vmatpush1.xpose.msra.mxu0 %v1324
  %1334 = vmatprep.subr.mxu0 0.0
  %1335 = vmatpush1.xpose.msra.mxu0 0.0
  %1336 = vmatprep.subr.mxu0 0.0
  %1337 = vmatpush1.xpose.msra.mxu0 0.0
  %1338 = vmatprep.subr.mxu0 0.0
  %1339 = vmatpush1.xpose.msra.mxu0 0.0
  %1340 = vmatprep.subr.mxu0 0.0
  %1341 = vmatpush1.xpose.msra.mxu0 0.0
  %1342 = vmatprep.subr.mxu0 0.0
  %1343 = vmatpush1.xpose.msra.mxu0 0.0
  %1344 = vmatprep.subr.mxu0 0.0
  %1345 = vmatpush1.xpose.msra.mxu0 0.0
  %1346 = vmatprep.subr.mxu0 0.0
  %1347 = vmatpush1.xpose.msra.mxu0 0.0
  %1348 = vmatprep.subr.mxu0 0.0
  %1349 = vmatpush1.xpose.msra.mxu0 0.0
  %1350 = vmatprep.subr.mxu0 0.0
  %1351 = vmatpush1.xpose.msra.mxu0 0.0
  %1352 = vmatprep.subr.mxu0 0.0
  %1353 = vmatpush1.xpose.msra.mxu0 0.0
  %1354 = vmatprep.subr.mxu0 0.0
  %1355 = vmatpush1.xpose.msra.mxu0 0.0
  %1356 = vmatprep.subr.mxu0 0.0
  %1357 = vmatpush1.xpose.msra.mxu0 0.0
  %1358 = vmatprep.subr.mxu0 0.0
  %1359 = vmatpush1.xpose.msra.mxu0 0.0
  %1360 = vmatprep.subr.mxu0 0.0
  %1361 = vmatpush1.xpose.msra.mxu0 0.0
  %1362 = vmatprep.subr.mxu0 0.0
  %1363 = vmatpush1.xpose.msra.mxu0 0.0
  %1364 = vmatprep.subr.mxu0 0.0
  %1365 = vmatpush1.xpose.msra.mxu0 0.0
  %1366 = vmatprep.subr.mxu0 0.0
  %1367 = vmatpush1.xpose.msra.mxu0 0.0
  %1368 = vmatprep.subr.mxu0 0.0
  %1369 = vmatpush1.xpose.msra.mxu0 0.0
  %1370 = vmatprep.subr.mxu0 0.0
  %1371 = vmatpush1.xpose.msra.mxu0 0.0
  %1372 = vmatprep.subr.mxu0 0.0
  %1373 = vmatpush1.xpose.msra.mxu0 0.0
  %1374 = vmatprep.subr.mxu0 0.0
  %1375 = vmatpush1.xpose.msra.mxu0 0.0
  %1376 = vmatprep.subr.mxu0 0.0
  %1377 = vmatpush1.xpose.msra.mxu0 0.0
  %1378 = vmatprep.subr.mxu0 0.0
  %1379 = vmatpush1.xpose.msra.mxu0 0.0
  %1380 = vmatprep.subr.mxu0 0.0
  %1381 = vmatpush1.xpose.msra.mxu0 0.0
  %1382 = vmatprep.subr.mxu0 0.0
  %1383 = vmatpush1.xpose.msra.mxu0 0.0
  %1384 = vmatprep.subr.mxu0 0.0
  %1385 = vmatpush1.xpose.msra.mxu0 0.0
  %1386 = vmatprep.subr.mxu0 0.0
  %1387 = vmatpush1.xpose.msra.mxu0 0.0
  %1388 = vmatprep.subr.mxu0 0.0
  %1389 = vmatpush1.xpose.msra.mxu0 0.0
  %1390 = vmatprep.mubr.f32.mxu0 0.0
  %1391 = vmatmul.mubr.f32.gmra.mrb[0].mxu0 %v1314
  %v1392 = vpop.f32.mrb[0].mxu0
  %v1393 = vadd.f32 0.0, %v1392
  %v1394 = vpop.f32.mrb[0].mxu0
  %1395 = vmatprep.mubr.f32.mxu0 0.0
  %1396 = vmatmul.mubr.f32.gmra.mrb[0].mxu0 %v1316
  %v1397 = vpop.f32.mrb[0].mxu0
  %v1398 = vadd.f32 0.0, %v1397
  %v1399 = vpop.f32.mrb[0].mxu0
  %1400 = vdwg.mxu0
  %v1401 = vmul.f32 %v1393, 0.35355338
  %v1402 = vmul.f32 %v1398, 0.35355338
  %v1403 = vadd.f32 %v1401, %v68
  %v1404 = vadd.f32 %v1402, %v69
  %v1405 = vsel %vm72, %v1403, -inf
  %1406 = vmax.xlane.f32.xlu0 %v1405
  %v1407 = vpop.xlane.xlu0 %1406
  %v1408 = vsel %vm76, %v1404, -inf
  %1409 = vmax.xlane.f32.xlu0 %v1408
  %v1410 = vpop.xlane.xlu0 %1409
  %v1411 = vsub.f32 %v1403, %v1407
  %v1412 = vsub.f32 %v1404, %v1410
  %v1413 = vmul.f32 %v1411, 1.442695
  %v1414 = vpow.pop %v1413
  %v1415 = vmul.f32 %v1412, 1.442695
  %v1416 = vpow.pop %v1415
  %v1417 = vsel %vm72, %v1414, 0.0
  %1418 = vadd.xlane.f32.xlu0 %v1417
  %v1419 = vpop.xlane.xlu0 %1418
  %v1420 = vsel %vm76, %v1416, 0.0
  %1421 = vadd.xlane.f32.xlu0 %v1420
  %v1422 = vpop.xlane.xlu0 %1421
  %v1423 = vrcp.pop %v1419
  %v1424 = vrcp.pop %v1422
  %v1425 = vmul.f32 %v1414, %v1423
  %v1426 = vmul.f32 %v1416, %v1424
  %1427 = vrot.lane.b32.xlu0 %v395, 104
  %v1428 = vpop.permute.xlu0 %1427
  %1429 = vrot.lane.b32.xlu0 %v400, 104
  %v1430 = vpop.permute.xlu0 %1429
  %1431 = vrot.lane.b32.xlu0 %v405, 104
  %v1432 = vpop.permute.xlu0 %1431
  %1433 = vrot.lane.b32.xlu0 %v410, 104
  %v1434 = vpop.permute.xlu0 %1433
  %v1440 = vsel %vm72, %v1425, 0
  %v1443 = vsel %vm72, %v1426, 0
  %1445 = vmatprep.subr.mxu0 0.0
  %1446 = vmatpush1.msra.mxu0 %v1428
  %1447 = vmatprep.subr.mxu0 0.0
  %1448 = vmatpush1.msra.mxu0 %v1430
  %1449 = vmatprep.subr.mxu0 0.0
  %1450 = vmatpush1.msra.mxu0 %v1432
  %1451 = vmatprep.subr.mxu0 0.0
  %1452 = vmatpush1.msra.mxu0 %v1434
  %1453 = vmatprep.subr.mxu0 0.0
  %1454 = vmatpush1.msra.mxu0 0.0
  %1455 = vmatprep.subr.mxu0 0.0
  %1456 = vmatpush1.msra.mxu0 0.0
  %1457 = vmatprep.subr.mxu0 0.0
  %1458 = vmatpush1.msra.mxu0 0.0
  %1459 = vmatprep.subr.mxu0 0.0
  %1460 = vmatpush1.msra.mxu0 0.0
  %1461 = vmatprep.subr.mxu0 0.0
  %1462 = vmatpush1.msra.mxu0 0.0
  %1463 = vmatprep.subr.mxu0 0.0
  %1464 = vmatpush1.msra.mxu0 0.0
  %1465 = vmatprep.subr.mxu0 0.0
  %1466 = vmatpush1.msra.mxu0 0.0
  %1467 = vmatprep.subr.mxu0 0.0
  %1468 = vmatpush1.msra.mxu0 0.0
  %1469 = vmatprep.subr.mxu0 0.0
  %1470 = vmatpush1.msra.mxu0 0.0
  %1471 = vmatprep.subr.mxu0 0.0
  %1472 = vmatpush1.msra.mxu0 0.0
  %1473 = vmatprep.subr.mxu0 0.0
  %1474 = vmatpush1.msra.mxu0 0.0
  %1475 = vmatprep.subr.mxu0 0.0
  %1476 = vmatpush1.msra.mxu0 0.0
  %1477 = vmatprep.subr.mxu0 0.0
  %1478 = vmatpush1.msra.mxu0 0.0
  %1479 = vmatprep.subr.mxu0 0.0
  %1480 = vmatpush1.msra.mxu0 0.0
  %1481 = vmatprep.subr.mxu0 0.0
  %1482 = vmatpush1.msra.mxu0 0.0
  %1483 = vmatprep.subr.mxu0 0.0
  %1484 = vmatpush1.msra.mxu0 0.0
  %1485 = vmatprep.subr.mxu0 0.0
  %1486 = vmatpush1.msra.mxu0 0.0
  %1487 = vmatprep.subr.mxu0 0.0
  %1488 = vmatpush1.msra.mxu0 0.0
  %1489 = vmatprep.subr.mxu0 0.0
  %1490 = vmatpush1.msra.mxu0 0.0
  %1491 = vmatprep.subr.mxu0 0.0
  %1492 = vmatpush1.msra.mxu0 0.0
  %1493 = vmatprep.subr.mxu0 0.0
  %1494 = vmatpush1.msra.mxu0 0.0
  %1495 = vmatprep.subr.mxu0 0.0
  %1496 = vmatpush1.msra.mxu0 0.0
  %1497 = vmatprep.subr.mxu0 0.0
  %1498 = vmatpush1.msra.mxu0 0.0
  %1499 = vmatprep.subr.mxu0 0.0
  %1500 = vmatpush1.msra.mxu0 0.0
  %1501 = vmatprep.subr.mxu0 0.0
  %1502 = vmatpush1.msra.mxu0 0.0
  %1503 = vmatprep.subr.mxu0 0.0
  %1504 = vmatpush1.msra.mxu0 0.0
  %1505 = vmatprep.subr.mxu0 0.0
  %1506 = vmatpush1.msra.mxu0 0.0
  %1507 = vmatprep.subr.mxu0 0.0
  %1508 = vmatpush1.msra.mxu0 0.0
  %1509 = vmatprep.mubr.f32.mxu0 0.0
  %1510 = vmatmul.mubr.f32.gmra.mrb[0].mxu0 %v1440
  %v1511 = vpop.f32.mrb[0].mxu0
  %v1512 = vadd.f32 0.0, %v1511
  %v1513 = vpop.f32.mrb[0].mxu0
  %1514 = vmatprep.mubr.f32.mxu0 0.0
  %1515 = vmatmul.mubr.f32.gmra.mrb[0].mxu0 %v1443
  %v1516 = vpop.f32.mrb[0].mxu0
  %v1517 = vadd.f32 0.0, %v1516
  %v1518 = vpop.f32.mrb[0].mxu0
  %1519 = vdwg.mxu0
  %v1520 = vld [vmem:[%s11 + $0x18] sm:$0xff]
  %v1522 = vsel %vm413, %v1512, 0
  %v1525 = vsel %vm413, %v1517, 0
  %1527 = vmatprep.subr.mxu0 0.0
  %1528 = vmatpush1.msra.mxu0 %v1520
  %1529 = vmatprep.subr.mxu0 0.0
  %1530 = vmatpush1.msra.mxu0 0.0
  %1531 = vmatprep.subr.mxu0 0.0
  %1532 = vmatpush1.msra.mxu0 0.0
  %1533 = vmatprep.subr.mxu0 0.0
  %1534 = vmatpush1.msra.mxu0 0.0
  %1535 = vmatprep.subr.mxu0 0.0
  %1536 = vmatpush1.msra.mxu0 0.0
  %1537 = vmatprep.subr.mxu0 0.0
  %1538 = vmatpush1.msra.mxu0 0.0
  %1539 = vmatprep.subr.mxu0 0.0
  %1540 = vmatpush1.msra.mxu0 0.0
  %1541 = vmatprep.subr.mxu0 0.0
  %1542 = vmatpush1.msra.mxu0 0.0
  %1543 = vmatprep.subr.mxu0 0.0
  %1544 = vmatpush1.msra.mxu0 0.0
  %1545 = vmatprep.subr.mxu0 0.0
  %1546 = vmatpush1.msra.mxu0 0.0
  %1547 = vmatprep.subr.mxu0 0.0
  %1548 = vmatpush1.msra.mxu0 0.0
  %1549 = vmatprep.subr.mxu0 0.0
  %1550 = vmatpush1.msra.mxu0 0.0
  %1551 = vmatprep.subr.mxu0 0.0
  %1552 = vmatpush1.msra.mxu0 0.0
  %1553 = vmatprep.subr.mxu0 0.0
  %1554 = vmatpush1.msra.mxu0 0.0
  %1555 = vmatprep.subr.mxu0 0.0
  %1556 = vmatpush1.msra.mxu0 0.0
  %1557 = vmatprep.subr.mxu0 0.0
  %1558 = vmatpush1.msra.mxu0 0.0
  %1559 = vmatprep.subr.mxu0 0.0
  %1560 = vmatpush1.msra.mxu0 0.0
  %1561 = vmatprep.subr.mxu0 0.0
  %1562 = vmatpush1.msra.mxu0 0.0
  %1563 = vmatprep.subr.mxu0 0.0
  %1564 = vmatpush1.msra.mxu0 0.0
  %1565 = vmatprep.subr.mxu0 0.0
  %1566 = vmatpush1.msra.mxu0 0.0
  %1567 = vmatprep.subr.mxu0 0.0
  %1568 = vmatpush1.msra.mxu0 0.0
  %1569 = vmatprep.subr.mxu0 0.0
  %1570 = vmatpush1.msra.mxu0 0.0
  %1571 = vmatprep.subr.mxu0 0.0
  %1572 = vmatpush1.msra.mxu0 0.0
  %1573 = vmatprep.subr.mxu0 0.0
  %1574 = vmatpush1.msra.mxu0 0.0
  %1575 = vmatprep.subr.mxu0 0.0
  %1576 = vmatpush1.msra.mxu0 0.0
  %1577 = vmatprep.subr.mxu0 0.0
  %1578 = vmatpush1.msra.mxu0 0.0
  %1579 = vmatprep.subr.mxu0 0.0
  %1580 = vmatpush1.msra.mxu0 0.0
  %1581 = vmatprep.subr.mxu0 0.0
  %1582 = vmatpush1.msra.mxu0 0.0
  %1583 = vmatprep.subr.mxu0 0.0
  %1584 = vmatpush1.msra.mxu0 0.0
  %1585 = vmatprep.subr.mxu0 0.0
  %1586 = vmatpush1.msra.mxu0 0.0
  %1587 = vmatprep.subr.mxu0 0.0
  %1588 = vmatpush1.msra.mxu0 0.0
  %1589 = vmatprep.subr.mxu0 0.0
  %1590 = vmatpush1.msra.mxu0 0.0
  %1591 = vmatprep.mubr.f32.mxu0 0.0
  %1592 = vmatmul.mubr.f32.gmra.mrb[0].mxu0 %v1522
  %v1593 = vpop.f32.mrb[0].mxu0
  %v1594 = vadd.f32 0.0, %v1593
  %v1595 = vpop.f32.mrb[0].mxu0
  %1596 = vmatprep.mubr.f32.mxu0 0.0
  %1597 = vmatmul.mubr.f32.gmra.mrb[0].mxu0 %v1525
  %v1598 = vpop.f32.mrb[0].mxu0
  %v1599 = vadd.f32 0.0, %v1598
  %v1600 = vpop.f32.mrb[0].mxu0
  %1601 = vdwg.mxu0
  %v1602 = vadd.f32 %v1300, %v1594
  %v1603 = vadd.f32 %v1301, %v1599
  %v1604 = vadd.f32 %v62, %v1602
  %v1605 = vadd.f32 %v63, %v1603
  %v1606 = vld [vmem:[%s12] sm:$0x1]
  %v1608 = vlaneseq
  %v1609 = vshrl.u32 %v1608, 7
  %v1610 = vsub.s32 0, %v1609
  %v1611 = vrot.slane %v1606, %v1610
  %v1613 = vadd.f32 %v1604, %v1611
  %v1614 = vadd.f32 %v1605, %v1611
  %v1615 = vld [vmem:[%s13] sm:$0x1]
  %v1616 = vld [vmem:[%s14] sm:$0x1]
  %v1617 = vsel %vm72, %v1613, 0.0
  %1618 = vadd.xlane.f32.xlu0 %v1617
  %v1619 = vpop.xlane.xlu0 %1618
  %v1620 = vsel %vm76, %v1614, 0.0
  %1621 = vadd.xlane.f32.xlu0 %v1620
  %v1622 = vpop.xlane.xlu0 %1621
  %v1623 = vmul.f32 %v1619, %v80
  %v1624 = vmul.f32 %v1622, %v80
  %v1625 = vsub.f32 %v1613, %v1623
  %v1626 = vsub.f32 %v1614, %v1624
  %v1627 = vmul.f32 %v1625, %v1625
  %v1628 = vmul.f32 %v1626, %v1626
  %v1629 = vsel %vm72, %v1627, 0.0
  %1630 = vadd.xlane.f32.xlu0 %v1629
  %v1631 = vpop.xlane.xlu0 %1630
  %v1632 = vsel %vm76, %v1628, 0.0
  %1633 = vadd.xlane.f32.xlu0 %v1632
  %v1634 = vpop.xlane.xlu0 %1633
  %v1635 = vmul.f32 %v1631, %v80
  %v1636 = vmul.f32 %v1634, %v80
  %v1637 = vadd.f32 %v1635, 1e-05
  %v1638 = vadd.f32 %v1636, 1e-05
  %v1639 = vrsqrt.pop %v1637
  %v1640 = vrsqrt.pop %v1638
  %v1641 = vmul.f32 %v1625, %v1639
  %v1642 = vmul.f32 %v1626, %v1640
  %v1644 = vlaneseq
  %v1645 = vshrl.u32 %v1644, 7
  %v1646 = vsub.s32 0, %v1645
  %v1647 = vrot.slane %v1615, %v1646
  %v1649 = vmul.f32 %v1641, %v1647
  %v1650 = vmul.f32 %v1642, %v1647
  %v1652 = vlaneseq
  %v1653 = vshrl.u32 %v1652, 7
  %v1654 = vsub.s32 0, %v1653
  %v1655 = vrot.slane %v1616, %v1654
  %v1657 = vadd.f32 %v1649, %v1655
  %v1658 = vadd.f32 %v1650, %v1655
  %v1659 = vld [vmem:[%s15] sm:$0xff]
  %v1660 = vld [vmem:[%s15 + $0x8] sm:$0xff]
  %v1661 = vld [vmem:[%s15 + $0x10] sm:$0xff]
  %v1662 = vld [vmem:[%s15 + $0x18] sm:$0xff]
  %v1663 = vld [vmem:[%s15 + $0x20] sm:$0xff]
  %v1664 = vld [vmem:[%s15 + $0x28] sm:$0xff]
  %v1665 = vld [vmem:[%s15 + $0x30] sm:$0xff]
  %v1666 = vld [vmem:[%s15 + $0x38] sm:$0xff]
  %v1667 = vld [vmem:[%s15 + $0x40] sm:$0xff]
  %v1668 = vld [vmem:[%s15 + $0x48] sm:$0xff]
  %v1669 = vld [vmem:[%s15 + $0x50] sm:$0xff]
  %v1670 = vld [vmem:[%s15 + $0x58] sm:$0xff]
  %v1671 = vld [vmem:[%s15 + $0x60] sm:$0xff]
  %v1672 = vld [vmem:[%s15 + $0x68] sm:$0xff]
  %v1673 = vld [vmem:[%s15 + $0x70] sm:$0xff]
  %v1674 = vld [vmem:[%s15 + $0x78] sm:$0xff]
  %v1675 = vld [vmem:[%s15 + $0x80] sm:$0xff]
  %v1676 = vld [vmem:[%s15 + $0x88] sm:$0xff]
  %v1677 = vld [vmem:[%s15 + $0x90] sm:$0xff]
  %v1678 = vld [vmem:[%s15 + $0x98] sm:$0xff]
  %v1679 = vld [vmem:[%s15 + $0xa0] sm:$0xff]
  %v1680 = vld [vmem:[%s15 + $0xa8] sm:$0xff]
  %v1681 = vld [vmem:[%s15 + $0xb0] sm:$0xff]
  %v1682 = vld [vmem:[%s15 + $0xb8] sm:$0xff]
  %v1683 = vld [vmem:[%s15 + $0xc0] sm:$0xff]
  %v1684 = vld [vmem:[%s15 + $0xc8] sm:$0xff]
  %v1685 = vld [vmem:[%s15 + $0xd0] sm:$0xff]
  %v1686 = vld [vmem:[%s15 + $0xd8] sm:$0xff]
  %v1687 = vld [vmem:[%s15 + $0xe0] sm:$0xff]
  %v1688 = vld [vmem:[%s15 + $0xe8] sm:$0xff]
  %v1689 = vld [vmem:[%s15 + $0xf0] sm:$0xff]
  %v1690 = vld [vmem:[%s15 + $0xf8] sm:$0xff]
  %v1691 = vld [vmem:[%s15 + $0x100] sm:$0xff]
  %v1692 = vld [vmem:[%s15 + $0x108] sm:$0xff]
  %v1693 = vld [vmem:[%s15 + $0x110] sm:$0xff]
  %v1694 = vld [vmem:[%s15 + $0x118] sm:$0xff]
  %v1695 = vld [vmem:[%s15 + $0x120] sm:$0xff]
  %v1696 = vld [vmem:[%s15 + $0x128] sm:$0xff]
  %v1697 = vld [vmem:[%s15 + $0x130] sm:$0xff]
  %v1698 = vld [vmem:[%s15 + $0x138] sm:$0xff]
  %v1699 = vld [vmem:[%s15 + $0x140] sm:$0xff]
  %v1700 = vld [vmem:[%s15 + $0x148] sm:$0xff]
  %v1701 = vld [vmem:[%s15 + $0x150] sm:$0xff]
  %v1702 = vld [vmem:[%s15 + $0x158] sm:$0xff]
  %v1703 = vld [vmem:[%s15 + $0x160] sm:$0xff]
  %v1704 = vld [vmem:[%s15 + $0x168] sm:$0xff]
  %v1705 = vld [vmem:[%s15 + $0x170] sm:$0xff]
  %v1706 = vld [vmem:[%s15 + $0x178] sm:$0xff]
  %v1707 = vld [vmem:[%s15 + $0x180] sm:$0xff]
  %v1708 = vld [vmem:[%s15 + $0x188] sm:$0xff]
  %v1709 = vld [vmem:[%s15 + $0x190] sm:$0xff]
  %v1710 = vld [vmem:[%s15 + $0x198] sm:$0xff]
  %v1711 = vld [vmem:[%s15 + $0x1a0] sm:$0xff]
  %v1712 = vld [vmem:[%s15 + $0x1a8] sm:$0xff]
  %v1713 = vld [vmem:[%s15 + $0x1b0] sm:$0xff]
  %v1714 = vld [vmem:[%s15 + $0x1b8] sm:$0xff]
  %v1715 = vld [vmem:[%s15 + $0x1c0] sm:$0xff]
  %v1716 = vld [vmem:[%s15 + $0x1c8] sm:$0xff]
  %v1717 = vld [vmem:[%s15 + $0x1d0] sm:$0xff]
  %v1718 = vld [vmem:[%s15 + $0x1d8] sm:$0xff]
  %v1719 = vld [vmem:[%s15 + $0x1e0] sm:$0xff]
  %v1720 = vld [vmem:[%s15 + $0x1e8] sm:$0xff]
  %v1721 = vld [vmem:[%s15 + $0x1f0] sm:$0xff]
  %v1722 = vld [vmem:[%s15 + $0x1f8] sm:$0xff]
  %v1723 = vld [vmem:[%s16] sm:$0xff]
  %v1724 = vld [vmem:[%s16 + $0x8] sm:$0xff]
  %v1727 = vlaneseq
  %v1728 = vshrl.u32 %v1727, 7
  %v1729 = vsub.s32 0, %v1728
  %v1730 = vrot.slane %v1723, %v1729
  %v1731 = vlaneseq
  %v1732 = vshrl.u32 %v1731, 7
  %v1733 = vsub.s32 1, %v1732
  %v1734 = vrot.slane %v1723, %v1733
  %v1735 = vlaneseq
  %v1736 = vshrl.u32 %v1735, 7
  %v1737 = vsub.s32 2, %v1736
  %v1738 = vrot.slane %v1723, %v1737
  %v1739 = vlaneseq
  %v1740 = vshrl.u32 %v1739, 7
  %v1741 = vsub.s32 3, %v1740
  %v1742 = vrot.slane %v1723, %v1741
  %v1743 = vlaneseq
  %v1744 = vshrl.u32 %v1743, 7
  %v1745 = vsub.s32 4, %v1744
  %v1746 = vrot.slane %v1723, %v1745
  %v1747 = vlaneseq
  %v1748 = vshrl.u32 %v1747, 7
  %v1749 = vsub.s32 5, %v1748
  %v1750 = vrot.slane %v1723, %v1749
  %v1751 = vlaneseq
  %v1752 = vshrl.u32 %v1751, 7
  %v1753 = vsub.s32 6, %v1752
  %v1754 = vrot.slane %v1723, %v1753
  %v1755 = vlaneseq
  %v1756 = vshrl.u32 %v1755, 7
  %v1757 = vsub.s32 7, %v1756
  %v1758 = vrot.slane %v1723, %v1757
  %v1759 = vlaneseq
  %v1760 = vshrl.u32 %v1759, 7
  %v1761 = vsub.s32 0, %v1760
  %v1762 = vrot.slane %v1724, %v1761
  %v1763 = vlaneseq
  %v1764 = vshrl.u32 %v1763, 7
  %v1765 = vsub.s32 1, %v1764
  %v1766 = vrot.slane %v1724, %v1765
  %v1767 = vlaneseq
  %v1768 = vshrl.u32 %v1767, 7
  %v1769 = vsub.s32 2, %v1768
  %v1770 = vrot.slane %v1724, %v1769
  %v1771 = vlaneseq
  %v1772 = vshrl.u32 %v1771, 7
  %v1773 = vsub.s32 3, %v1772
  %v1774 = vrot.slane %v1724, %v1773
  %v1775 = vlaneseq
  %v1776 = vshrl.u32 %v1775, 7
  %v1777 = vsub.s32 4, %v1776
  %v1778 = vrot.slane %v1724, %v1777
  %v1779 = vlaneseq
  %v1780 = vshrl.u32 %v1779, 7
  %v1781 = vsub.s32 5, %v1780
  %v1782 = vrot.slane %v1724, %v1781
  %v1783 = vlaneseq
  %v1784 = vshrl.u32 %v1783, 7
  %v1785 = vsub.s32 6, %v1784
  %v1786 = vrot.slane %v1724, %v1785
  %v1787 = vlaneseq
  %v1788 = vshrl.u32 %v1787, 7
  %v1789 = vsub.s32 7, %v1788
  %v1790 = vrot.slane %v1724, %v1789
  %v1808 = vsel %vm72, %v1657, 0
  %v1811 = vsel %vm72, %v1658, 0
  %1813 = vmatprep.subr.mxu0 %v1660
  %1814 = vmatpush1.msra.mxu0 %v1659
  %1815 = vmatprep.subr.mxu0 %v1676
  %1816 = vmatpush1.msra.mxu0 %v1675
  %1817 = vmatprep.subr.mxu0 %v1692
  %1818 = vmatpush1.msra.mxu0 %v1691
  %1819 = vmatprep.subr.mxu0 %v1708
  %1820 = vmatpush1.msra.mxu0 %v1707
  %1821 = vmatprep.subr.mxu0 0.0
  %1822 = vmatpush1.msra.mxu0 0.0
  %1823 = vmatprep.subr.mxu0 0.0
  %1824 = vmatpush1.msra.mxu0 0.0
  %1825 = vmatprep.subr.mxu0 0.0
  %1826 = vmatpush1.msra.mxu0 0.0
  %1827 = vmatprep.subr.mxu0 0.0
  %1828 = vmatpush1.msra.mxu0 0.0
  %1829 = vmatprep.subr.mxu0 0.0
  %1830 = vmatpush1.msra.mxu0 0.0
  %1831 = vmatprep.subr.mxu0 0.0
  %1832 = vmatpush1.msra.mxu0 0.0
  %1833 = vmatprep.subr.mxu0 0.0
  %1834 = vmatpush1.msra.mxu0 0.0
  %1835 = vmatprep.subr.mxu0 0.0
  %1836 = vmatpush1.msra.mxu0 0.0
  %1837 = vmatprep.subr.mxu0 0.0
  %1838 = vmatpush1.msra.mxu0 0.0
  %1839 = vmatprep.subr.mxu0 0.0
  %1840 = vmatpush1.msra.mxu0 0.0
  %1841 = vmatprep.subr.mxu0 0.0
  %1842 = vmatpush1.msra.mxu0 0.0
  %1843 = vmatprep.subr.mxu0 0.0
  %1844 = vmatpush1.msra.mxu0 0.0
  %1845 = vmatprep.subr.mxu0 0.0
  %1846 = vmatpush1.msra.mxu0 0.0
  %1847 = vmatprep.subr.mxu0 0.0
  %1848 = vmatpush1.msra.mxu0 0.0
  %1849 = vmatprep.subr.mxu0 0.0
  %1850 = vmatpush1.msra.mxu0 0.0
  %1851 = vmatprep.subr.mxu0 0.0
  %1852 = vmatpush1.msra.mxu0 0.0
  %1853 = vmatprep.subr.mxu0 0.0
  %1854 = vmatpush1.msra.mxu0 0.0
  %1855 = vmatprep.subr.mxu0 0.0
  %1856 = vmatpush1.msra.mxu0 0.0
  %1857 = vmatprep.subr.mxu0 0.0
  %1858 = vmatpush1.msra.mxu0 0.0
  %1859 = vmatprep.subr.mxu0 0.0
  %1860 = vmatpush1.msra.mxu0 0.0
  %1861 = vmatprep.subr.mxu0 0.0
  %1862 = vmatpush1.msra.mxu0 0.0
  %1863 = vmatprep.subr.mxu0 0.0
  %1864 = vmatpush1.msra.mxu0 0.0
  %1865 = vmatprep.subr.mxu0 0.0
  %1866 = vmatpush1.msra.mxu0 0.0
  %1867 = vmatprep.subr.mxu0 0.0
  %1868 = vmatpush1.msra.mxu0 0.0
  %1869 = vmatprep.subr.mxu0 0.0
  %1870 = vmatpush1.msra.mxu0 0.0
  %1871 = vmatprep.subr.mxu0 0.0
  %1872 = vmatpush1.msra.mxu0 0.0
  %1873 = vmatprep.subr.mxu0 0.0
  %1874 = vmatpush1.msra.mxu0 0.0
  %1875 = vmatprep.subr.mxu0 0.0
  %1876 = vmatpush1.msra.mxu0 0.0
  %1877 = vmatprep.mubr.f32.mxu0 0.0
  %1878 = vmatmul.mubr.f32.gmra.mrb[0].mxu0 %v1808
  %v1879 = vpop.f32.mrb[0].mxu0
  %v1880 = vadd.f32 %v1730, %v1879
  %v1881 = vpop.f32.mrb[0].mxu0
  %v1882 = vadd.f32 %v1734, %v1881
  %1883 = vmatprep.mubr.f32.mxu0 0.0
  %1884 = vmatmul.mubr.f32.gmra.mrb[0].mxu0 %v1811
  %v1885 = vpop.f32.mrb[0].mxu0
  %v1886 = vadd.f32 %v1730, %v1885
  %v1887 = vpop.f32.mrb[0].mxu0
  %v1888 = vadd.f32 %v1734, %v1887
  %1889 = vdwg.mxu0
  %1890 = vmatprep.subr.mxu0 %v1662
  %1891 = vmatpush1.msra.mxu0 %v1661
  %1892 = vmatprep.subr.mxu0 %v1678
  %1893 = vmatpush1.msra.mxu0 %v1677
  %1894 = vmatprep.subr.mxu0 %v1694
  %1895 = vmatpush1.msra.mxu0 %v1693
  %1896 = vmatprep.subr.mxu0 %v1710
  %1897 = vmatpush1.msra.mxu0 %v1709
  %1898 = vmatprep.subr.mxu0 0.0
  %1899 = vmatpush1.msra.mxu0 0.0
  %1900 = vmatprep.subr.mxu0 0.0
  %1901 = vmatpush1.msra.mxu0 0.0
  %1902 = vmatprep.subr.mxu0 0.0
  %1903 = vmatpush1.msra.mxu0 0.0
  %1904 = vmatprep.subr.mxu0 0.0
  %1905 = vmatpush1.msra.mxu0 0.0
  %1906 = vmatprep.subr.mxu0 0.0
  %1907 = vmatpush1.msra.mxu0 0.0
  %1908 = vmatprep.subr.mxu0 0.0
  %1909 = vmatpush1.msra.mxu0 0.0
  %1910 = vmatprep.subr.mxu0 0.0
  %1911 = vmatpush1.msra.mxu0 0.0
  %1912 = vmatprep.subr.mxu0 0.0
  %1913 = vmatpush1.msra.mxu0 0.0
  %1914 = vmatprep.subr.mxu0 0.0
  %1915 = vmatpush1.msra.mxu0 0.0
  %1916 = vmatprep.subr.mxu0 0.0
  %1917 = vmatpush1.msra.mxu0 0.0
  %1918 = vmatprep.subr.mxu0 0.0
  %1919 = vmatpush1.msra.mxu0 0.0
  %1920 = vmatprep.subr.mxu0 0.0
  %1921 = vmatpush1.msra.mxu0 0.0
  %1922 = vmatprep.subr.mxu0 0.0
  %1923 = vmatpush1.msra.mxu0 0.0
  %1924 = vmatprep.subr.mxu0 0.0
  %1925 = vmatpush1.msra.mxu0 0.0
  %1926 = vmatprep.subr.mxu0 0.0
  %1927 = vmatpush1.msra.mxu0 0.0
  %1928 = vmatprep.subr.mxu0 0.0
  %1929 = vmatpush1.msra.mxu0 0.0
  %1930 = vmatprep.subr.mxu0 0.0
  %1931 = vmatpush1.msra.mxu0 0.0
  %1932 = vmatprep.subr.mxu0 0.0
  %1933 = vmatpush1.msra.mxu0 0.0
  %1934 = vmatprep.subr.mxu0 0.0
  %1935 = vmatpush1.msra.mxu0 0.0
  %1936 = vmatprep.subr.mxu0 0.0
  %1937 = vmatpush1.msra.mxu0 0.0
  %1938 = vmatprep.subr.mxu0 0.0
  %1939 = vmatpush1.msra.mxu0 0.0
  %1940 = vmatprep.subr.mxu0 0.0
  %1941 = vmatpush1.msra.mxu0 0.0
  %1942 = vmatprep.subr.mxu0 0.0
  %1943 = vmatpush1.msra.mxu0 0.0
  %1944 = vmatprep.subr.mxu0 0.0
  %1945 = vmatpush1.msra.mxu0 0.0
  %1946 = vmatprep.subr.mxu0 0.0
  %1947 = vmatpush1.msra.mxu0 0.0
  %1948 = vmatprep.subr.mxu0 0.0
  %1949 = vmatpush1.msra.mxu0 0.0
  %1950 = vmatprep.subr.mxu0 0.0
  %1951 = vmatpush1.msra.mxu0 0.0
  %1952 = vmatprep.subr.mxu0 0.0
  %1953 = vmatpush1.msra.mxu0 0.0
  %1954 = vmatprep.mubr.f32.mxu0 0.0
  %1955 = vmatmul.mubr.f32.gmra.mrb[0].mxu0 %v1808
  %v1956 = vpop.f32.mrb[0].mxu0
  %v1957 = vadd.f32 %v1738, %v1956
  %v1958 = vpop.f32.mrb[0].mxu0
  %v1959 = vadd.f32 %v1742, %v1958
  %1960 = vmatprep.mubr.f32.mxu0 0.0
  %1961 = vmatmul.mubr.f32.gmra.mrb[0].mxu0 %v1811
  %v1962 = vpop.f32.mrb[0].mxu0
  %v1963 = vadd.f32 %v1738, %v1962
  %v1964 = vpop.f32.mrb[0].mxu0
  %v1965 = vadd.f32 %v1742, %v1964
  %1966 = vdwg.mxu0
  %1967 = vmatprep.subr.mxu0 %v1664
  %1968 = vmatpush1.msra.mxu0 %v1663
  %1969 = vmatprep.subr.mxu0 %v1680
  %1970 = vmatpush1.msra.mxu0 %v1679
  %1971 = vmatprep.subr.mxu0 %v1696
  %1972 = vmatpush1.msra.mxu0 %v1695
  %1973 = vmatprep.subr.mxu0 %v1712
  %1974 = vmatpush1.msra.mxu0 %v1711
  %1975 = vmatprep.subr.mxu0 0.0
  %1976 = vmatpush1.msra.mxu0 0.0
  %1977 = vmatprep.subr.mxu0 0.0
  %1978 = vmatpush1.msra.mxu0 0.0
  %1979 = vmatprep.subr.mxu0 0.0
  %1980 = vmatpush1.msra.mxu0 0.0
  %1981 = vmatprep.subr.mxu0 0.0
  %1982 = vmatpush1.msra.mxu0 0.0
  %1983 = vmatprep.subr.mxu0 0.0
  %1984 = vmatpush1.msra.mxu0 0.0
  %1985 = vmatprep.subr.mxu0 0.0
  %1986 = vmatpush1.msra.mxu0 0.0
  %1987 = vmatprep.subr.mxu0 0.0
  %1988 = vmatpush1.msra.mxu0 0.0
  %1989 = vmatprep.subr.mxu0 0.0
  %1990 = vmatpush1.msra.mxu0 0.0
  %1991 = vmatprep.subr.mxu0 0.0
  %1992 = vmatpush1.msra.mxu0 0.0
  %1993 = vmatprep.subr.mxu0 0.0
  %1994 = vmatpush1.msra.mxu0 0.0
  %1995 = vmatprep.subr.mxu0 0.0
  %1996 = vmatpush1.msra.mxu0 0.0
  %1997 = vmatprep.subr.mxu0 0.0
  %1998 = vmatpush1.msra.mxu0 0.0
  %1999 = vmatprep.subr.mxu0 0.0
  %2000 = vmatpush1.msra.mxu0 0.0
  %2001 = vmatprep.subr.mxu0 0.0
  %2002 = vmatpush1.msra.mxu0 0.0
  %2003 = vmatprep.subr.mxu0 0.0
  %2004 = vmatpush1.msra.mxu0 0.0
  %2005 = vmatprep.subr.mxu0 0.0
  %2006 = vmatpush1.msra.mxu0 0.0
  %2007 = vmatprep.subr.mxu0 0.0
  %2008 = vmatpush1.msra.mxu0 0.0
  %2009 = vmatprep.subr.mxu0 0.0
  %2010 = vmatpush1.msra.mxu0 0.0
  %2011 = vmatprep.subr.mxu0 0.0
  %2012 = vmatpush1.msra.mxu0 0.0
  %2013 = vmatprep.subr.mxu0 0.0
  %2014 = vmatpush1.msra.mxu0 0.0
  %2015 = vmatprep.subr.mxu0 0.0
  %2016 = vmatpush1.msra.mxu0 0.0
  %2017 = vmatprep.subr.mxu0 0.0
  %2018 = vmatpush1.msra.mxu0 0.0
  %2019 = vmatprep.subr.mxu0 0.0
  %2020 = vmatpush1.msra.mxu0 0.0
  %2021 = vmatprep.subr.mxu0 0.0
  %2022 = vmatpush1.msra.mxu0 0.0
  %2023 = vmatprep.subr.mxu0 0.0
  %2024 = vmatpush1.msra.mxu0 0.0
  %2025 = vmatprep.subr.mxu0 0.0
  %2026 = vmatpush1.msra.mxu0 0.0
  %2027 = vmatprep.subr.mxu0 0.0
  %2028 = vmatpush1.msra.mxu0 0.0
  %2029 = vmatprep.subr.mxu0 0.0
  %2030 = vmatpush1.msra.mxu0 0.0
  %2031 = vmatprep.mubr.f32.mxu0 0.0
  %2032 = vmatmul.mubr.f32.gmra.mrb[0].mxu0 %v1808
  %v2033 = vpop.f32.mrb[0].mxu0
  %v2034 = vadd.f32 %v1746, %v2033
  %v2035 = vpop.f32.mrb[0].mxu0
  %v2036 = vadd.f32 %v1750, %v2035
  %2037 = vmatprep.mubr.f32.mxu0 0.0
  %2038 = vmatmul.mubr.f32.gmra.mrb[0].mxu0 %v1811
  %v2039 = vpop.f32.mrb[0].mxu0
  %v2040 = vadd.f32 %v1746, %v2039
  %v2041 = vpop.f32.mrb[0].mxu0
  %v2042 = vadd.f32 %v1750, %v2041
  %2043 = vdwg.mxu0
  %2044 = vmatprep.subr.mxu0 %v1666
  %2045 = vmatpush1.msra.mxu0 %v1665
  %2046 = vmatprep.subr.mxu0 %v1682
  %2047 = vmatpush1.msra.mxu0 %v1681
  %2048 = vmatprep.subr.mxu0 %v1698
  %2049 = vmatpush1.msra.mxu0 %v1697
  %2050 = vmatprep.subr.mxu0 %v1714
  %2051 = vmatpush1.msra.mxu0 %v1713
  %2052 = vmatprep.subr.mxu0 0.0
  %2053 = vmatpush1.msra.mxu0 0.0
  %2054 = vmatprep.subr.mxu0 0.0
  %2055 = vmatpush1.msra.mxu0 0.0
  %2056 = vmatprep.subr.mxu0 0.0
  %2057 = vmatpush1.msra.mxu0 0.0
  %2058 = vmatprep.subr.mxu0 0.0
  %2059 = vmatpush1.msra.mxu0 0.0
  %2060 = vmatprep.subr.mxu0 0.0
  %2061 = vmatpush1.msra.mxu0 0.0
  %2062 = vmatprep.subr.mxu0 0.0
  %2063 = vmatpush1.msra.mxu0 0.0
  %2064 = vmatprep.subr.mxu0 0.0
  %2065 = vmatpush1.msra.mxu0 0.0
  %2066 = vmatprep.subr.mxu0 0.0
  %2067 = vmatpush1.msra.mxu0 0.0
  %2068 = vmatprep.subr.mxu0 0.0
  %2069 = vmatpush1.msra.mxu0 0.0
  %2070 = vmatprep.subr.mxu0 0.0
  %2071 = vmatpush1.msra.mxu0 0.0
  %2072 = vmatprep.subr.mxu0 0.0
  %2073 = vmatpush1.msra.mxu0 0.0
  %2074 = vmatprep.subr.mxu0 0.0
  %2075 = vmatpush1.msra.mxu0 0.0
  %2076 = vmatprep.subr.mxu0 0.0
  %2077 = vmatpush1.msra.mxu0 0.0
  %2078 = vmatprep.subr.mxu0 0.0
  %2079 = vmatpush1.msra.mxu0 0.0
  %2080 = vmatprep.subr.mxu0 0.0
  %2081 = vmatpush1.msra.mxu0 0.0
  %2082 = vmatprep.subr.mxu0 0.0
  %2083 = vmatpush1.msra.mxu0 0.0
  %2084 = vmatprep.subr.mxu0 0.0
  %2085 = vmatpush1.msra.mxu0 0.0
  %2086 = vmatprep.subr.mxu0 0.0
  %2087 = vmatpush1.msra.mxu0 0.0
  %2088 = vmatprep.subr.mxu0 0.0
  %2089 = vmatpush1.msra.mxu0 0.0
  %2090 = vmatprep.subr.mxu0 0.0
  %2091 = vmatpush1.msra.mxu0 0.0
  %2092 = vmatprep.subr.mxu0 0.0
  %2093 = vmatpush1.msra.mxu0 0.0
  %2094 = vmatprep.subr.mxu0 0.0
  %2095 = vmatpush1.msra.mxu0 0.0
  %2096 = vmatprep.subr.mxu0 0.0
  %2097 = vmatpush1.msra.mxu0 0.0
  %2098 = vmatprep.subr.mxu0 0.0
  %2099 = vmatpush1.msra.mxu0 0.0
  %2100 = vmatprep.subr.mxu0 0.0
  %2101 = vmatpush1.msra.mxu0 0.0
  %2102 = vmatprep.subr.mxu0 0.0
  %2103 = vmatpush1.msra.mxu0 0.0
  %2104 = vmatprep.subr.mxu0 0.0
  %2105 = vmatpush1.msra.mxu0 0.0
  %2106 = vmatprep.subr.mxu0 0.0
  %2107 = vmatpush1.msra.mxu0 0.0
  %2108 = vmatprep.mubr.f32.mxu0 0.0
  %2109 = vmatmul.mubr.f32.gmra.mrb[0].mxu0 %v1808
  %v2110 = vpop.f32.mrb[0].mxu0
  %v2111 = vadd.f32 %v1754, %v2110
  %v2112 = vpop.f32.mrb[0].mxu0
  %v2113 = vadd.f32 %v1758, %v2112
  %2114 = vmatprep.mubr.f32.mxu0 0.0
  %2115 = vmatmul.mubr.f32.gmra.mrb[0].mxu0 %v1811
  %v2116 = vpop.f32.mrb[0].mxu0
  %v2117 = vadd.f32 %v1754, %v2116
  %v2118 = vpop.f32.mrb[0].mxu0
  %v2119 = vadd.f32 %v1758, %v2118
  %2120 = vdwg.mxu0
  %2121 = vmatprep.subr.mxu0 %v1668
  %2122 = vmatpush1.msra.mxu0 %v1667
  %2123 = vmatprep.subr.mxu0 %v1684
  %2124 = vmatpush1.msra.mxu0 %v1683
  %2125 = vmatprep.subr.mxu0 %v1700
  %2126 = vmatpush1.msra.mxu0 %v1699
  %2127 = vmatprep.subr.mxu0 %v1716
  %2128 = vmatpush1.msra.mxu0 %v1715
  %2129 = vmatprep.subr.mxu0 0.0
  %2130 = vmatpush1.msra.mxu0 0.0
  %2131 = vmatprep.subr.mxu0 0.0
  %2132 = vmatpush1.msra.mxu0 0.0
  %2133 = vmatprep.subr.mxu0 0.0
  %2134 = vmatpush1.msra.mxu0 0.0
  %2135 = vmatprep.subr.mxu0 0.0
  %2136 = vmatpush1.msra.mxu0 0.0
  %2137 = vmatprep.subr.mxu0 0.0
  %2138 = vmatpush1.msra.mxu0 0.0
  %2139 = vmatprep.subr.mxu0 0.0
  %2140 = vmatpush1.msra.mxu0 0.0
  %2141 = vmatprep.subr.mxu0 0.0
  %2142 = vmatpush1.msra.mxu0 0.0
  %2143 = vmatprep.subr.mxu0 0.0
  %2144 = vmatpush1.msra.mxu0 0.0
  %2145 = vmatprep.subr.mxu0 0.0
  %2146 = vmatpush1.msra.mxu0 0.0
  %2147 = vmatprep.subr.mxu0 0.0
  %2148 = vmatpush1.msra.mxu0 0.0
  %2149 = vmatprep.subr.mxu0 0.0
  %2150 = vmatpush1.msra.mxu0 0.0
  %2151 = vmatprep.subr.mxu0 0.0
  %2152 = vmatpush1.msra.mxu0 0.0
  %2153 = vmatprep.subr.mxu0 0.0
  %2154 = vmatpush1.msra.mxu0 0.0
  %2155 = vmatprep.subr.mxu0 0.0
  %2156 = vmatpush1.msra.mxu0 0.0
  %2157 = vmatprep.subr.mxu0 0.0
  %2158 = vmatpush1.msra.mxu0 0.0
  %2159 = vmatprep.subr.mxu0 0.0
  %2160 = vmatpush1.msra.mxu0 0.0
  %2161 = vmatprep.subr.mxu0 0.0
  %2162 = vmatpush1.msra.mxu0 0.0
  %2163 = vmatprep.subr.mxu0 0.0
  %2164 = vmatpush1.msra.mxu0 0.0
  %2165 = vmatprep.subr.mxu0 0.0
  %2166 = vmatpush1.msra.mxu0 0.0
  %2167 = vmatprep.subr.mxu0 0.0
  %2168 = vmatpush1.msra.mxu0 0.0
  %2169 = vmatprep.subr.mxu0 0.0
  %2170 = vmatpush1.msra.mxu0 0.0
  %2171 = vmatprep.subr.mxu0 0.0
  %2172 = vmatpush1.msra.mxu0 0.0
  %2173 = vmatprep.subr.mxu0 0.0
  %2174 = vmatpush1.msra.mxu0 0.0
  %2175 = vmatprep.subr.mxu0 0.0
  %2176 = vmatpush1.msra.mxu0 0.0
  %2177 = vmatprep.subr.mxu0 0.0
  %2178 = vmatpush1.msra.mxu0 0.0
  %2179 = vmatprep.subr.mxu0 0.0
  %2180 = vmatpush1.msra.mxu0 0.0
  %2181 = vmatprep.subr.mxu0 0.0
  %2182 = vmatpush1.msra.mxu0 0.0
  %2183 = vmatprep.subr.mxu0 0.0
  %2184 = vmatpush1.msra.mxu0 0.0
  %2185 = vmatprep.mubr.f32.mxu0 0.0
  %2186 = vmatmul.mubr.f32.gmra.mrb[0].mxu0 %v1808
  %v2187 = vpop.f32.mrb[0].mxu0
  %v2188 = vadd.f32 %v1762, %v2187
  %v2189 = vpop.f32.mrb[0].mxu0
  %v2190 = vadd.f32 %v1766, %v2189
  %2191 = vmatprep.mubr.f32.mxu0 0.0
  %2192 = vmatmul.mubr.f32.gmra.mrb[0].mxu0 %v1811
  %v2193 = vpop.f32.mrb[0].mxu0
  %v2194 = vadd.f32 %v1762, %v2193
  %v2195 = vpop.f32.mrb[0].mxu0
  %v2196 = vadd.f32 %v1766, %v2195
  %2197 = vdwg.mxu0
  %2198 = vmatprep.subr.mxu0 %v1670
  %2199 = vmatpush1.msra.mxu0 %v1669
  %2200 = vmatprep.subr.mxu0 %v1686
  %2201 = vmatpush1.msra.mxu0 %v1685
  %2202 = vmatprep.subr.mxu0 %v1702
  %2203 = vmatpush1.msra.mxu0 %v1701
  %2204 = vmatprep.subr.mxu0 %v1718
  %2205 = vmatpush1.msra.mxu0 %v1717
  %2206 = vmatprep.subr.mxu0 0.0
  %2207 = vmatpush1.msra.mxu0 0.0
  %2208 = vmatprep.subr.mxu0 0.0
  %2209 = vmatpush1.msra.mxu0 0.0
  %2210 = vmatprep.subr.mxu0 0.0
  %2211 = vmatpush1.msra.mxu0 0.0
  %2212 = vmatprep.subr.mxu0 0.0
  %2213 = vmatpush1.msra.mxu0 0.0
  %2214 = vmatprep.subr.mxu0 0.0
  %2215 = vmatpush1.msra.mxu0 0.0
  %2216 = vmatprep.subr.mxu0 0.0
  %2217 = vmatpush1.msra.mxu0 0.0
  %2218 = vmatprep.subr.mxu0 0.0
  %2219 = vmatpush1.msra.mxu0 0.0
  %2220 = vmatprep.subr.mxu0 0.0
  %2221 = vmatpush1.msra.mxu0 0.0
  %2222 = vmatprep.subr.mxu0 0.0
  %2223 = vmatpush1.msra.mxu0 0.0
  %2224 = vmatprep.subr.mxu0 0.0
  %2225 = vmatpush1.msra.mxu0 0.0
  %2226 = vmatprep.subr.mxu0 0.0
  %2227 = vmatpush1.msra.mxu0 0.0
  %2228 = vmatprep.subr.mxu0 0.0
  %2229 = vmatpush1.msra.mxu0 0.0
  %2230 = vmatprep.subr.mxu0 0.0
  %2231 = vmatpush1.msra.mxu0 0.0
  %2232 = vmatprep.subr.mxu0 0.0
  %2233 = vmatpush1.msra.mxu0 0.0
  %2234 = vmatprep.subr.mxu0 0.0
  %2235 = vmatpush1.msra.mxu0 0.0
  %2236 = vmatprep.subr.mxu0 0.0
  %2237 = vmatpush1.msra.mxu0 0.0
  %2238 = vmatprep.subr.mxu0 0.0
  %2239 = vmatpush1.msra.mxu0 0.0
  %2240 = vmatprep.subr.mxu0 0.0
  %2241 = vmatpush1.msra.mxu0 0.0
  %2242 = vmatprep.subr.mxu0 0.0
  %2243 = vmatpush1.msra.mxu0 0.0
  %2244 = vmatprep.subr.mxu0 0.0
  %2245 = vmatpush1.msra.mxu0 0.0
  %2246 = vmatprep.subr.mxu0 0.0
  %2247 = vmatpush1.msra.mxu0 0.0
  %2248 = vmatprep.subr.mxu0 0.0
  %2249 = vmatpush1.msra.mxu0 0.0
  %2250 = vmatprep.subr.mxu0 0.0
  %2251 = vmatpush1.msra.mxu0 0.0
  %2252 = vmatprep.subr.mxu0 0.0
  %2253 = vmatpush1.msra.mxu0 0.0
  %2254 = vmatprep.subr.mxu0 0.0
  %2255 = vmatpush1.msra.mxu0 0.0
  %2256 = vmatprep.subr.mxu0 0.0
  %2257 = vmatpush1.msra.mxu0 0.0
  %2258 = vmatprep.subr.mxu0 0.0
  %2259 = vmatpush1.msra.mxu0 0.0
  %2260 = vmatprep.subr.mxu0 0.0
  %2261 = vmatpush1.msra.mxu0 0.0
  %2262 = vmatprep.mubr.f32.mxu0 0.0
  %2263 = vmatmul.mubr.f32.gmra.mrb[0].mxu0 %v1808
  %v2264 = vpop.f32.mrb[0].mxu0
  %v2265 = vadd.f32 %v1770, %v2264
  %v2266 = vpop.f32.mrb[0].mxu0
  %v2267 = vadd.f32 %v1774, %v2266
  %2268 = vmatprep.mubr.f32.mxu0 0.0
  %2269 = vmatmul.mubr.f32.gmra.mrb[0].mxu0 %v1811
  %v2270 = vpop.f32.mrb[0].mxu0
  %v2271 = vadd.f32 %v1770, %v2270
  %v2272 = vpop.f32.mrb[0].mxu0
  %v2273 = vadd.f32 %v1774, %v2272
  %2274 = vdwg.mxu0
  %2275 = vmatprep.subr.mxu0 %v1672
  %2276 = vmatpush1.msra.mxu0 %v1671
  %2277 = vmatprep.subr.mxu0 %v1688
  %2278 = vmatpush1.msra.mxu0 %v1687
  %2279 = vmatprep.subr.mxu0 %v1704
  %2280 = vmatpush1.msra.mxu0 %v1703
  %2281 = vmatprep.subr.mxu0 %v1720
  %2282 = vmatpush1.msra.mxu0 %v1719
  %2283 = vmatprep.subr.mxu0 0.0
  %2284 = vmatpush1.msra.mxu0 0.0
  %2285 = vmatprep.subr.mxu0 0.0
  %2286 = vmatpush1.msra.mxu0 0.0
  %2287 = vmatprep.subr.mxu0 0.0
  %2288 = vmatpush1.msra.mxu0 0.0
  %2289 = vmatprep.subr.mxu0 0.0
  %2290 = vmatpush1.msra.mxu0 0.0
  %2291 = vmatprep.subr.mxu0 0.0
  %2292 = vmatpush1.msra.mxu0 0.0
  %2293 = vmatprep.subr.mxu0 0.0
  %2294 = vmatpush1.msra.mxu0 0.0
  %2295 = vmatprep.subr.mxu0 0.0
  %2296 = vmatpush1.msra.mxu0 0.0
  %2297 = vmatprep.subr.mxu0 0.0
  %2298 = vmatpush1.msra.mxu0 0.0
  %2299 = vmatprep.subr.mxu0 0.0
  %2300 = vmatpush1.msra.mxu0 0.0
  %2301 = vmatprep.subr.mxu0 0.0
  %2302 = vmatpush1.msra.mxu0 0.0
  %2303 = vmatprep.subr.mxu0 0.0
  %2304 = vmatpush1.msra.mxu0 0.0
  %2305 = vmatprep.subr.mxu0 0.0
  %2306 = vmatpush1.msra.mxu0 0.0
  %2307 = vmatprep.subr.mxu0 0.0
  %2308 = vmatpush1.msra.mxu0 0.0
  %2309 = vmatprep.subr.mxu0 0.0
  %2310 = vmatpush1.msra.mxu0 0.0
  %2311 = vmatprep.subr.mxu0 0.0
  %2312 = vmatpush1.msra.mxu0 0.0
  %2313 = vmatprep.subr.mxu0 0.0
  %2314 = vmatpush1.msra.mxu0 0.0
  %2315 = vmatprep.subr.mxu0 0.0
  %2316 = vmatpush1.msra.mxu0 0.0
  %2317 = vmatprep.subr.mxu0 0.0
  %2318 = vmatpush1.msra.mxu0 0.0
  %2319 = vmatprep.subr.mxu0 0.0
  %2320 = vmatpush1.msra.mxu0 0.0
  %2321 = vmatprep.subr.mxu0 0.0
  %2322 = vmatpush1.msra.mxu0 0.0
  %2323 = vmatprep.subr.mxu0 0.0
  %2324 = vmatpush1.msra.mxu0 0.0
  %2325 = vmatprep.subr.mxu0 0.0
  %2326 = vmatpush1.msra.mxu0 0.0
  %2327 = vmatprep.subr.mxu0 0.0
  %2328 = vmatpush1.msra.mxu0 0.0
  %2329 = vmatprep.subr.mxu0 0.0
  %2330 = vmatpush1.msra.mxu0 0.0
  %2331 = vmatprep.subr.mxu0 0.0
  %2332 = vmatpush1.msra.mxu0 0.0
  %2333 = vmatprep.subr.mxu0 0.0
  %2334 = vmatpush1.msra.mxu0 0.0
  %2335 = vmatprep.subr.mxu0 0.0
  %2336 = vmatpush1.msra.mxu0 0.0
  %2337 = vmatprep.subr.mxu0 0.0
  %2338 = vmatpush1.msra.mxu0 0.0
  %2339 = vmatprep.mubr.f32.mxu0 0.0
  %2340 = vmatmul.mubr.f32.gmra.mrb[0].mxu0 %v1808
  %v2341 = vpop.f32.mrb[0].mxu0
  %v2342 = vadd.f32 %v1778, %v2341
  %v2343 = vpop.f32.mrb[0].mxu0
  %v2344 = vadd.f32 %v1782, %v2343
  %2345 = vmatprep.mubr.f32.mxu0 0.0
  %2346 = vmatmul.mubr.f32.gmra.mrb[0].mxu0 %v1811
  %v2347 = vpop.f32.mrb[0].mxu0
  %v2348 = vadd.f32 %v1778, %v2347
  %v2349 = vpop.f32.mrb[0].mxu0
  %v2350 = vadd.f32 %v1782, %v2349
  %2351 = vdwg.mxu0
  %2352 = vmatprep.subr.mxu0 %v1674
  %2353 = vmatpush1.msra.mxu0 %v1673
  %2354 = vmatprep.subr.mxu0 %v1690
  %2355 = vmatpush1.msra.mxu0 %v1689
  %2356 = vmatprep.subr.mxu0 %v1706
  %2357 = vmatpush1.msra.mxu0 %v1705
  %2358 = vmatprep.subr.mxu0 %v1722
  %2359 = vmatpush1.msra.mxu0 %v1721
  %2360 = vmatprep.subr.mxu0 0.0
  %2361 = vmatpush1.msra.mxu0 0.0
  %2362 = vmatprep.subr.mxu0 0.0
  %2363 = vmatpush1.msra.mxu0 0.0
  %2364 = vmatprep.subr.mxu0 0.0
  %2365 = vmatpush1.msra.mxu0 0.0
  %2366 = vmatprep.subr.mxu0 0.0
  %2367 = vmatpush1.msra.mxu0 0.0
  %2368 = vmatprep.subr.mxu0 0.0
  %2369 = vmatpush1.msra.mxu0 0.0
  %2370 = vmatprep.subr.mxu0 0.0
  %2371 = vmatpush1.msra.mxu0 0.0
  %2372 = vmatprep.subr.mxu0 0.0
  %2373 = vmatpush1.msra.mxu0 0.0
  %2374 = vmatprep.subr.mxu0 0.0
  %2375 = vmatpush1.msra.mxu0 0.0
  %2376 = vmatprep.subr.mxu0 0.0
  %2377 = vmatpush1.msra.mxu0 0.0
  %2378 = vmatprep.subr.mxu0 0.0
  %2379 = vmatpush1.msra.mxu0 0.0
  %2380 = vmatprep.subr.mxu0 0.0
  %2381 = vmatpush1.msra.mxu0 0.0
  %2382 = vmatprep.subr.mxu0 0.0
  %2383 = vmatpush1.msra.mxu0 0.0
  %2384 = vmatprep.subr.mxu0 0.0
  %2385 = vmatpush1.msra.mxu0 0.0
  %2386 = vmatprep.subr.mxu0 0.0
  %2387 = vmatpush1.msra.mxu0 0.0
  %2388 = vmatprep.subr.mxu0 0.0
  %2389 = vmatpush1.msra.mxu0 0.0
  %2390 = vmatprep.subr.mxu0 0.0
  %2391 = vmatpush1.msra.mxu0 0.0
  %2392 = vmatprep.subr.mxu0 0.0
  %2393 = vmatpush1.msra.mxu0 0.0
  %2394 = vmatprep.subr.mxu0 0.0
  %2395 = vmatpush1.msra.mxu0 0.0
  %2396 = vmatprep.subr.mxu0 0.0
  %2397 = vmatpush1.msra.mxu0 0.0
  %2398 = vmatprep.subr.mxu0 0.0
  %2399 = vmatpush1.msra.mxu0 0.0
  %2400 = vmatprep.subr.mxu0 0.0
  %2401 = vmatpush1.msra.mxu0 0.0
  %2402 = vmatprep.subr.mxu0 0.0
  %2403 = vmatpush1.msra.mxu0 0.0
  %2404 = vmatprep.subr.mxu0 0.0
  %2405 = vmatpush1.msra.mxu0 0.0
  %2406 = vmatprep.subr.mxu0 0.0
  %2407 = vmatpush1.msra.mxu0 0.0
  %2408 = vmatprep.subr.mxu0 0.0
  %2409 = vmatpush1.msra.mxu0 0.0
  %2410 = vmatprep.subr.mxu0 0.0
  %2411 = vmatpush1.msra.mxu0 0.0
  %2412 = vmatprep.subr.mxu0 0.0
  %2413 = vmatpush1.msra.mxu0 0.0
  %2414 = vmatprep.subr.mxu0 0.0
  %2415 = vmatpush1.msra.mxu0 0.0
  %2416 = vmatprep.mubr.f32.mxu0 0.0
  %2417 = vmatmul.mubr.f32.gmra.mrb[0].mxu0 %v1808
  %v2418 = vpop.f32.mrb[0].mxu0
  %v2419 = vadd.f32 %v1786, %v2418
  %v2420 = vpop.f32.mrb[0].mxu0
  %v2421 = vadd.f32 %v1790, %v2420
  %2422 = vmatprep.mubr.f32.mxu0 0.0
  %2423 = vmatmul.mubr.f32.gmra.mrb[0].mxu0 %v1811
  %v2424 = vpop.f32.mrb[0].mxu0
  %v2425 = vadd.f32 %v1786, %v2424
  %v2426 = vpop.f32.mrb[0].mxu0
  %v2427 = vadd.f32 %v1790, %v2426
  %2428 = vdwg.mxu0
  %v2429 = vmax.f32 %v1880, 0.0
  %v2430 = vmax.f32 %v1882, 0.0
  %v2431 = vmax.f32 %v1957, 0.0
  %v2432 = vmax.f32 %v1959, 0.0
  %v2433 = vmax.f32 %v2034, 0.0
  %v2434 = vmax.f32 %v2036, 0.0
  %v2435 = vmax.f32 %v2111, 0.0
  %v2436 = vmax.f32 %v2113, 0.0
  %v2437 = vmax.f32 %v2188, 0.0
  %v2438 = vmax.f32 %v2190, 0.0
  %v2439 = vmax.f32 %v2265, 0.0
  %v2440 = vmax.f32 %v2267, 0.0
  %v2441 = vmax.f32 %v2342, 0.0
  %v2442 = vmax.f32 %v2344, 0.0
  %v2443 = vmax.f32 %v2419, 0.0
  %v2444 = vmax.f32 %v2421, 0.0
  %v2445 = vmax.f32 %v1886, 0.0
  %v2446 = vmax.f32 %v1888, 0.0
  %v2447 = vmax.f32 %v1963, 0.0
  %v2448 = vmax.f32 %v1965, 0.0
  %v2449 = vmax.f32 %v2040, 0.0
  %v2450 = vmax.f32 %v2042, 0.0
  %v2451 = vmax.f32 %v2117, 0.0
  %v2452 = vmax.f32 %v2119, 0.0
  %v2453 = vmax.f32 %v2194, 0.0
  %v2454 = vmax.f32 %v2196, 0.0
  %v2455 = vmax.f32 %v2271, 0.0
  %v2456 = vmax.f32 %v2273, 0.0
  %v2457 = vmax.f32 %v2348, 0.0
  %v2458 = vmax.f32 %v2350, 0.0
  %v2459 = vmax.f32 %v2425, 0.0
  %v2460 = vmax.f32 %v2427, 0.0
  %v2461 = vld [vmem:[%s17] sm:$0xff]
  %v2462 = vld [vmem:[%s17 + $0x8] sm:$0xff]
  %v2463 = vld [vmem:[%s17 + $0x10] sm:$0xff]
  %v2464 = vld [vmem:[%s17 + $0x18] sm:$0xff]
  %v2465 = vld [vmem:[%s17 + $0x20] sm:$0xff]
  %v2466 = vld [vmem:[%s17 + $0x28] sm:$0xff]
  %v2467 = vld [vmem:[%s17 + $0x30] sm:$0xff]
  %v2468 = vld [vmem:[%s17 + $0x38] sm:$0xff]
  %v2469 = vld [vmem:[%s17 + $0x40] sm:$0xff]
  %v2470 = vld [vmem:[%s17 + $0x48] sm:$0xff]
  %v2471 = vld [vmem:[%s17 + $0x50] sm:$0xff]
  %v2472 = vld [vmem:[%s17 + $0x58] sm:$0xff]
  %v2473 = vld [vmem:[%s17 + $0x60] sm:$0xff]
  %v2474 = vld [vmem:[%s17 + $0x68] sm:$0xff]
  %v2475 = vld [vmem:[%s17 + $0x70] sm:$0xff]
  %v2476 = vld [vmem:[%s17 + $0x78] sm:$0xff]
  %v2477 = vld [vmem:[%s17 + $0x80] sm:$0xff]
  %v2478 = vld [vmem:[%s17 + $0x88] sm:$0xff]
  %v2479 = vld [vmem:[%s17 + $0x90] sm:$0xff]
  %v2480 = vld [vmem:[%s17 + $0x98] sm:$0xff]
  %v2481 = vld [vmem:[%s17 + $0xa0] sm:$0xff]
  %v2482 = vld [vmem:[%s17 + $0xa8] sm:$0xff]
  %v2483 = vld [vmem:[%s17 + $0xb0] sm:$0xff]
  %v2484 = vld [vmem:[%s17 + $0xb8] sm:$0xff]
  %v2485 = vld [vmem:[%s17 + $0xc0] sm:$0xff]
  %v2486 = vld [vmem:[%s17 + $0xc8] sm:$0xff]
  %v2487 = vld [vmem:[%s17 + $0xd0] sm:$0xff]
  %v2488 = vld [vmem:[%s17 + $0xd8] sm:$0xff]
  %v2489 = vld [vmem:[%s17 + $0xe0] sm:$0xff]
  %v2490 = vld [vmem:[%s17 + $0xe8] sm:$0xff]
  %v2491 = vld [vmem:[%s17 + $0xf0] sm:$0xff]
  %v2492 = vld [vmem:[%s17 + $0xf8] sm:$0xff]
  %v2493 = vld [vmem:[%s17 + $0x100] sm:$0xff]
  %v2494 = vld [vmem:[%s17 + $0x108] sm:$0xff]
  %v2495 = vld [vmem:[%s17 + $0x110] sm:$0xff]
  %v2496 = vld [vmem:[%s17 + $0x118] sm:$0xff]
  %v2497 = vld [vmem:[%s17 + $0x120] sm:$0xff]
  %v2498 = vld [vmem:[%s17 + $0x128] sm:$0xff]
  %v2499 = vld [vmem:[%s17 + $0x130] sm:$0xff]
  %v2500 = vld [vmem:[%s17 + $0x138] sm:$0xff]
  %v2501 = vld [vmem:[%s17 + $0x140] sm:$0xff]
  %v2502 = vld [vmem:[%s17 + $0x148] sm:$0xff]
  %v2503 = vld [vmem:[%s17 + $0x150] sm:$0xff]
  %v2504 = vld [vmem:[%s17 + $0x158] sm:$0xff]
  %v2505 = vld [vmem:[%s17 + $0x160] sm:$0xff]
  %v2506 = vld [vmem:[%s17 + $0x168] sm:$0xff]
  %v2507 = vld [vmem:[%s17 + $0x170] sm:$0xff]
  %v2508 = vld [vmem:[%s17 + $0x178] sm:$0xff]
  %v2509 = vld [vmem:[%s17 + $0x180] sm:$0xff]
  %v2510 = vld [vmem:[%s17 + $0x188] sm:$0xff]
  %v2511 = vld [vmem:[%s17 + $0x190] sm:$0xff]
  %v2512 = vld [vmem:[%s17 + $0x198] sm:$0xff]
  %v2513 = vld [vmem:[%s17 + $0x1a0] sm:$0xff]
  %v2514 = vld [vmem:[%s17 + $0x1a8] sm:$0xff]
  %v2515 = vld [vmem:[%s17 + $0x1b0] sm:$0xff]
  %v2516 = vld [vmem:[%s17 + $0x1b8] sm:$0xff]
  %v2517 = vld [vmem:[%s17 + $0x1c0] sm:$0xff]
  %v2518 = vld [vmem:[%s17 + $0x1c8] sm:$0xff]
  %v2519 = vld [vmem:[%s17 + $0x1d0] sm:$0xff]
  %v2520 = vld [vmem:[%s17 + $0x1d8] sm:$0xff]
  %v2521 = vld [vmem:[%s17 + $0x1e0] sm:$0xff]
  %v2522 = vld [vmem:[%s17 + $0x1e8] sm:$0xff]
  %v2523 = vld [vmem:[%s17 + $0x1f0] sm:$0xff]
  %v2524 = vld [vmem:[%s17 + $0x1f8] sm:$0xff]
  %v2525 = vld [vmem:[%s17 + $0x200] sm:$0xff]
  %v2526 = vld [vmem:[%s17 + $0x208] sm:$0xff]
  %v2527 = vld [vmem:[%s17 + $0x210] sm:$0xff]
  %v2528 = vld [vmem:[%s17 + $0x218] sm:$0xff]
  %v2529 = vld [vmem:[%s17 + $0x220] sm:$0xff]
  %v2530 = vld [vmem:[%s17 + $0x228] sm:$0xff]
  %v2531 = vld [vmem:[%s17 + $0x230] sm:$0xff]
  %v2532 = vld [vmem:[%s17 + $0x238] sm:$0xff]
  %v2533 = vld [vmem:[%s17 + $0x240] sm:$0xff]
  %v2534 = vld [vmem:[%s17 + $0x248] sm:$0xff]
  %v2535 = vld [vmem:[%s17 + $0x250] sm:$0xff]
  %v2536 = vld [vmem:[%s17 + $0x258] sm:$0xff]
  %v2537 = vld [vmem:[%s17 + $0x260] sm:$0xff]
  %v2538 = vld [vmem:[%s17 + $0x268] sm:$0xff]
  %v2539 = vld [vmem:[%s17 + $0x270] sm:$0xff]
  %v2540 = vld [vmem:[%s17 + $0x278] sm:$0xff]
  %v2541 = vld [vmem:[%s17 + $0x280] sm:$0xff]
  %v2542 = vld [vmem:[%s17 + $0x288] sm:$0xff]
  %v2543 = vld [vmem:[%s17 + $0x290] sm:$0xff]
  %v2544 = vld [vmem:[%s17 + $0x298] sm:$0xff]
  %v2545 = vld [vmem:[%s17 + $0x2a0] sm:$0xff]
  %v2546 = vld [vmem:[%s17 + $0x2a8] sm:$0xff]
  %v2547 = vld [vmem:[%s17 + $0x2b0] sm:$0xff]
  %v2548 = vld [vmem:[%s17 + $0x2b8] sm:$0xff]
  %v2549 = vld [vmem:[%s17 + $0x2c0] sm:$0xff]
  %v2550 = vld [vmem:[%s17 + $0x2c8] sm:$0xff]
  %v2551 = vld [vmem:[%s17 + $0x2d0] sm:$0xff]
  %v2552 = vld [vmem:[%s17 + $0x2d8] sm:$0xff]
  %v2553 = vld [vmem:[%s17 + $0x2e0] sm:$0xff]
  %v2554 = vld [vmem:[%s17 + $0x2e8] sm:$0xff]
  %v2555 = vld [vmem:[%s17 + $0x2f0] sm:$0xff]
  %v2556 = vld [vmem:[%s17 + $0x2f8] sm:$0xff]
  %v2557 = vld [vmem:[%s17 + $0x300] sm:$0xff]
  %v2558 = vld [vmem:[%s17 + $0x308] sm:$0xff]
  %v2559 = vld [vmem:[%s17 + $0x310] sm:$0xff]
  %v2560 = vld [vmem:[%s17 + $0x318] sm:$0xff]
  %v2561 = vld [vmem:[%s17 + $0x320] sm:$0xff]
  %v2562 = vld [vmem:[%s17 + $0x328] sm:$0xff]
  %v2563 = vld [vmem:[%s17 + $0x330] sm:$0xff]
  %v2564 = vld [vmem:[%s17 + $0x338] sm:$0xff]
  %v2565 = vld [vmem:[%s17 + $0x340] sm:$0xff]
  %v2566 = vld [vmem:[%s17 + $0x348] sm:$0xff]
  %v2567 = vld [vmem:[%s17 + $0x350] sm:$0xff]
  %v2568 = vld [vmem:[%s17 + $0x358] sm:$0xff]
  %v2569 = vld [vmem:[%s17 + $0x360] sm:$0xff]
  %v2570 = vld [vmem:[%s17 + $0x368] sm:$0xff]
  %v2571 = vld [vmem:[%s17 + $0x370] sm:$0xff]
  %v2572 = vld [vmem:[%s17 + $0x378] sm:$0xff]
  %v2573 = vld [vmem:[%s17 + $0x380] sm:$0xff]
  %v2574 = vld [vmem:[%s17 + $0x388] sm:$0xff]
  %v2575 = vld [vmem:[%s17 + $0x390] sm:$0xff]
  %v2576 = vld [vmem:[%s17 + $0x398] sm:$0xff]
  %v2577 = vld [vmem:[%s17 + $0x3a0] sm:$0xff]
  %v2578 = vld [vmem:[%s17 + $0x3a8] sm:$0xff]
  %v2579 = vld [vmem:[%s17 + $0x3b0] sm:$0xff]
  %v2580 = vld [vmem:[%s17 + $0x3b8] sm:$0xff]
  %v2581 = vld [vmem:[%s17 + $0x3c0] sm:$0xff]
  %v2582 = vld [vmem:[%s17 + $0x3c8] sm:$0xff]
  %v2583 = vld [vmem:[%s17 + $0x3d0] sm:$0xff]
  %v2584 = vld [vmem:[%s17 + $0x3d8] sm:$0xff]
  %v2585 = vld [vmem:[%s17 + $0x3e0] sm:$0xff]
  %v2586 = vld [vmem:[%s17 + $0x3e8] sm:$0xff]
  %v2587 = vld [vmem:[%s17 + $0x3f0] sm:$0xff]
  %v2588 = vld [vmem:[%s17 + $0x3f8] sm:$0xff]
  %v2589 = vld [vmem:[%s17 + $0x400] sm:$0xff]
  %v2590 = vld [vmem:[%s17 + $0x408] sm:$0xff]
  %v2591 = vld [vmem:[%s17 + $0x410] sm:$0xff]
  %v2592 = vld [vmem:[%s17 + $0x418] sm:$0xff]
  %v2593 = vld [vmem:[%s17 + $0x420] sm:$0xff]
  %v2594 = vld [vmem:[%s17 + $0x428] sm:$0xff]
  %v2595 = vld [vmem:[%s17 + $0x430] sm:$0xff]
  %v2596 = vld [vmem:[%s17 + $0x438] sm:$0xff]
  %v2597 = vld [vmem:[%s17 + $0x440] sm:$0xff]
  %v2598 = vld [vmem:[%s17 + $0x448] sm:$0xff]
  %v2599 = vld [vmem:[%s17 + $0x450] sm:$0xff]
  %v2600 = vld [vmem:[%s17 + $0x458] sm:$0xff]
  %v2601 = vld [vmem:[%s17 + $0x460] sm:$0xff]
  %v2602 = vld [vmem:[%s17 + $0x468] sm:$0xff]
  %v2603 = vld [vmem:[%s17 + $0x470] sm:$0xff]
  %v2604 = vld [vmem:[%s17 + $0x478] sm:$0xff]
  %v2605 = vld [vmem:[%s17 + $0x480] sm:$0xff]
  %v2606 = vld [vmem:[%s17 + $0x488] sm:$0xff]
  %v2607 = vld [vmem:[%s17 + $0x490] sm:$0xff]
  %v2608 = vld [vmem:[%s17 + $0x498] sm:$0xff]
  %v2609 = vld [vmem:[%s17 + $0x4a0] sm:$0xff]
  %v2610 = vld [vmem:[%s17 + $0x4a8] sm:$0xff]
  %v2611 = vld [vmem:[%s17 + $0x4b0] sm:$0xff]
  %v2612 = vld [vmem:[%s17 + $0x4b8] sm:$0xff]
  %v2613 = vld [vmem:[%s17 + $0x4c0] sm:$0xff]
  %v2614 = vld [vmem:[%s17 + $0x4c8] sm:$0xff]
  %v2615 = vld [vmem:[%s17 + $0x4d0] sm:$0xff]
  %v2616 = vld [vmem:[%s17 + $0x4d8] sm:$0xff]
  %v2617 = vld [vmem:[%s17 + $0x4e0] sm:$0xff]
  %v2618 = vld [vmem:[%s17 + $0x4e8] sm:$0xff]
  %v2619 = vld [vmem:[%s17 + $0x4f0] sm:$0xff]
  %v2620 = vld [vmem:[%s17 + $0x4f8] sm:$0xff]
  %v2621 = vld [vmem:[%s17 + $0x500] sm:$0xff]
  %v2622 = vld [vmem:[%s17 + $0x508] sm:$0xff]
  %v2623 = vld [vmem:[%s17 + $0x510] sm:$0xff]
  %v2624 = vld [vmem:[%s17 + $0x518] sm:$0xff]
  %v2625 = vld [vmem:[%s17 + $0x520] sm:$0xff]
  %v2626 = vld [vmem:[%s17 + $0x528] sm:$0xff]
  %v2627 = vld [vmem:[%s17 + $0x530] sm:$0xff]
  %v2628 = vld [vmem:[%s17 + $0x538] sm:$0xff]
  %v2629 = vld [vmem:[%s17 + $0x540] sm:$0xff]
  %v2630 = vld [vmem:[%s17 + $0x548] sm:$0xff]
  %v2631 = vld [vmem:[%s17 + $0x550] sm:$0xff]
  %v2632 = vld [vmem:[%s17 + $0x558] sm:$0xff]
  %v2633 = vld [vmem:[%s17 + $0x560] sm:$0xff]
  %v2634 = vld [vmem:[%s17 + $0x568] sm:$0xff]
  %v2635 = vld [vmem:[%s17 + $0x570] sm:$0xff]
  %v2636 = vld [vmem:[%s17 + $0x578] sm:$0xff]
  %v2637 = vld [vmem:[%s17 + $0x580] sm:$0xff]
  %v2638 = vld [vmem:[%s17 + $0x588] sm:$0xff]
  %v2639 = vld [vmem:[%s17 + $0x590] sm:$0xff]
  %v2640 = vld [vmem:[%s17 + $0x598] sm:$0xff]
  %v2641 = vld [vmem:[%s17 + $0x5a0] sm:$0xff]
  %v2642 = vld [vmem:[%s17 + $0x5a8] sm:$0xff]
  %v2643 = vld [vmem:[%s17 + $0x5b0] sm:$0xff]
  %v2644 = vld [vmem:[%s17 + $0x5b8] sm:$0xff]
  %v2645 = vld [vmem:[%s17 + $0x5c0] sm:$0xff]
  %v2646 = vld [vmem:[%s17 + $0x5c8] sm:$0xff]
  %v2647 = vld [vmem:[%s17 + $0x5d0] sm:$0xff]
  %v2648 = vld [vmem:[%s17 + $0x5d8] sm:$0xff]
  %v2649 = vld [vmem:[%s17 + $0x5e0] sm:$0xff]
  %v2650 = vld [vmem:[%s17 + $0x5e8] sm:$0xff]
  %v2651 = vld [vmem:[%s17 + $0x5f0] sm:$0xff]
  %v2652 = vld [vmem:[%s17 + $0x5f8] sm:$0xff]
  %v2653 = vld [vmem:[%s17 + $0x600] sm:$0xff]
  %v2654 = vld [vmem:[%s17 + $0x608] sm:$0xff]
  %v2655 = vld [vmem:[%s17 + $0x610] sm:$0xff]
  %v2656 = vld [vmem:[%s17 + $0x618] sm:$0xff]
  %v2657 = vld [vmem:[%s17 + $0x620] sm:$0xff]
  %v2658 = vld [vmem:[%s17 + $0x628] sm:$0xff]
  %v2659 = vld [vmem:[%s17 + $0x630] sm:$0xff]
  %v2660 = vld [vmem:[%s17 + $0x638] sm:$0xff]
  %v2661 = vld [vmem:[%s17 + $0x640] sm:$0xff]
  %v2662 = vld [vmem:[%s17 + $0x648] sm:$0xff]
  %v2663 = vld [vmem:[%s17 + $0x650] sm:$0xff]
  %v2664 = vld [vmem:[%s17 + $0x658] sm:$0xff]
  %v2665 = vld [vmem:[%s17 + $0x660] sm:$0xff]
  %v2666 = vld [vmem:[%s17 + $0x668] sm:$0xff]
  %v2667 = vld [vmem:[%s17 + $0x670] sm:$0xff]
  %v2668 = vld [vmem:[%s17 + $0x678] sm:$0xff]
  %v2669 = vld [vmem:[%s17 + $0x680] sm:$0xff]
  %v2670 = vld [vmem:[%s17 + $0x688] sm:$0xff]
  %v2671 = vld [vmem:[%s17 + $0x690] sm:$0xff]
  %v2672 = vld [vmem:[%s17 + $0x698] sm:$0xff]
  %v2673 = vld [vmem:[%s17 + $0x6a0] sm:$0xff]
  %v2674 = vld [vmem:[%s17 + $0x6a8] sm:$0xff]
  %v2675 = vld [vmem:[%s17 + $0x6b0] sm:$0xff]
  %v2676 = vld [vmem:[%s17 + $0x6b8] sm:$0xff]
  %v2677 = vld [vmem:[%s17 + $0x6c0] sm:$0xff]
  %v2678 = vld [vmem:[%s17 + $0x6c8] sm:$0xff]
  %v2679 = vld [vmem:[%s17 + $0x6d0] sm:$0xff]
  %v2680 = vld [vmem:[%s17 + $0x6d8] sm:$0xff]
  %v2681 = vld [vmem:[%s17 + $0x6e0] sm:$0xff]
  %v2682 = vld [vmem:[%s17 + $0x6e8] sm:$0xff]
  %v2683 = vld [vmem:[%s17 + $0x6f0] sm:$0xff]
  %v2684 = vld [vmem:[%s17 + $0x6f8] sm:$0xff]
  %v2685 = vld [vmem:[%s17 + $0x700] sm:$0xff]
  %v2686 = vld [vmem:[%s17 + $0x708] sm:$0xff]
  %v2687 = vld [vmem:[%s17 + $0x710] sm:$0xff]
  %v2688 = vld [vmem:[%s17 + $0x718] sm:$0xff]
  %v2689 = vld [vmem:[%s17 + $0x720] sm:$0xff]
  %v2690 = vld [vmem:[%s17 + $0x728] sm:$0xff]
  %v2691 = vld [vmem:[%s17 + $0x730] sm:$0xff]
  %v2692 = vld [vmem:[%s17 + $0x738] sm:$0xff]
  %v2693 = vld [vmem:[%s17 + $0x740] sm:$0xff]
  %v2694 = vld [vmem:[%s17 + $0x748] sm:$0xff]
  %v2695 = vld [vmem:[%s17 + $0x750] sm:$0xff]
  %v2696 = vld [vmem:[%s17 + $0x758] sm:$0xff]
  %v2697 = vld [vmem:[%s17 + $0x760] sm:$0xff]
  %v2698 = vld [vmem:[%s17 + $0x768] sm:$0xff]
  %v2699 = vld [vmem:[%s17 + $0x770] sm:$0xff]
  %v2700 = vld [vmem:[%s17 + $0x778] sm:$0xff]
  %v2701 = vld [vmem:[%s17 + $0x780] sm:$0xff]
  %v2702 = vld [vmem:[%s17 + $0x788] sm:$0xff]
  %v2703 = vld [vmem:[%s17 + $0x790] sm:$0xff]
  %v2704 = vld [vmem:[%s17 + $0x798] sm:$0xff]
  %v2705 = vld [vmem:[%s17 + $0x7a0] sm:$0xff]
  %v2706 = vld [vmem:[%s17 + $0x7a8] sm:$0xff]
  %v2707 = vld [vmem:[%s17 + $0x7b0] sm:$0xff]
  %v2708 = vld [vmem:[%s17 + $0x7b8] sm:$0xff]
  %v2709 = vld [vmem:[%s17 + $0x7c0] sm:$0xff]
  %v2710 = vld [vmem:[%s17 + $0x7c8] sm:$0xff]
  %v2711 = vld [vmem:[%s17 + $0x7d0] sm:$0xff]
  %v2712 = vld [vmem:[%s17 + $0x7d8] sm:$0xff]
  %v2713 = vld [vmem:[%s17 + $0x7e0] sm:$0xff]
  %v2714 = vld [vmem:[%s17 + $0x7e8] sm:$0xff]
  %v2715 = vld [vmem:[%s17 + $0x7f0] sm:$0xff]
  %v2716 = vld [vmem:[%s17 + $0x7f8] sm:$0xff]
  %v2717 = vld [vmem:[%s18] sm:$0x1]
  %v2719 = vlaneseq
  %v2720 = vshrl.u32 %v2719, 7
  %v2721 = vsub.s32 0, %v2720
  %v2722 = vrot.slane %v2717, %v2721
  %2724 = vmatprep.subr.mxu0 0.0
  %2725 = vmatpush1.msra.mxu0 %v2461
  %2726 = vmatprep.subr.mxu0 0.0
  %2727 = vmatpush1.msra.mxu0 %v2462
  %2728 = vmatprep.subr.mxu0 0.0
  %2729 = vmatpush1.msra.mxu0 %v2463
  %2730 = vmatprep.subr.mxu0 0.0
  %2731 = vmatpush1.msra.mxu0 %v2464
  %2732 = vmatprep.subr.mxu0 0.0
  %2733 = vmatpush1.msra.mxu0 %v2465
  %2734 = vmatprep.subr.mxu0 0.0
  %2735 = vmatpush1.msra.mxu0 %v2466
  %2736 = vmatprep.subr.mxu0 0.0
  %2737 = vmatpush1.msra.mxu0 %v2467
  %2738 = vmatprep.subr.mxu0 0.0
  %2739 = vmatpush1.msra.mxu0 %v2468
  %2740 = vmatprep.subr.mxu0 0.0
  %2741 = vmatpush1.msra.mxu0 %v2469
  %2742 = vmatprep.subr.mxu0 0.0
  %2743 = vmatpush1.msra.mxu0 %v2470
  %2744 = vmatprep.subr.mxu0 0.0
  %2745 = vmatpush1.msra.mxu0 %v2471
  %2746 = vmatprep.subr.mxu0 0.0
  %2747 = vmatpush1.msra.mxu0 %v2472
  %2748 = vmatprep.subr.mxu0 0.0
  %2749 = vmatpush1.msra.mxu0 %v2473
  %2750 = vmatprep.subr.mxu0 0.0
  %2751 = vmatpush1.msra.mxu0 %v2474
  %2752 = vmatprep.subr.mxu0 0.0
  %2753 = vmatpush1.msra.mxu0 %v2475
  %2754 = vmatprep.subr.mxu0 0.0
  %2755 = vmatpush1.msra.mxu0 %v2476
  %2756 = vmatprep.subr.mxu0 0.0
  %2757 = vmatpush1.msra.mxu0 %v2477
  %2758 = vmatprep.subr.mxu0 0.0
  %2759 = vmatpush1.msra.mxu0 %v2478
  %2760 = vmatprep.subr.mxu0 0.0
  %2761 = vmatpush1.msra.mxu0 %v2479
  %2762 = vmatprep.subr.mxu0 0.0
  %2763 = vmatpush1.msra.mxu0 %v2480
  %2764 = vmatprep.subr.mxu0 0.0
  %2765 = vmatpush1.msra.mxu0 %v2481
  %2766 = vmatprep.subr.mxu0 0.0
  %2767 = vmatpush1.msra.mxu0 %v2482
  %2768 = vmatprep.subr.mxu0 0.0
  %2769 = vmatpush1.msra.mxu0 %v2483
  %2770 = vmatprep.subr.mxu0 0.0
  %2771 = vmatpush1.msra.mxu0 %v2484
  %2772 = vmatprep.subr.mxu0 0.0
  %2773 = vmatpush1.msra.mxu0 %v2485
  %2774 = vmatprep.subr.mxu0 0.0
  %2775 = vmatpush1.msra.mxu0 %v2486
  %2776 = vmatprep.subr.mxu0 0.0
  %2777 = vmatpush1.msra.mxu0 %v2487
  %2778 = vmatprep.subr.mxu0 0.0
  %2779 = vmatpush1.msra.mxu0 %v2488
  %2780 = vmatprep.subr.mxu0 0.0
  %2781 = vmatpush1.msra.mxu0 %v2489
  %2782 = vmatprep.subr.mxu0 0.0
  %2783 = vmatpush1.msra.mxu0 %v2490
  %2784 = vmatprep.subr.mxu0 0.0
  %2785 = vmatpush1.msra.mxu0 %v2491
  %2786 = vmatprep.subr.mxu0 0.0
  %2787 = vmatpush1.msra.mxu0 %v2492
  %2788 = vmatprep.mubr.f32.mxu0 %v2430
  %2789 = vmatmul.mubr.f32.gmra.mrb[0].mxu0 %v2429
  %v2790 = vpop.f32.mrb[0].mxu0
  %v2791 = vadd.f32 %v2722, %v2790
  %v2792 = vpop.f32.mrb[0].mxu0
  %2793 = vmatprep.mubr.f32.mxu0 %v2446
  %2794 = vmatmul.mubr.f32.gmra.mrb[0].mxu0 %v2445
  %v2795 = vpop.f32.mrb[0].mxu0
  %v2796 = vadd.f32 %v2722, %v2795
  %v2797 = vpop.f32.mrb[0].mxu0
  %2798 = vdwg.mxu0
  %2799 = vmatprep.subr.mxu0 0.0
  %2800 = vmatpush1.msra.mxu0 %v2493
  %2801 = vmatprep.subr.mxu0 0.0
  %2802 = vmatpush1.msra.mxu0 %v2494
  %2803 = vmatprep.subr.mxu0 0.0
  %2804 = vmatpush1.msra.mxu0 %v2495
  %2805 = vmatprep.subr.mxu0 0.0
  %2806 = vmatpush1.msra.mxu0 %v2496
  %2807 = vmatprep.subr.mxu0 0.0
  %2808 = vmatpush1.msra.mxu0 %v2497
  %2809 = vmatprep.subr.mxu0 0.0
  %2810 = vmatpush1.msra.mxu0 %v2498
  %2811 = vmatprep.subr.mxu0 0.0
  %2812 = vmatpush1.msra.mxu0 %v2499
  %2813 = vmatprep.subr.mxu0 0.0
  %2814 = vmatpush1.msra.mxu0 %v2500
  %2815 = vmatprep.subr.mxu0 0.0
  %2816 = vmatpush1.msra.mxu0 %v2501
  %2817 = vmatprep.subr.mxu0 0.0
  %2818 = vmatpush1.msra.mxu0 %v2502
  %2819 = vmatprep.subr.mxu0 0.0
  %2820 = vmatpush1.msra.mxu0 %v2503
  %2821 = vmatprep.subr.mxu0 0.0
  %2822 = vmatpush1.msra.mxu0 %v2504
  %2823 = vmatprep.subr.mxu0 0.0
  %2824 = vmatpush1.msra.mxu0 %v2505
  %2825 = vmatprep.subr.mxu0 0.0
  %2826 = vmatpush1.msra.mxu0 %v2506
  %2827 = vmatprep.subr.mxu0 0.0
  %2828 = vmatpush1.msra.mxu0 %v2507
  %2829 = vmatprep.subr.mxu0 0.0
  %2830 = vmatpush1.msra.mxu0 %v2508
  %2831 = vmatprep.subr.mxu0 0.0
  %2832 = vmatpush1.msra.mxu0 %v2509
  %2833 = vmatprep.subr.mxu0 0.0
  %2834 = vmatpush1.msra.mxu0 %v2510
  %2835 = vmatprep.subr.mxu0 0.0
  %2836 = vmatpush1.msra.mxu0 %v2511
  %2837 = vmatprep.subr.mxu0 0.0
  %2838 = vmatpush1.msra.mxu0 %v2512
  %2839 = vmatprep.subr.mxu0 0.0
  %2840 = vmatpush1.msra.mxu0 %v2513
  %2841 = vmatprep.subr.mxu0 0.0
  %2842 = vmatpush1.msra.mxu0 %v2514
  %2843 = vmatprep.subr.mxu0 0.0
  %2844 = vmatpush1.msra.mxu0 %v2515
  %2845 = vmatprep.subr.mxu0 0.0
  %2846 = vmatpush1.msra.mxu0 %v2516
  %2847 = vmatprep.subr.mxu0 0.0
  %2848 = vmatpush1.msra.mxu0 %v2517
  %2849 = vmatprep.subr.mxu0 0.0
  %2850 = vmatpush1.msra.mxu0 %v2518
  %2851 = vmatprep.subr.mxu0 0.0
  %2852 = vmatpush1.msra.mxu0 %v2519
  %2853 = vmatprep.subr.mxu0 0.0
  %2854 = vmatpush1.msra.mxu0 %v2520
  %2855 = vmatprep.subr.mxu0 0.0
  %2856 = vmatpush1.msra.mxu0 %v2521
  %2857 = vmatprep.subr.mxu0 0.0
  %2858 = vmatpush1.msra.mxu0 %v2522
  %2859 = vmatprep.subr.mxu0 0.0
  %2860 = vmatpush1.msra.mxu0 %v2523
  %2861 = vmatprep.subr.mxu0 0.0
  %2862 = vmatpush1.msra.mxu0 %v2524
  %2863 = vmatprep.mubr.f32.mxu0 %v2432
  %2864 = vmatmul.mubr.f32.gmra.mrb[0].mxu0 %v2431
  %v2865 = vpop.f32.mrb[0].mxu0
  %v2866 = vadd.f32 %v2791, %v2865
  %v2867 = vpop.f32.mrb[0].mxu0
  %2868 = vmatprep.mubr.f32.mxu0 %v2448
  %2869 = vmatmul.mubr.f32.gmra.mrb[0].mxu0 %v2447
  %v2870 = vpop.f32.mrb[0].mxu0
  %v2871 = vadd.f32 %v2796, %v2870
  %v2872 = vpop.f32.mrb[0].mxu0
  %2873 = vdwg.mxu0
  %2874 = vmatprep.subr.mxu0 0.0
  %2875 = vmatpush1.msra.mxu0 %v2525
  %2876 = vmatprep.subr.mxu0 0.0
  %2877 = vmatpush1.msra.mxu0 %v2526
  %2878 = vmatprep.subr.mxu0 0.0
  %2879 = vmatpush1.msra.mxu0 %v2527
  %2880 = vmatprep.subr.mxu0 0.0
  %2881 = vmatpush1.msra.mxu0 %v2528
  %2882 = vmatprep.subr.mxu0 0.0
  %2883 = vmatpush1.msra.mxu0 %v2529
  %2884 = vmatprep.subr.mxu0 0.0
  %2885 = vmatpush1.msra.mxu0 %v2530
  %2886 = vmatprep.subr.mxu0 0.0
  %2887 = vmatpush1.msra.mxu0 %v2531
  %2888 = vmatprep.subr.mxu0 0.0
  %2889 = vmatpush1.msra.mxu0 %v2532
  %2890 = vmatprep.subr.mxu0 0.0
  %2891 = vmatpush1.msra.mxu0 %v2533
  %2892 = vmatprep.subr.mxu0 0.0
  %2893 = vmatpush1.msra.mxu0 %v2534
  %2894 = vmatprep.subr.mxu0 0.0
  %2895 = vmatpush1.msra.mxu0 %v2535
  %2896 = vmatprep.subr.mxu0 0.0
  %2897 = vmatpush1.msra.mxu0 %v2536
  %2898 = vmatprep.subr.mxu0 0.0
  %2899 = vmatpush1.msra.mxu0 %v2537
  %2900 = vmatprep.subr.mxu0 0.0
  %2901 = vmatpush1.msra.mxu0 %v2538
  %2902 = vmatprep.subr.mxu0 0.0
  %2903 = vmatpush1.msra.mxu0 %v2539
  %2904 = vmatprep.subr.mxu0 0.0
  %2905 = vmatpush1.msra.mxu0 %v2540
  %2906 = vmatprep.subr.mxu0 0.0
  %2907 = vmatpush1.msra.mxu0 %v2541
  %2908 = vmatprep.subr.mxu0 0.0
  %2909 = vmatpush1.msra.mxu0 %v2542
  %2910 = vmatprep.subr.mxu0 0.0
  %2911 = vmatpush1.msra.mxu0 %v2543
  %2912 = vmatprep.subr.mxu0 0.0
  %2913 = vmatpush1.msra.mxu0 %v2544
  %2914 = vmatprep.subr.mxu0 0.0
  %2915 = vmatpush1.msra.mxu0 %v2545
  %2916 = vmatprep.subr.mxu0 0.0
  %2917 = vmatpush1.msra.mxu0 %v2546
  %2918 = vmatprep.subr.mxu0 0.0
  %2919 = vmatpush1.msra.mxu0 %v2547
  %2920 = vmatprep.subr.mxu0 0.0
  %2921 = vmatpush1.msra.mxu0 %v2548
  %2922 = vmatprep.subr.mxu0 0.0
  %2923 = vmatpush1.msra.mxu0 %v2549
  %2924 = vmatprep.subr.mxu0 0.0
  %2925 = vmatpush1.msra.mxu0 %v2550
  %2926 = vmatprep.subr.mxu0 0.0
  %2927 = vmatpush1.msra.mxu0 %v2551
  %2928 = vmatprep.subr.mxu0 0.0
  %2929 = vmatpush1.msra.mxu0 %v2552
  %2930 = vmatprep.subr.mxu0 0.0
  %2931 = vmatpush1.msra.mxu0 %v2553
  %2932 = vmatprep.subr.mxu0 0.0
  %2933 = vmatpush1.msra.mxu0 %v2554
  %2934 = vmatprep.subr.mxu0 0.0
  %2935 = vmatpush1.msra.mxu0 %v2555
  %2936 = vmatprep.subr.mxu0 0.0
  %2937 = vmatpush1.msra.mxu0 %v2556
  %2938 = vmatprep.mubr.f32.mxu0 %v2434
  %2939 = vmatmul.mubr.f32.gmra.mrb[0].mxu0 %v2433
  %v2940 = vpop.f32.mrb[0].mxu0
  %v2941 = vadd.f32 %v2866, %v2940
  %v2942 = vpop.f32.mrb[0].mxu0
  %2943 = vmatprep.mubr.f32.mxu0 %v2450
  %2944 = vmatmul.mubr.f32.gmra.mrb[0].mxu0 %v2449
  %v2945 = vpop.f32.mrb[0].mxu0
  %v2946 = vadd.f32 %v2871, %v2945
  %v2947 = vpop.f32.mrb[0].mxu0
  %2948 = vdwg.mxu0
  %2949 = vmatprep.subr.mxu0 0.0
  %2950 = vmatpush1.msra.mxu0 %v2557
  %2951 = vmatprep.subr.mxu0 0.0
  %2952 = vmatpush1.msra.mxu0 %v2558
  %2953 = vmatprep.subr.mxu0 0.0
  %2954 = vmatpush1.msra.mxu0 %v2559
  %2955 = vmatprep.subr.mxu0 0.0
  %2956 = vmatpush1.msra.mxu0 %v2560
  %2957 = vmatprep.subr.mxu0 0.0
  %2958 = vmatpush1.msra.mxu0 %v2561
  %2959 = vmatprep.subr.mxu0 0.0
  %2960 = vmatpush1.msra.mxu0 %v2562
  %2961 = vmatprep.subr.mxu0 0.0
  %2962 = vmatpush1.msra.mxu0 %v2563
  %2963 = vmatprep.subr.mxu0 0.0
  %2964 = vmatpush1.msra.mxu0 %v2564
  %2965 = vmatprep.subr.mxu0 0.0
  %2966 = vmatpush1.msra.mxu0 %v2565
  %2967 = vmatprep.subr.mxu0 0.0
  %2968 = vmatpush1.msra.mxu0 %v2566
  %2969 = vmatprep.subr.mxu0 0.0
  %2970 = vmatpush1.msra.mxu0 %v2567
  %2971 = vmatprep.subr.mxu0 0.0
  %2972 = vmatpush1.msra.mxu0 %v2568
  %2973 = vmatprep.subr.mxu0 0.0
  %2974 = vmatpush1.msra.mxu0 %v2569
  %2975 = vmatprep.subr.mxu0 0.0
  %2976 = vmatpush1.msra.mxu0 %v2570
  %2977 = vmatprep.subr.mxu0 0.0
  %2978 = vmatpush1.msra.mxu0 %v2571
  %2979 = vmatprep.subr.mxu0 0.0
  %2980 = vmatpush1.msra.mxu0 %v2572
  %2981 = vmatprep.subr.mxu0 0.0
  %2982 = vmatpush1.msra.mxu0 %v2573
  %2983 = vmatprep.subr.mxu0 0.0
  %2984 = vmatpush1.msra.mxu0 %v2574
  %2985 = vmatprep.subr.mxu0 0.0
  %2986 = vmatpush1.msra.mxu0 %v2575
  %2987 = vmatprep.subr.mxu0 0.0
  %2988 = vmatpush1.msra.mxu0 %v2576
  %2989 = vmatprep.subr.mxu0 0.0
  %2990 = vmatpush1.msra.mxu0 %v2577
  %2991 = vmatprep.subr.mxu0 0.0
  %2992 = vmatpush1.msra.mxu0 %v2578
  %2993 = vmatprep.subr.mxu0 0.0
  %2994 = vmatpush1.msra.mxu0 %v2579
  %2995 = vmatprep.subr.mxu0 0.0
  %2996 = vmatpush1.msra.mxu0 %v2580
  %2997 = vmatprep.subr.mxu0 0.0
  %2998 = vmatpush1.msra.mxu0 %v2581
  %2999 = vmatprep.subr.mxu0 0.0
  %3000 = vmatpush1.msra.mxu0 %v2582
  %3001 = vmatprep.subr.mxu0 0.0
  %3002 = vmatpush1.msra.mxu0 %v2583
  %3003 = vmatprep.subr.mxu0 0.0
  %3004 = vmatpush1.msra.mxu0 %v2584
  %3005 = vmatprep.subr.mxu0 0.0
  %3006 = vmatpush1.msra.mxu0 %v2585
  %3007 = vmatprep.subr.mxu0 0.0
  %3008 = vmatpush1.msra.mxu0 %v2586
  %3009 = vmatprep.subr.mxu0 0.0
  %3010 = vmatpush1.msra.mxu0 %v2587
  %3011 = vmatprep.subr.mxu0 0.0
  %3012 = vmatpush1.msra.mxu0 %v2588
  %3013 = vmatprep.mubr.f32.mxu0 %v2436
  %3014 = vmatmul.mubr.f32.gmra.mrb[0].mxu0 %v2435
  %v3015 = vpop.f32.mrb[0].mxu0
  %v3016 = vadd.f32 %v2941, %v3015
  %v3017 = vpop.f32.mrb[0].mxu0
  %3018 = vmatprep.mubr.f32.mxu0 %v2452
  %3019 = vmatmul.mubr.f32.gmra.mrb[0].mxu0 %v2451
  %v3020 = vpop.f32.mrb[0].mxu0
  %v3021 = vadd.f32 %v2946, %v3020
  %v3022 = vpop.f32.mrb[0].mxu0
  %3023 = vdwg.mxu0
  %3024 = vmatprep.subr.mxu0 0.0
  %3025 = vmatpush1.msra.mxu0 %v2589
  %3026 = vmatprep.subr.mxu0 0.0
  %3027 = vmatpush1.msra.mxu0 %v2590
  %3028 = vmatprep.subr.mxu0 0.0
  %3029 = vmatpush1.msra.mxu0 %v2591
  %3030 = vmatprep.subr.mxu0 0.0
  %3031 = vmatpush1.msra.mxu0 %v2592
  %3032 = vmatprep.subr.mxu0 0.0
  %3033 = vmatpush1.msra.mxu0 %v2593
  %3034 = vmatprep.subr.mxu0 0.0
  %3035 = vmatpush1.msra.mxu0 %v2594
  %3036 = vmatprep.subr.mxu0 0.0
  %3037 = vmatpush1.msra.mxu0 %v2595
  %3038 = vmatprep.subr.mxu0 0.0
  %3039 = vmatpush1.msra.mxu0 %v2596
  %3040 = vmatprep.subr.mxu0 0.0
  %3041 = vmatpush1.msra.mxu0 %v2597
  %3042 = vmatprep.subr.mxu0 0.0
  %3043 = vmatpush1.msra.mxu0 %v2598
  %3044 = vmatprep.subr.mxu0 0.0
  %3045 = vmatpush1.msra.mxu0 %v2599
  %3046 = vmatprep.subr.mxu0 0.0
  %3047 = vmatpush1.msra.mxu0 %v2600
  %3048 = vmatprep.subr.mxu0 0.0
  %3049 = vmatpush1.msra.mxu0 %v2601
  %3050 = vmatprep.subr.mxu0 0.0
  %3051 = vmatpush1.msra.mxu0 %v2602
  %3052 = vmatprep.subr.mxu0 0.0
  %3053 = vmatpush1.msra.mxu0 %v2603
  %3054 = vmatprep.subr.mxu0 0.0
  %3055 = vmatpush1.msra.mxu0 %v2604
  %3056 = vmatprep.subr.mxu0 0.0
  %3057 = vmatpush1.msra.mxu0 %v2605
  %3058 = vmatprep.subr.mxu0 0.0
  %3059 = vmatpush1.msra.mxu0 %v2606
  %3060 = vmatprep.subr.mxu0 0.0
  %3061 = vmatpush1.msra.mxu0 %v2607
  %3062 = vmatprep.subr.mxu0 0.0
  %3063 = vmatpush1.msra.mxu0 %v2608
  %3064 = vmatprep.subr.mxu0 0.0
  %3065 = vmatpush1.msra.mxu0 %v2609
  %3066 = vmatprep.subr.mxu0 0.0
  %3067 = vmatpush1.msra.mxu0 %v2610
  %3068 = vmatprep.subr.mxu0 0.0
  %3069 = vmatpush1.msra.mxu0 %v2611
  %3070 = vmatprep.subr.mxu0 0.0
  %3071 = vmatpush1.msra.mxu0 %v2612
  %3072 = vmatprep.subr.mxu0 0.0
  %3073 = vmatpush1.msra.mxu0 %v2613
  %3074 = vmatprep.subr.mxu0 0.0
  %3075 = vmatpush1.msra.mxu0 %v2614
  %3076 = vmatprep.subr.mxu0 0.0
  %3077 = vmatpush1.msra.mxu0 %v2615
  %3078 = vmatprep.subr.mxu0 0.0
  %3079 = vmatpush1.msra.mxu0 %v2616
  %3080 = vmatprep.subr.mxu0 0.0
  %3081 = vmatpush1.msra.mxu0 %v2617
  %3082 = vmatprep.subr.mxu0 0.0
  %3083 = vmatpush1.msra.mxu0 %v2618
  %3084 = vmatprep.subr.mxu0 0.0
  %3085 = vmatpush1.msra.mxu0 %v2619
  %3086 = vmatprep.subr.mxu0 0.0
  %3087 = vmatpush1.msra.mxu0 %v2620
  %3088 = vmatprep.mubr.f32.mxu0 %v2438
  %3089 = vmatmul.mubr.f32.gmra.mrb[0].mxu0 %v2437
  %v3090 = vpop.f32.mrb[0].mxu0
  %v3091 = vadd.f32 %v3016, %v3090
  %v3092 = vpop.f32.mrb[0].mxu0
  %3093 = vmatprep.mubr.f32.mxu0 %v2454
  %3094 = vmatmul.mubr.f32.gmra.mrb[0].mxu0 %v2453
  %v3095 = vpop.f32.mrb[0].mxu0
  %v3096 = vadd.f32 %v3021, %v3095
  %v3097 = vpop.f32.mrb[0].mxu0
  %3098 = vdwg.mxu0
  %3099 = vmatprep.subr.mxu0 0.0
  %3100 = vmatpush1.msra.mxu0 %v2621
  %3101 = vmatprep.subr.mxu0 0.0
  %3102 = vmatpush1.msra.mxu0 %v2622
  %3103 = vmatprep.subr.mxu0 0.0
  %3104 = vmatpush1.msra.mxu0 %v2623
  %3105 = vmatprep.subr.mxu0 0.0
  %3106 = vmatpush1.msra.mxu0 %v2624
  %3107 = vmatprep.subr.mxu0 0.0
  %3108 = vmatpush1.msra.mxu0 %v2625
  %3109 = vmatprep.subr.mxu0 0.0
  %3110 = vmatpush1.msra.mxu0 %v2626
  %3111 = vmatprep.subr.mxu0 0.0
  %3112 = vmatpush1.msra.mxu0 %v2627
  %3113 = vmatprep.subr.mxu0 0.0
  %3114 = vmatpush1.msra.mxu0 %v2628
  %3115 = vmatprep.subr.mxu0 0.0
  %3116 = vmatpush1.msra.mxu0 %v2629
  %3117 = vmatprep.subr.mxu0 0.0
  %3118 = vmatpush1.msra.mxu0 %v2630
  %3119 = vmatprep.subr.mxu0 0.0
  %3120 = vmatpush1.msra.mxu0 %v2631
  %3121 = vmatprep.subr.mxu0 0.0
  %3122 = vmatpush1.msra.mxu0 %v2632
  %3123 = vmatprep.subr.mxu0 0.0
  %3124 = vmatpush1.msra.mxu0 %v2633
  %3125 = vmatprep.subr.mxu0 0.0
  %3126 = vmatpush1.msra.mxu0 %v2634
  %3127 = vmatprep.subr.mxu0 0.0
  %3128 = vmatpush1.msra.mxu0 %v2635
  %3129 = vmatprep.subr.mxu0 0.0
  %3130 = vmatpush1.msra.mxu0 %v2636
  %3131 = vmatprep.subr.mxu0 0.0
  %3132 = vmatpush1.msra.mxu0 %v2637
  %3133 = vmatprep.subr.mxu0 0.0
  %3134 = vmatpush1.msra.mxu0 %v2638
  %3135 = vmatprep.subr.mxu0 0.0
  %3136 = vmatpush1.msra.mxu0 %v2639
  %3137 = vmatprep.subr.mxu0 0.0
  %3138 = vmatpush1.msra.mxu0 %v2640
  %3139 = vmatprep.subr.mxu0 0.0
  %3140 = vmatpush1.msra.mxu0 %v2641
  %3141 = vmatprep.subr.mxu0 0.0
  %3142 = vmatpush1.msra.mxu0 %v2642
  %3143 = vmatprep.subr.mxu0 0.0
  %3144 = vmatpush1.msra.mxu0 %v2643
  %3145 = vmatprep.subr.mxu0 0.0
  %3146 = vmatpush1.msra.mxu0 %v2644
  %3147 = vmatprep.subr.mxu0 0.0
  %3148 = vmatpush1.msra.mxu0 %v2645
  %3149 = vmatprep.subr.mxu0 0.0
  %3150 = vmatpush1.msra.mxu0 %v2646
  %3151 = vmatprep.subr.mxu0 0.0
  %3152 = vmatpush1.msra.mxu0 %v2647
  %3153 = vmatprep.subr.mxu0 0.0
  %3154 = vmatpush1.msra.mxu0 %v2648
  %3155 = vmatprep.subr.mxu0 0.0
  %3156 = vmatpush1.msra.mxu0 %v2649
  %3157 = vmatprep.subr.mxu0 0.0
  %3158 = vmatpush1.msra.mxu0 %v2650
  %3159 = vmatprep.subr.mxu0 0.0
  %3160 = vmatpush1.msra.mxu0 %v2651
  %3161 = vmatprep.subr.mxu0 0.0
  %3162 = vmatpush1.msra.mxu0 %v2652
  %3163 = vmatprep.mubr.f32.mxu0 %v2440
  %3164 = vmatmul.mubr.f32.gmra.mrb[0].mxu0 %v2439
  %v3165 = vpop.f32.mrb[0].mxu0
  %v3166 = vadd.f32 %v3091, %v3165
  %v3167 = vpop.f32.mrb[0].mxu0
  %3168 = vmatprep.mubr.f32.mxu0 %v2456
  %3169 = vmatmul.mubr.f32.gmra.mrb[0].mxu0 %v2455
  %v3170 = vpop.f32.mrb[0].mxu0
  %v3171 = vadd.f32 %v3096, %v3170
  %v3172 = vpop.f32.mrb[0].mxu0
  %3173 = vdwg.mxu0
  %3174 = vmatprep.subr.mxu0 0.0
  %3175 = vmatpush1.msra.mxu0 %v2653
  %3176 = vmatprep.subr.mxu0 0.0
  %3177 = vmatpush1.msra.mxu0 %v2654
  %3178 = vmatprep.subr.mxu0 0.0
  %3179 = vmatpush1.msra.mxu0 %v2655
  %3180 = vmatprep.subr.mxu0 0.0
  %3181 = vmatpush1.msra.mxu0 %v2656
  %3182 = vmatprep.subr.mxu0 0.0
  %3183 = vmatpush1.msra.mxu0 %v2657
  %3184 = vmatprep.subr.mxu0 0.0
  %3185 = vmatpush1.msra.mxu0 %v2658
  %3186 = vmatprep.subr.mxu0 0.0
  %3187 = vmatpush1.msra.mxu0 %v2659
  %3188 = vmatprep.subr.mxu0 0.0
  %3189 = vmatpush1.msra.mxu0 %v2660
  %3190 = vmatprep.subr.mxu0 0.0
  %3191 = vmatpush1.msra.mxu0 %v2661
  %3192 = vmatprep.subr.mxu0 0.0
  %3193 = vmatpush1.msra.mxu0 %v2662
  %3194 = vmatprep.subr.mxu0 0.0
  %3195 = vmatpush1.msra.mxu0 %v2663
  %3196 = vmatprep.subr.mxu0 0.0
  %3197 = vmatpush1.msra.mxu0 %v2664
  %3198 = vmatprep.subr.mxu0 0.0
  %3199 = vmatpush1.msra.mxu0 %v2665
  %3200 = vmatprep.subr.mxu0 0.0
  %3201 = vmatpush1.msra.mxu0 %v2666
  %3202 = vmatprep.subr.mxu0 0.0
  %3203 = vmatpush1.msra.mxu0 %v2667
  %3204 = vmatprep.subr.mxu0 0.0
  %3205 = vmatpush1.msra.mxu0 %v2668
  %3206 = vmatprep.subr.mxu0 0.0
  %3207 = vmatpush1.msra.mxu0 %v2669
  %3208 = vmatprep.subr.mxu0 0.0
  %3209 = vmatpush1.msra.mxu0 %v2670
  %3210 = vmatprep.subr.mxu0 0.0
  %3211 = vmatpush1.msra.mxu0 %v2671
  %3212 = vmatprep.subr.mxu0 0.0
  %3213 = vmatpush1.msra.mxu0 %v2672
  %3214 = vmatprep.subr.mxu0 0.0
  %3215 = vmatpush1.msra.mxu0 %v2673
  %3216 = vmatprep.subr.mxu0 0.0
  %3217 = vmatpush1.msra.mxu0 %v2674
  %3218 = vmatprep.subr.mxu0 0.0
  %3219 = vmatpush1.msra.mxu0 %v2675
  %3220 = vmatprep.subr.mxu0 0.0
  %3221 = vmatpush1.msra.mxu0 %v2676
  %3222 = vmatprep.subr.mxu0 0.0
  %3223 = vmatpush1.msra.mxu0 %v2677
  %3224 = vmatprep.subr.mxu0 0.0
  %3225 = vmatpush1.msra.mxu0 %v2678
  %3226 = vmatprep.subr.mxu0 0.0
  %3227 = vmatpush1.msra.mxu0 %v2679
  %3228 = vmatprep.subr.mxu0 0.0
  %3229 = vmatpush1.msra.mxu0 %v2680
  %3230 = vmatprep.subr.mxu0 0.0
  %3231 = vmatpush1.msra.mxu0 %v2681
  %3232 = vmatprep.subr.mxu0 0.0
  %3233 = vmatpush1.msra.mxu0 %v2682
  %3234 = vmatprep.subr.mxu0 0.0
  %3235 = vmatpush1.msra.mxu0 %v2683
  %3236 = vmatprep.subr.mxu0 0.0
  %3237 = vmatpush1.msra.mxu0 %v2684
  %3238 = vmatprep.mubr.f32.mxu0 %v2442
  %3239 = vmatmul.mubr.f32.gmra.mrb[0].mxu0 %v2441
  %v3240 = vpop.f32.mrb[0].mxu0
  %v3241 = vadd.f32 %v3166, %v3240
  %v3242 = vpop.f32.mrb[0].mxu0
  %3243 = vmatprep.mubr.f32.mxu0 %v2458
  %3244 = vmatmul.mubr.f32.gmra.mrb[0].mxu0 %v2457
  %v3245 = vpop.f32.mrb[0].mxu0
  %v3246 = vadd.f32 %v3171, %v3245
  %v3247 = vpop.f32.mrb[0].mxu0
  %3248 = vdwg.mxu0
  %3249 = vmatprep.subr.mxu0 0.0
  %3250 = vmatpush1.msra.mxu0 %v2685
  %3251 = vmatprep.subr.mxu0 0.0
  %3252 = vmatpush1.msra.mxu0 %v2686
  %3253 = vmatprep.subr.mxu0 0.0
  %3254 = vmatpush1.msra.mxu0 %v2687
  %3255 = vmatprep.subr.mxu0 0.0
  %3256 = vmatpush1.msra.mxu0 %v2688
  %3257 = vmatprep.subr.mxu0 0.0
  %3258 = vmatpush1.msra.mxu0 %v2689
  %3259 = vmatprep.subr.mxu0 0.0
  %3260 = vmatpush1.msra.mxu0 %v2690
  %3261 = vmatprep.subr.mxu0 0.0
  %3262 = vmatpush1.msra.mxu0 %v2691
  %3263 = vmatprep.subr.mxu0 0.0
  %3264 = vmatpush1.msra.mxu0 %v2692
  %3265 = vmatprep.subr.mxu0 0.0
  %3266 = vmatpush1.msra.mxu0 %v2693
  %3267 = vmatprep.subr.mxu0 0.0
  %3268 = vmatpush1.msra.mxu0 %v2694
  %3269 = vmatprep.subr.mxu0 0.0
  %3270 = vmatpush1.msra.mxu0 %v2695
  %3271 = vmatprep.subr.mxu0 0.0
  %3272 = vmatpush1.msra.mxu0 %v2696
  %3273 = vmatprep.subr.mxu0 0.0
  %3274 = vmatpush1.msra.mxu0 %v2697
  %3275 = vmatprep.subr.mxu0 0.0
  %3276 = vmatpush1.msra.mxu0 %v2698
  %3277 = vmatprep.subr.mxu0 0.0
  %3278 = vmatpush1.msra.mxu0 %v2699
  %3279 = vmatprep.subr.mxu0 0.0
  %3280 = vmatpush1.msra.mxu0 %v2700
  %3281 = vmatprep.subr.mxu0 0.0
  %3282 = vmatpush1.msra.mxu0 %v2701
  %3283 = vmatprep.subr.mxu0 0.0
  %3284 = vmatpush1.msra.mxu0 %v2702
  %3285 = vmatprep.subr.mxu0 0.0
  %3286 = vmatpush1.msra.mxu0 %v2703
  %3287 = vmatprep.subr.mxu0 0.0
  %3288 = vmatpush1.msra.mxu0 %v2704
  %3289 = vmatprep.subr.mxu0 0.0
  %3290 = vmatpush1.msra.mxu0 %v2705
  %3291 = vmatprep.subr.mxu0 0.0
  %3292 = vmatpush1.msra.mxu0 %v2706
  %3293 = vmatprep.subr.mxu0 0.0
  %3294 = vmatpush1.msra.mxu0 %v2707
  %3295 = vmatprep.subr.mxu0 0.0
  %3296 = vmatpush1.msra.mxu0 %v2708
  %3297 = vmatprep.subr.mxu0 0.0
  %3298 = vmatpush1.msra.mxu0 %v2709
  %3299 = vmatprep.subr.mxu0 0.0
  %3300 = vmatpush1.msra.mxu0 %v2710
  %3301 = vmatprep.subr.mxu0 0.0
  %3302 = vmatpush1.msra.mxu0 %v2711
  %3303 = vmatprep.subr.mxu0 0.0
  %3304 = vmatpush1.msra.mxu0 %v2712
  %3305 = vmatprep.subr.mxu0 0.0
  %3306 = vmatpush1.msra.mxu0 %v2713
  %3307 = vmatprep.subr.mxu0 0.0
  %3308 = vmatpush1.msra.mxu0 %v2714
  %3309 = vmatprep.subr.mxu0 0.0
  %3310 = vmatpush1.msra.mxu0 %v2715
  %3311 = vmatprep.subr.mxu0 0.0
  %3312 = vmatpush1.msra.mxu0 %v2716
  %3313 = vmatprep.mubr.f32.mxu0 %v2444
  %3314 = vmatmul.mubr.f32.gmra.mrb[0].mxu0 %v2443
  %v3315 = vpop.f32.mrb[0].mxu0
  %v3316 = vadd.f32 %v3241, %v3315
  %v3317 = vpop.f32.mrb[0].mxu0
  %3318 = vmatprep.mubr.f32.mxu0 %v2460
  %3319 = vmatmul.mubr.f32.gmra.mrb[0].mxu0 %v2459
  %v3320 = vpop.f32.mrb[0].mxu0
  %v3321 = vadd.f32 %v3246, %v3320
  %v3322 = vpop.f32.mrb[0].mxu0
  %3323 = vdwg.mxu0
  %v3324 = vadd.f32 %v1613, %v3316
  %v3325 = vadd.f32 %v1614, %v3321
  %3326 = vst.msk [vmem:[%s19] sm:$0xff] %vm72, %v3324
  %3327 = vst.msk [vmem:[%s19 + $0x8] sm:$0xf] %vm76, %v3325
  // Predicated region
  $region78: #{encoder_layer_forward.1} parent=0 // pred_check
    _
  $region79: #{encoder_layer_forward.1} parent=0 // pred_check_branch
    %3329 = sbr.rel (0) target = $region81
  $region80: #{encoder_layer_forward.1} parent=0 // pred_region
    _
  $region81: #{encoder_layer_forward.1} parent=0 // pred_fallthru
    _
  // Predicated region
  $region82: #{encoder_layer_forward.1} parent=0 // pred_check
    _
  $region83: #{encoder_layer_forward.1} parent=0 // pred_check_branch
    %3331 = sbr.rel (0) target = $region85
  $region84: #{encoder_layer_forward.1} parent=0 // pred_region
    _
  $region85: #{encoder_layer_forward.1} parent=0 // pred_fallthru
    _

</llo_original>
